<compile_context>
chip_gen: v5e
topology: v5e:2x2
jax: 0.10.0
libtpu: 0.0.40
codegen_flags: <defaults>
</compile_context>

<pallas_src>
import functools

import jax
import jax.numpy as jnp
from jax.experimental import pallas as pl
from jax.experimental.pallas import tpu as pltpu

LANE = 128
SUBLANE = 8

IN_FEATURES = 28 * 28      # 784
IN_PAD = 7 * LANE          # 896: lane-dense x-tile loads
OUT_FEATURES = 10
OUT_PAD = LANE             # 128: lane-dense output stores


def _round_up(n, m):
    return ((n + m - 1) // m) * m


def _dnn_fused_kernel(*refs, relu_flags):
    """refs = (x_ref, [w, shift] * n_layers, o_ref).

    Per layer: y = x @ W' + t'  where W' = W * bn_scale and t' = b*bn_scale +
    bn_shift were folded in the wrapper.  Matmuls are bf16 x bf16 on the MXU
    with f32 accumulation; inter-layer activations are carried in bf16.
    """
    x_ref = refs[0]
    o_ref = refs[-1]
    param_refs = refs[1:-1]
    n_layers = len(relu_flags)

    x = x_ref[...]                                            # bf16 (TB, IN_PAD)
    for li, relu in enumerate(relu_flags):
        w_ref, t_ref = param_refs[2 * li:2 * li + 2]
        y = jnp.dot(x, w_ref[...],
                    preferred_element_type=jnp.float32)       # MXU, f32 acc
        y = y + t_ref[...]                                    # folded bias+BN shift
        if relu:
            y = jnp.maximum(y, 0.0)
        if li < n_layers - 1:
            x = y.astype(jnp.bfloat16)                        # keep activations bf16
        else:
            x = y
    o_ref[...] = x.astype(o_ref.dtype)


def fold_params(params):
    """Fold eval-mode BN into each Linear: W' = W*scale, t' = bias*scale + shift.

    Folding happens in f32 BEFORE the bf16 cast (reference uses the same folded
    bf16 weights, so the rounding point is identical).  First layer's weight
    rows are zero-padded 784 -> 896, last layer's columns 10 -> 128.
    Returns [(w_bf16, shift_f32, relu), ...].
    """
    folded = []
    n_layers = len(params)
    for li, (w, bias, scale, shift, relu) in enumerate(params):
        wf = (w * scale).astype(jnp.float32)                  # per-output-column
        tf = (bias * scale + shift).astype(jnp.float32)
        if li == 0 and wf.shape[0] != IN_PAD:
            wf = jnp.pad(wf, ((0, IN_PAD - wf.shape[0]), (0, 0)))
        if li == n_layers - 1 and wf.shape[1] != OUT_PAD:
            pad = OUT_PAD - wf.shape[1]
            wf = jnp.pad(wf, ((0, 0), (0, pad)))              # padded lanes -> 0
            tf = jnp.pad(tf, ((0, 0), (0, pad)))
        folded.append((wf.astype(jnp.bfloat16), tf, bool(relu)))
    return folded


def dnn_forward(x_nchw, folded_params, *, max_batch_tile=512):
    """Full DNN forward: flatten + fused 4-layer MLP, batch-gridded Pallas call."""
    b = x_nchw.shape[0]
    x = x_nchw.reshape(b, -1).astype(jnp.float32)             # nn.Flatten (row-major)
    # Pad features 784 -> 896 (lane-dense loads) and cast to bf16 (halves x DMA).
    x = jnp.pad(x, ((0, 0), (0, IN_PAD - x.shape[1]))).astype(jnp.bfloat16)

    # Batch tile: sublane-aligned, capped so VMEM stays comfortable on v7x
    # (3 MiB weights + bf16 x tiles + widest f32 intermediate << 32 MiB).
    tb = min(max_batch_tile, _round_up(b, SUBLANE))
    bp = _round_up(b, tb)
    if bp != b:
        x = jnp.pad(x, ((0, bp - b), (0, 0)))                 # garbage rows sliced off

    relu_flags = tuple(r for (_, _, r) in folded_params)
    kernel = functools.partial(_dnn_fused_kernel, relu_flags=relu_flags)

    flat_args = [x]
    in_specs = [pl.BlockSpec((tb, IN_PAD), lambda i: (i, 0))]
    for (w, t, _) in folded_params:
        flat_args.extend([w, t])
        # Constant block index -> weights DMA'd into VMEM once, resident across
        # all batch-grid steps (no per-step weight re-fetch).
        in_specs.append(pl.BlockSpec(w.shape, lambda i: (0, 0)))
        in_specs.append(pl.BlockSpec(t.shape, lambda i: (0, 0)))

    # TODO(synk): for repeated tiny-batch serving, prefetch weights across calls
    # (cross-call semaphore + VMEM-ref outputs) instead of re-fetching per call.
    out = pl.pallas_call(
        kernel,
        out_shape=jax.ShapeDtypeStruct((bp, OUT_PAD), jnp.float32),
        grid=(bp // tb,),
        in_specs=in_specs,
        out_specs=pl.BlockSpec((tb, OUT_PAD), lambda i: (i, 0)),
        compiler_params=pltpu.CompilerParams(
            dimension_semantics=("parallel",)),               # v7x: split batch over TCs
    )(*flat_args)

    return out[:b, :OUT_FEATURES]


def init_params(key):
    """Deterministic parameter init matching DNN's layer shapes (f32 master copy)."""
    dims = [28 * 28, 1024, 512, 256, 10]
    params = []
    for li in range(4):
        fan_in, fan_out = dims[li], dims[li + 1]
        key, kw, kb, kg, kbeta, km, kv = jax.random.split(key, 7)
        limit = 1.0 / jnp.sqrt(jnp.float32(fan_in))
        w = jax.random.uniform(kw, (fan_in, fan_out), jnp.float32, -limit, limit)
        b = jax.random.uniform(kb, (1, fan_out), jnp.float32, -limit, limit)
        if li < 3:  # Linear -> BatchNorm1d (eval) -> ReLU (-> Dropout, identity)
            gamma = 1.0 + 0.1 * jax.random.normal(kg, (1, fan_out), jnp.float32)
            beta = 0.1 * jax.random.normal(kbeta, (1, fan_out), jnp.float32)
            run_mean = 0.1 * jax.random.normal(km, (1, fan_out), jnp.float32)
            run_var = jnp.abs(jax.random.normal(kv, (1, fan_out), jnp.float32)) + 0.5
            eps = 1e-5
            scale = gamma / jnp.sqrt(run_var + eps)
            shift = beta - run_mean * scale
            relu = True
        else:       # final Linear(256, 10): no BN, no ReLU
            scale = jnp.ones((1, fan_out), jnp.float32)
            shift = jnp.zeros((1, fan_out), jnp.float32)
            relu = False
        params.append((w, b, scale, shift, relu))
    return params


def dnn_forward_ref(x_nchw, folded_params):
    """Pure-JAX reference using the SAME folded bf16 weights as the kernel."""
    b = x_nchw.shape[0]
    x = x_nchw.reshape(b, -1).astype(jnp.float32)
    x = jnp.pad(x, ((0, 0), (0, IN_PAD - x.shape[1])))
    for (w, t, relu) in folded_params:
        xq = x.astype(jnp.bfloat16).astype(jnp.float32)
        wq = w.astype(jnp.float32)                            # w already bf16
        y = xq @ wq + t
        x = jnp.maximum(y, 0.0) if relu else y
    return x[:, :OUT_FEATURES]


if __name__ == "__main__":
    key = jax.random.PRNGKey(0)
    key, kx = jax.random.split(key)
    x = jax.random.normal(kx, (8, 1, 28, 28), jnp.float32)    # small MNIST-like batch

    params = init_params(key)
    folded = fold_params(params)

    out = dnn_forward(x, folded)
    out = jax.block_until_ready(out)

    ref = dnn_forward_ref(x, folded)
    assert out.shape == (8, 10)
    assert jnp.allclose(out, ref, atol=1e-2, rtol=1e-2), "mismatch vs reference"
    print("KERNEL_OK")
</pallas_src>

<mosaic_0001>
module attributes {stable_mosaic.version = 11 : i64} {
  func.func @_dnn_fused_kernel(%arg0: i32, %arg1: memref<8x896xbf16, #tpu.memory_space<vmem>>, %arg2: memref<896x1024xbf16, #tpu.memory_space<vmem>>, %arg3: memref<1x1024xf32, #tpu.memory_space<vmem>>, %arg4: memref<1024x512xbf16, #tpu.memory_space<vmem>>, %arg5: memref<1x512xf32, #tpu.memory_space<vmem>>, %arg6: memref<512x256xbf16, #tpu.memory_space<vmem>>, %arg7: memref<1x256xf32, #tpu.memory_space<vmem>>, %arg8: memref<256x128xbf16, #tpu.memory_space<vmem>>, %arg9: memref<1x128xf32, #tpu.memory_space<vmem>>, %arg10: memref<8x128xf32, #tpu.memory_space<vmem>>) attributes {dimension_semantics = [#tpu.dimension_semantics<parallel>], iteration_bounds = array<i64: 1>, scalar_prefetch = 0 : i64, scratch_operands = 0 : i64, tpu.core_type = #tpu.core_type<tc>, window_params = [{transform_indices = @transform_0, window_bounds = array<i64: 8, 896>}, {pipeline_mode = #tpu.pipeline_mode<synchronous>, transform_indices = @transform_1, window_bounds = array<i64: 896, 1024>}, {pipeline_mode = #tpu.pipeline_mode<synchronous>, transform_indices = @transform_2, window_bounds = array<i64: 1, 1024>}, {pipeline_mode = #tpu.pipeline_mode<synchronous>, transform_indices = @transform_3, window_bounds = array<i64: 1024, 512>}, {pipeline_mode = #tpu.pipeline_mode<synchronous>, transform_indices = @transform_4, window_bounds = array<i64: 1, 512>}, {pipeline_mode = #tpu.pipeline_mode<synchronous>, transform_indices = @transform_5, window_bounds = array<i64: 512, 256>}, {pipeline_mode = #tpu.pipeline_mode<synchronous>, transform_indices = @transform_6, window_bounds = array<i64: 1, 256>}, {pipeline_mode = #tpu.pipeline_mode<synchronous>, transform_indices = @transform_7, window_bounds = array<i64: 256, 128>}, {pipeline_mode = #tpu.pipeline_mode<synchronous>, transform_indices = @transform_8, window_bounds = array<i64: 1, 128>}, {transform_indices = @transform_9, window_bounds = array<i64: 8, 128>}]} {
    %c0 = arith.constant 0 : index
    %c0_0 = arith.constant 0 : index
    %0 = vector.load %arg1[%c0, %c0_0] : memref<8x896xbf16, #tpu.memory_space<vmem>>, vector<8x896xbf16>
    %c0_1 = arith.constant 0 : index
    %c0_2 = arith.constant 0 : index
    %1 = vector.load %arg2[%c0_1, %c0_2] : memref<896x1024xbf16, #tpu.memory_space<vmem>>, vector<896x1024xbf16>
    %cst = arith.constant dense<0.000000e+00> : vector<8x1024xf32>
    %2 = tpu.matmul %0, %1, %cst {dimension_numbers = #tpu.dot_dimension_numbers<[1], [0], [0], [1], [0, 0, 1, 1], [], []>} : vector<8x896xbf16>, vector<896x1024xbf16>, vector<8x1024xf32> -> vector<8x1024xf32>
    %c0_3 = arith.constant 0 : index
    %c0_4 = arith.constant 0 : index
    %3 = vector.load %arg3[%c0_3, %c0_4] : memref<1x1024xf32, #tpu.memory_space<vmem>>, vector<1x1024xf32>
    %4 = vector.broadcast %3 : vector<1x1024xf32> to vector<8x1024xf32>
    %5 = arith.addf %2, %4 : vector<8x1024xf32>
    %cst_5 = arith.constant 0.000000e+00 : f32
    %6 = vector.broadcast %cst_5 : f32 to vector<8x1024xf32>
    %7 = arith.maximumf %5, %6 : vector<8x1024xf32>
    %8 = arith.truncf %7 : vector<8x1024xf32> to vector<8x1024xbf16>
    %c0_6 = arith.constant 0 : index
    %c0_7 = arith.constant 0 : index
    %9 = vector.load %arg4[%c0_6, %c0_7] : memref<1024x512xbf16, #tpu.memory_space<vmem>>, vector<1024x512xbf16>
    %cst_8 = arith.constant dense<0.000000e+00> : vector<8x512xf32>
    %10 = tpu.matmul %8, %9, %cst_8 {dimension_numbers = #tpu.dot_dimension_numbers<[1], [0], [0], [1], [0, 0, 1, 1], [], []>} : vector<8x1024xbf16>, vector<1024x512xbf16>, vector<8x512xf32> -> vector<8x512xf32>
    %c0_9 = arith.constant 0 : index
    %c0_10 = arith.constant 0 : index
    %11 = vector.load %arg5[%c0_9, %c0_10] : memref<1x512xf32, #tpu.memory_space<vmem>>, vector<1x512xf32>
    %12 = vector.broadcast %11 : vector<1x512xf32> to vector<8x512xf32>
    %13 = arith.addf %10, %12 : vector<8x512xf32>
    %cst_11 = arith.constant 0.000000e+00 : f32
    %14 = vector.broadcast %cst_11 : f32 to vector<8x512xf32>
    %15 = arith.maximumf %13, %14 : vector<8x512xf32>
    %16 = arith.truncf %15 : vector<8x512xf32> to vector<8x512xbf16>
    %c0_12 = arith.constant 0 : index
    %c0_13 = arith.constant 0 : index
    %17 = vector.load %arg6[%c0_12, %c0_13] : memref<512x256xbf16, #tpu.memory_space<vmem>>, vector<512x256xbf16>
    %cst_14 = arith.constant dense<0.000000e+00> : vector<8x256xf32>
    %18 = tpu.matmul %16, %17, %cst_14 {dimension_numbers = #tpu.dot_dimension_numbers<[1], [0], [0], [1], [0, 0, 1, 1], [], []>} : vector<8x512xbf16>, vector<512x256xbf16>, vector<8x256xf32> -> vector<8x256xf32>
    %c0_15 = arith.constant 0 : index
    %c0_16 = arith.constant 0 : index
    %19 = vector.load %arg7[%c0_15, %c0_16] : memref<1x256xf32, #tpu.memory_space<vmem>>, vector<1x256xf32>
    %20 = vector.broadcast %19 : vector<1x256xf32> to vector<8x256xf32>
    %21 = arith.addf %18, %20 : vector<8x256xf32>
    %cst_17 = arith.constant 0.000000e+00 : f32
    %22 = vector.broadcast %cst_17 : f32 to vector<8x256xf32>
    %23 = arith.maximumf %21, %22 : vector<8x256xf32>
    %24 = arith.truncf %23 : vector<8x256xf32> to vector<8x256xbf16>
    %c0_18 = arith.constant 0 : index
    %c0_19 = arith.constant 0 : index
    %25 = vector.load %arg8[%c0_18, %c0_19] : memref<256x128xbf16, #tpu.memory_space<vmem>>, vector<256x128xbf16>
    %cst_20 = arith.constant dense<0.000000e+00> : vector<8x128xf32>
    %26 = tpu.matmul %24, %25, %cst_20 {dimension_numbers = #tpu.dot_dimension_numbers<[1], [0], [0], [1], [0, 0, 1, 1], [], []>} : vector<8x256xbf16>, vector<256x128xbf16>, vector<8x128xf32> -> vector<8x128xf32>
    %c0_21 = arith.constant 0 : index
    %c0_22 = arith.constant 0 : index
    %27 = vector.load %arg9[%c0_21, %c0_22] : memref<1x128xf32, #tpu.memory_space<vmem>>, vector<1x128xf32>
    %28 = vector.broadcast %27 : vector<1x128xf32> to vector<8x128xf32>
    %29 = arith.addf %26, %28 : vector<8x128xf32>
    %c0_23 = arith.constant 0 : index
    %c0_24 = arith.constant 0 : index
    %30 = vector.load %arg10[%c0_23, %c0_24] : memref<8x128xf32, #tpu.memory_space<vmem>>, vector<8x128xf32>
    tpu.vector_store %arg10[%c0_23, %c0_24], %29 {strides = array<i32>} : memref<8x128xf32, #tpu.memory_space<vmem>>, vector<8x128xf32>,
    return
  }
  func.func @transform_0(%arg0: i32) -> (i32, i32) {
    %c0_i32 = arith.constant 0 : i32
    %c0_i32_0 = arith.constant 0 : i32
    return %arg0, %c0_i32 : i32, i32
  }
  func.func @transform_1(%arg0: i32) -> (i32, i32) {
    %c0_i32 = arith.constant 0 : i32
    %c0_i32_0 = arith.constant 0 : i32
    %c0_i32_1 = arith.constant 0 : i32
    return %c0_i32, %c0_i32_0 : i32, i32
  }
  func.func @transform_2(%arg0: i32) -> (i32, i32) {
    %c0_i32 = arith.constant 0 : i32
    %c0_i32_0 = arith.constant 0 : i32
    %c0_i32_1 = arith.constant 0 : i32
    return %c0_i32, %c0_i32_0 : i32, i32
  }
  func.func @transform_3(%arg0: i32) -> (i32, i32) {
    %c0_i32 = arith.constant 0 : i32
    %c0_i32_0 = arith.constant 0 : i32
    %c0_i32_1 = arith.constant 0 : i32
    return %c0_i32, %c0_i32_0 : i32, i32
  }
  func.func @transform_4(%arg0: i32) -> (i32, i32) {
    %c0_i32 = arith.constant 0 : i32
    %c0_i32_0 = arith.constant 0 : i32
    %c0_i32_1 = arith.constant 0 : i32
    return %c0_i32, %c0_i32_0 : i32, i32
  }
  func.func @transform_5(%arg0: i32) -> (i32, i32) {
    %c0_i32 = arith.constant 0 : i32
    %c0_i32_0 = arith.constant 0 : i32
    %c0_i32_1 = arith.constant 0 : i32
    return %c0_i32, %c0_i32_0 : i32, i32
  }
  func.func @transform_6(%arg0: i32) -> (i32, i32) {
    %c0_i32 = arith.constant 0 : i32
    %c0_i32_0 = arith.constant 0 : i32
    %c0_i32_1 = arith.constant 0 : i32
    return %c0_i32, %c0_i32_0 : i32, i32
  }
  func.func @transform_7(%arg0: i32) -> (i32, i32) {
    %c0_i32 = arith.constant 0 : i32
    %c0_i32_0 = arith.constant 0 : i32
    %c0_i32_1 = arith.constant 0 : i32
    return %c0_i32, %c0_i32_0 : i32, i32
  }
  func.func @transform_8(%arg0: i32) -> (i32, i32) {
    %c0_i32 = arith.constant 0 : i32
    %c0_i32_0 = arith.constant 0 : i32
    %c0_i32_1 = arith.constant 0 : i32
    return %c0_i32, %c0_i32_0 : i32, i32
  }
  func.func @transform_9(%arg0: i32) -> (i32, i32) {
    %c0_i32 = arith.constant 0 : i32
    %c0_i32_0 = arith.constant 0 : i32
    return %arg0, %c0_i32 : i32, i32
  }
}

</mosaic_0001>

<llo_original>
// kernel: tpu_custom_call.1
$region0: #{tpu_custom_call.1}
  #allocation0 [shape = 'u32[]', space=smem, size = 0x4, offset = 0x4, fixed_abs, tag = 'smem constant byte address 0x4 - core index']
  #allocation1 [shape = 'u32[72,128]{1,0:T(1,128)}', space=vmem, size = 0x9000, scoped, tag = 'internal scratch']
  %s0 = inlined_call_operand.hbm [shape: bf16[8,896], index: 0, kind: input, shape index: {}]
  %s1 = inlined_call_operand.hbm [shape: bf16[896,1024], index: 1, kind: input, shape index: {}]
  %s2 = inlined_call_operand.hbm [shape: f32[1,1024], index: 2, kind: input, shape index: {}]
  %s3 = inlined_call_operand.hbm [shape: bf16[1024,512], index: 3, kind: input, shape index: {}]
  %s4 = inlined_call_operand.hbm [shape: f32[1,512], index: 4, kind: input, shape index: {}]
  %s5 = inlined_call_operand.hbm [shape: bf16[512,256], index: 5, kind: input, shape index: {}]
  %s6 = inlined_call_operand.hbm [shape: f32[1,256], index: 6, kind: input, shape index: {}]
  %s7 = inlined_call_operand.hbm [shape: bf16[256,128], index: 7, kind: input, shape index: {}]
  %s8 = inlined_call_operand.hbm [shape: f32[1,128], index: 8, kind: input, shape index: {}]
  %s9 = inlined_call_operand.hbm [shape: f32[8,128], index: 9, kind: output, shape index: {}]
  %s10 = sld [smem:[#allocation0]]
  $region82: #{tpu_custom_call.1} parent=0
    _
  %s12 = ssub.s32 1, %s10
  %s13 = scalar_select 0, %s12, %s10
  $region1: #{tpu_custom_call.1} parent=0
    #allocation2 [shape = 'u8[14336]{0}', space=vmem, size = 0x3800, scoped, tag = 'input window, operand 0, single buffered']
    #allocation3 [shape = 's32[1]{0}', space=sflag, size = 0x4, scoped, tag = 'scoped memory for tpu_custom_call.1']
    #allocation4 [shape = 's32[1]{0}', space=sflag, size = 0x4, scoped, tag = 'scoped memory for tpu_custom_call.1']
    #allocation5 [shape = 'u8[1835008]{0}', space=vmem, size = 0x1c0000, scoped, tag = 'input window, operand 1, single buffered']
    #allocation6 [shape = 's32[1]{0}', space=sflag, size = 0x4, scoped, tag = 'scoped memory for tpu_custom_call.1']
    #allocation7 [shape = 'u8[4096]{0}', space=vmem, size = 0x1000, scoped, tag = 'input window, operand 2, single buffered']
    #allocation8 [shape = 'u8[1048576]{0}', space=vmem, size = 0x100000, scoped, tag = 'input window, operand 3, single buffered']
    #allocation9 [shape = 's32[1]{0}', space=sflag, size = 0x4, scoped, tag = 'scoped memory for tpu_custom_call.1']
    #allocation10 [shape = 'u8[2048]{0}', space=vmem, size = 0x800, scoped, tag = 'input window, operand 4, single buffered']
    #allocation11 [shape = 'u8[262144]{0}', space=vmem, size = 0x40000, scoped, tag = 'input window, operand 5, single buffered']
    #allocation12 [shape = 's32[1]{0}', space=sflag, size = 0x4, scoped, tag = 'scoped memory for tpu_custom_call.1']
    #allocation13 [shape = 'u8[1024]{0}', space=vmem, size = 0x400, scoped, tag = 'input window, operand 6, single buffered']
    #allocation14 [shape = 'u8[65536]{0}', space=vmem, size = 0x10000, scoped, tag = 'input window, operand 7, single buffered']
    #allocation15 [shape = 's32[1]{0}', space=sflag, size = 0x4, scoped, tag = 'scoped memory for tpu_custom_call.1']
    #allocation16 [shape = 'u8[512]{0}', space=vmem, size = 0x400, scoped, tag = 'input window, operand 8, single buffered']
    #allocation17 [shape = 'u8[4096]{0}', space=vmem, size = 0x1000, scoped, tag = 'output window, operand 0, single buffered']
    %14 = vsyncpa [#allocation3], 0
    %15 = vsyncpa [#allocation6], 0
    %16 = vsyncpa [#allocation9], 0
    %17 = vsyncpa [#allocation12], 0
    %18 = vsyncpa [#allocation15], 0
    %19 = vsyncpa [#allocation4], 0
    // Predicated region
    $region2: #{tpu_custom_call.1} parent=1 // pred_check
      _
    $region3: #{tpu_custom_call.1} parent=1 // pred_check_branch
      %21 = sbr.rel (0) target = $region5
    $region4: #{tpu_custom_call.1} parent=1 // pred_region
      %23 = vsyncadd [#allocation3], 0
      %s25 = sshll.u32 %s0, 4
      %s26 = int_to_ptr.hbm [resolvable:$true] %s25
      %s27 = sshll.u32 [#allocation2], 4
      %s28 = int_to_ptr.vmem [resolvable:$true] %s27
      %30 = dma.hbm_to_vmem [thread:$0]  %s26, 448, %s28, [#allocation3]
    $region5: #{tpu_custom_call.1} parent=1 // pred_fallthru
      _
    // Predicated region
    $region6: #{tpu_custom_call.1} parent=1 // pred_check
      _
    $region7: #{tpu_custom_call.1} parent=1 // pred_check_branch
      %32 = sbr.rel (0) target = $region9
    $region8: #{tpu_custom_call.1} parent=1 // pred_region
      %34 = vsyncadd [#allocation6], 0
      %s35 = sshll.u32 %s1, 4
      %s36 = int_to_ptr.hbm [resolvable:$true] %s35
      %s37 = sshll.u32 [#allocation5], 4
      %s38 = int_to_ptr.vmem [resolvable:$true] %s37
      %43 = dma.hbm_to_vmem [thread:$0]  %s36, 57344, %s38, [#allocation6], 512, 512, 32
    $region9: #{tpu_custom_call.1} parent=1 // pred_fallthru
      _
    // Predicated region
    $region10: #{tpu_custom_call.1} parent=1 // pred_check
      _
    $region11: #{tpu_custom_call.1} parent=1 // pred_check_branch
      %45 = sbr.rel (0) target = $region13
    $region12: #{tpu_custom_call.1} parent=1 // pred_region
      %47 = vsyncadd [#allocation6], 0
      %s49 = sshll.u32 %s2, 4
      %s50 = int_to_ptr.hbm [resolvable:$true] %s49
      %s51 = sshll.u32 [#allocation7], 4
      %s52 = int_to_ptr.vmem [resolvable:$true] %s51
      %54 = dma.hbm_to_vmem [thread:$0]  %s50, 128, %s52, [#allocation6]
    $region13: #{tpu_custom_call.1} parent=1 // pred_fallthru
      _
    // Predicated region
    $region14: #{tpu_custom_call.1} parent=1 // pred_check
      _
    $region15: #{tpu_custom_call.1} parent=1 // pred_check_branch
      %56 = sbr.rel (0) target = $region17
    $region16: #{tpu_custom_call.1} parent=1 // pred_region
      %58 = vsyncadd [#allocation9], 0
      %s59 = sshll.u32 %s3, 4
      %s60 = int_to_ptr.hbm [resolvable:$true] %s59
      %s61 = sshll.u32 [#allocation8], 4
      %s62 = int_to_ptr.vmem [resolvable:$true] %s61
      %67 = dma.hbm_to_vmem [thread:$0]  %s60, 32768, %s62, [#allocation9], 256, 256, 16
    $region17: #{tpu_custom_call.1} parent=1 // pred_fallthru
      _
    // Predicated region
    $region18: #{tpu_custom_call.1} parent=1 // pred_check
      _
    $region19: #{tpu_custom_call.1} parent=1 // pred_check_branch
      %69 = sbr.rel (0) target = $region21
    $region20: #{tpu_custom_call.1} parent=1 // pred_region
      %71 = vsyncadd [#allocation9], 0
      %s73 = sshll.u32 %s4, 4
      %s74 = int_to_ptr.hbm [resolvable:$true] %s73
      %s75 = sshll.u32 [#allocation10], 4
      %s76 = int_to_ptr.vmem [resolvable:$true] %s75
      %78 = dma.hbm_to_vmem [thread:$0]  %s74, 64, %s76, [#allocation9]
    $region21: #{tpu_custom_call.1} parent=1 // pred_fallthru
      _
    // Predicated region
    $region22: #{tpu_custom_call.1} parent=1 // pred_check
      _
    $region23: #{tpu_custom_call.1} parent=1 // pred_check_branch
      %80 = sbr.rel (0) target = $region25
    $region24: #{tpu_custom_call.1} parent=1 // pred_region
      %82 = vsyncadd [#allocation12], 0
      %s83 = sshll.u32 %s5, 4
      %s84 = int_to_ptr.hbm [resolvable:$true] %s83
      %s85 = sshll.u32 [#allocation11], 4
      %s86 = int_to_ptr.vmem [resolvable:$true] %s85
      %91 = dma.hbm_to_vmem [thread:$0]  %s84, 8192, %s86, [#allocation12], 128, 128, 8
    $region25: #{tpu_custom_call.1} parent=1 // pred_fallthru
      _
    // Predicated region
    $region26: #{tpu_custom_call.1} parent=1 // pred_check
      _
    $region27: #{tpu_custom_call.1} parent=1 // pred_check_branch
      %93 = sbr.rel (0) target = $region29
    $region28: #{tpu_custom_call.1} parent=1 // pred_region
      %95 = vsyncadd [#allocation12], 0
      %s97 = sshll.u32 %s6, 4
      %s98 = int_to_ptr.hbm [resolvable:$true] %s97
      %s99 = sshll.u32 [#allocation13], 4
      %s100 = int_to_ptr.vmem [resolvable:$true] %s99
      %102 = dma.hbm_to_vmem [thread:$0]  %s98, 32, %s100, [#allocation12]
    $region29: #{tpu_custom_call.1} parent=1 // pred_fallthru
      _
    // Predicated region
    $region30: #{tpu_custom_call.1} parent=1 // pred_check
      _
    $region31: #{tpu_custom_call.1} parent=1 // pred_check_branch
      %104 = sbr.rel (0) target = $region33
    $region32: #{tpu_custom_call.1} parent=1 // pred_region
      %106 = vsyncadd [#allocation15], 0
      %s107 = sshll.u32 %s7, 4
      %s108 = int_to_ptr.hbm [resolvable:$true] %s107
      %s109 = sshll.u32 [#allocation14], 4
      %s110 = int_to_ptr.vmem [resolvable:$true] %s109
      %115 = dma.hbm_to_vmem [thread:$0]  %s108, 2048, %s110, [#allocation15], 64, 64, 4
    $region33: #{tpu_custom_call.1} parent=1 // pred_fallthru
      _
    // Predicated region
    $region34: #{tpu_custom_call.1} parent=1 // pred_check
      _
    $region35: #{tpu_custom_call.1} parent=1 // pred_check_branch
      %117 = sbr.rel (0) target = $region37
    $region36: #{tpu_custom_call.1} parent=1 // pred_region
      %119 = vsyncadd [#allocation15], 0
      %s121 = sshll.u32 %s8, 4
      %s122 = int_to_ptr.hbm [resolvable:$true] %s121
      %s123 = sshll.u32 [#allocation16], 4
      %s124 = int_to_ptr.vmem [resolvable:$true] %s123
      %126 = dma.hbm_to_vmem [thread:$0]  %s122, 16, %s124, [#allocation15]
    $region37: #{tpu_custom_call.1} parent=1 // pred_fallthru
      _
    // Predicated region
    $region38: #{tpu_custom_call.1} parent=1 // pred_check
      _
    $region39: #{tpu_custom_call.1} parent=1 // pred_check_branch
      %128 = sbr.rel (0) target = $region41
    $region40: #{tpu_custom_call.1} parent=1 // pred_region
      %130 = dma.done [#allocation3], 448
    $region41: #{tpu_custom_call.1} parent=1 // pred_fallthru
      _
    // Predicated region
    $region42: #{tpu_custom_call.1} parent=1 // pred_check
      _
    $region43: #{tpu_custom_call.1} parent=1 // pred_check_branch
      %132 = sbr.rel (0) target = $region45
    $region44: #{tpu_custom_call.1} parent=1 // pred_region
      %134 = dma.done [#allocation6], 57344
    $region45: #{tpu_custom_call.1} parent=1 // pred_fallthru
      _
    // Predicated region
    $region46: #{tpu_custom_call.1} parent=1 // pred_check
      _
    $region47: #{tpu_custom_call.1} parent=1 // pred_check_branch
      %136 = sbr.rel (0) target = $region49
    $region48: #{tpu_custom_call.1} parent=1 // pred_region
      %138 = dma.done [#allocation6], 128
    $region49: #{tpu_custom_call.1} parent=1 // pred_fallthru
      _
    // Predicated region
    $region50: #{tpu_custom_call.1} parent=1 // pred_check
      _
    $region51: #{tpu_custom_call.1} parent=1 // pred_check_branch
      %140 = sbr.rel (0) target = $region53
    $region52: #{tpu_custom_call.1} parent=1 // pred_region
      %142 = dma.done [#allocation9], 32768
    $region53: #{tpu_custom_call.1} parent=1 // pred_fallthru
      _
    // Predicated region
    $region54: #{tpu_custom_call.1} parent=1 // pred_check
      _
    $region55: #{tpu_custom_call.1} parent=1 // pred_check_branch
      %144 = sbr.rel (0) target = $region57
    $region56: #{tpu_custom_call.1} parent=1 // pred_region
      %146 = dma.done [#allocation9], 64
    $region57: #{tpu_custom_call.1} parent=1 // pred_fallthru
      _
    // Predicated region
    $region58: #{tpu_custom_call.1} parent=1 // pred_check
      _
    $region59: #{tpu_custom_call.1} parent=1 // pred_check_branch
      %148 = sbr.rel (0) target = $region61
    $region60: #{tpu_custom_call.1} parent=1 // pred_region
      %150 = dma.done [#allocation12], 8192
    $region61: #{tpu_custom_call.1} parent=1 // pred_fallthru
      _
    // Predicated region
    $region62: #{tpu_custom_call.1} parent=1 // pred_check
      _
    $region63: #{tpu_custom_call.1} parent=1 // pred_check_branch
      %152 = sbr.rel (0) target = $region65
    $region64: #{tpu_custom_call.1} parent=1 // pred_region
      %154 = dma.done [#allocation12], 32
    $region65: #{tpu_custom_call.1} parent=1 // pred_fallthru
      _
    // Predicated region
    $region66: #{tpu_custom_call.1} parent=1 // pred_check
      _
    $region67: #{tpu_custom_call.1} parent=1 // pred_check_branch
      %156 = sbr.rel (0) target = $region69
    $region68: #{tpu_custom_call.1} parent=1 // pred_region
      %158 = dma.done [#allocation15], 2048
    $region69: #{tpu_custom_call.1} parent=1 // pred_fallthru
      _
    // Predicated region
    $region70: #{tpu_custom_call.1} parent=1 // pred_check
      _
    $region71: #{tpu_custom_call.1} parent=1 // pred_check_branch
      %160 = sbr.rel (0) target = $region73
    $region72: #{tpu_custom_call.1} parent=1 // pred_region
      %162 = dma.done [#allocation15], 16
    $region73: #{tpu_custom_call.1} parent=1 // pred_fallthru
      _
    %v163 = vld [vmem:[#allocation2] sm:$0xff]
    %v164 = vld [vmem:[#allocation2 + $0x8] sm:$0xff]
    %v165 = vld [vmem:[#allocation2 + $0x10] sm:$0xff]
    %v166 = vld [vmem:[#allocation2 + $0x18] sm:$0xf]
    %v167 = vld [vmem:[#allocation5] sm:$0xff]
    %v168 = vld [vmem:[#allocation5 + $0x8] sm:$0xff]
    %v169 = vld [vmem:[#allocation5 + $0x10] sm:$0xff]
    %v170 = vld [vmem:[#allocation5 + $0x18] sm:$0xff]
    %v171 = vld [vmem:[#allocation5 + $0x20] sm:$0xff]
    %v172 = vld [vmem:[#allocation5 + $0x28] sm:$0xff]
    %v173 = vld [vmem:[#allocation5 + $0x30] sm:$0xff]
    %v174 = vld [vmem:[#allocation5 + $0x38] sm:$0xff]
    %v175 = vld [vmem:[#allocation5 + $0x40] sm:$0xff]
    %v176 = vld [vmem:[#allocation5 + $0x48] sm:$0xff]
    %v177 = vld [vmem:[#allocation5 + $0x50] sm:$0xff]
    %v178 = vld [vmem:[#allocation5 + $0x58] sm:$0xff]
    %v179 = vld [vmem:[#allocation5 + $0x60] sm:$0xff]
    %v180 = vld [vmem:[#allocation5 + $0x68] sm:$0xff]
    %v181 = vld [vmem:[#allocation5 + $0x70] sm:$0xff]
    %v182 = vld [vmem:[#allocation5 + $0x78] sm:$0xff]
    %v183 = vld [vmem:[#allocation5 + $0x80] sm:$0xff]
    %v184 = vld [vmem:[#allocation5 + $0x88] sm:$0xff]
    %v185 = vld [vmem:[#allocation5 + $0x90] sm:$0xff]
    %v186 = vld [vmem:[#allocation5 + $0x98] sm:$0xff]
    %v187 = vld [vmem:[#allocation5 + $0xa0] sm:$0xff]
    %v188 = vld [vmem:[#allocation5 + $0xa8] sm:$0xff]
    %v189 = vld [vmem:[#allocation5 + $0xb0] sm:$0xff]
    %v190 = vld [vmem:[#allocation5 + $0xb8] sm:$0xff]
    %v191 = vld [vmem:[#allocation5 + $0xc0] sm:$0xff]
    %v192 = vld [vmem:[#allocation5 + $0xc8] sm:$0xff]
    %v193 = vld [vmem:[#allocation5 + $0xd0] sm:$0xff]
    %v194 = vld [vmem:[#allocation5 + $0xd8] sm:$0xff]
    %v195 = vld [vmem:[#allocation5 + $0xe0] sm:$0xff]
    %v196 = vld [vmem:[#allocation5 + $0xe8] sm:$0xff]
    %v197 = vld [vmem:[#allocation5 + $0xf0] sm:$0xff]
    %v198 = vld [vmem:[#allocation5 + $0xf8] sm:$0xff]
    %v199 = vld [vmem:[#allocation5 + $0x100] sm:$0xff]
    %v200 = vld [vmem:[#allocation5 + $0x108] sm:$0xff]
    %v201 = vld [vmem:[#allocation5 + $0x110] sm:$0xff]
    %v202 = vld [vmem:[#allocation5 + $0x118] sm:$0xff]
    %v203 = vld [vmem:[#allocation5 + $0x120] sm:$0xff]
    %v204 = vld [vmem:[#allocation5 + $0x128] sm:$0xff]
    %v205 = vld [vmem:[#allocation5 + $0x130] sm:$0xff]
    %v206 = vld [vmem:[#allocation5 + $0x138] sm:$0xff]
    %v207 = vld [vmem:[#allocation5 + $0x140] sm:$0xff]
    %v208 = vld [vmem:[#allocation5 + $0x148] sm:$0xff]
    %v209 = vld [vmem:[#allocation5 + $0x150] sm:$0xff]
    %v210 = vld [vmem:[#allocation5 + $0x158] sm:$0xff]
    %v211 = vld [vmem:[#allocation5 + $0x160] sm:$0xff]
    %v212 = vld [vmem:[#allocation5 + $0x168] sm:$0xff]
    %v213 = vld [vmem:[#allocation5 + $0x170] sm:$0xff]
    %v214 = vld [vmem:[#allocation5 + $0x178] sm:$0xff]
    %v215 = vld [vmem:[#allocation5 + $0x180] sm:$0xff]
    %v216 = vld [vmem:[#allocation5 + $0x188] sm:$0xff]
    %v217 = vld [vmem:[#allocation5 + $0x190] sm:$0xff]
    %v218 = vld [vmem:[#allocation5 + $0x198] sm:$0xff]
    %v219 = vld [vmem:[#allocation5 + $0x1a0] sm:$0xff]
    %v220 = vld [vmem:[#allocation5 + $0x1a8] sm:$0xff]
    %v221 = vld [vmem:[#allocation5 + $0x1b0] sm:$0xff]
    %v222 = vld [vmem:[#allocation5 + $0x1b8] sm:$0xff]
    %v223 = vld [vmem:[#allocation5 + $0x1c0] sm:$0xff]
    %v224 = vld [vmem:[#allocation5 + $0x1c8] sm:$0xff]
    %v225 = vld [vmem:[#allocation5 + $0x1d0] sm:$0xff]
    %v226 = vld [vmem:[#allocation5 + $0x1d8] sm:$0xff]
    %v227 = vld [vmem:[#allocation5 + $0x1e0] sm:$0xff]
    %v228 = vld [vmem:[#allocation5 + $0x1e8] sm:$0xff]
    %v229 = vld [vmem:[#allocation5 + $0x1f0] sm:$0xff]
    %v230 = vld [vmem:[#allocation5 + $0x1f8] sm:$0xff]
    %v231 = vld [vmem:[#allocation5 + $0x200] sm:$0xff]
    %v232 = vld [vmem:[#allocation5 + $0x208] sm:$0xff]
    %v233 = vld [vmem:[#allocation5 + $0x210] sm:$0xff]
    %v234 = vld [vmem:[#allocation5 + $0x218] sm:$0xff]
    %v235 = vld [vmem:[#allocation5 + $0x220] sm:$0xff]
    %v236 = vld [vmem:[#allocation5 + $0x228] sm:$0xff]
    %v237 = vld [vmem:[#allocation5 + $0x230] sm:$0xff]
    %v238 = vld [vmem:[#allocation5 + $0x238] sm:$0xff]
    %v239 = vld [vmem:[#allocation5 + $0x240] sm:$0xff]
    %v240 = vld [vmem:[#allocation5 + $0x248] sm:$0xff]
    %v241 = vld [vmem:[#allocation5 + $0x250] sm:$0xff]
    %v242 = vld [vmem:[#allocation5 + $0x258] sm:$0xff]
    %v243 = vld [vmem:[#allocation5 + $0x260] sm:$0xff]
    %v244 = vld [vmem:[#allocation5 + $0x268] sm:$0xff]
    %v245 = vld [vmem:[#allocation5 + $0x270] sm:$0xff]
    %v246 = vld [vmem:[#allocation5 + $0x278] sm:$0xff]
    %v247 = vld [vmem:[#allocation5 + $0x280] sm:$0xff]
    %v248 = vld [vmem:[#allocation5 + $0x288] sm:$0xff]
    %v249 = vld [vmem:[#allocation5 + $0x290] sm:$0xff]
    %v250 = vld [vmem:[#allocation5 + $0x298] sm:$0xff]
    %v251 = vld [vmem:[#allocation5 + $0x2a0] sm:$0xff]
    %v252 = vld [vmem:[#allocation5 + $0x2a8] sm:$0xff]
    %v253 = vld [vmem:[#allocation5 + $0x2b0] sm:$0xff]
    %v254 = vld [vmem:[#allocation5 + $0x2b8] sm:$0xff]
    %v255 = vld [vmem:[#allocation5 + $0x2c0] sm:$0xff]
    %v256 = vld [vmem:[#allocation5 + $0x2c8] sm:$0xff]
    %v257 = vld [vmem:[#allocation5 + $0x2d0] sm:$0xff]
    %v258 = vld [vmem:[#allocation5 + $0x2d8] sm:$0xff]
    %v259 = vld [vmem:[#allocation5 + $0x2e0] sm:$0xff]
    %v260 = vld [vmem:[#allocation5 + $0x2e8] sm:$0xff]
    %v261 = vld [vmem:[#allocation5 + $0x2f0] sm:$0xff]
    %v262 = vld [vmem:[#allocation5 + $0x2f8] sm:$0xff]
    %v263 = vld [vmem:[#allocation5 + $0x300] sm:$0xff]
    %v264 = vld [vmem:[#allocation5 + $0x308] sm:$0xff]
    %v265 = vld [vmem:[#allocation5 + $0x310] sm:$0xff]
    %v266 = vld [vmem:[#allocation5 + $0x318] sm:$0xff]
    %v267 = vld [vmem:[#allocation5 + $0x320] sm:$0xff]
    %v268 = vld [vmem:[#allocation5 + $0x328] sm:$0xff]
    %v269 = vld [vmem:[#allocation5 + $0x330] sm:$0xff]
    %v270 = vld [vmem:[#allocation5 + $0x338] sm:$0xff]
    %v271 = vld [vmem:[#allocation5 + $0x340] sm:$0xff]
    %v272 = vld [vmem:[#allocation5 + $0x348] sm:$0xff]
    %v273 = vld [vmem:[#allocation5 + $0x350] sm:$0xff]
    %v274 = vld [vmem:[#allocation5 + $0x358] sm:$0xff]
    %v275 = vld [vmem:[#allocation5 + $0x360] sm:$0xff]
    %v276 = vld [vmem:[#allocation5 + $0x368] sm:$0xff]
    %v277 = vld [vmem:[#allocation5 + $0x370] sm:$0xff]
    %v278 = vld [vmem:[#allocation5 + $0x378] sm:$0xff]
    %v279 = vld [vmem:[#allocation5 + $0x380] sm:$0xff]
    %v280 = vld [vmem:[#allocation5 + $0x388] sm:$0xff]
    %v281 = vld [vmem:[#allocation5 + $0x390] sm:$0xff]
    %v282 = vld [vmem:[#allocation5 + $0x398] sm:$0xff]
    %v283 = vld [vmem:[#allocation5 + $0x3a0] sm:$0xff]
    %v284 = vld [vmem:[#allocation5 + $0x3a8] sm:$0xff]
    %v285 = vld [vmem:[#allocation5 + $0x3b0] sm:$0xff]
    %v286 = vld [vmem:[#allocation5 + $0x3b8] sm:$0xff]
    %v287 = vld [vmem:[#allocation5 + $0x3c0] sm:$0xff]
    %v288 = vld [vmem:[#allocation5 + $0x3c8] sm:$0xff]
    %v289 = vld [vmem:[#allocation5 + $0x3d0] sm:$0xff]
    %v290 = vld [vmem:[#allocation5 + $0x3d8] sm:$0xff]
    %v291 = vld [vmem:[#allocation5 + $0x3e0] sm:$0xff]
    %v292 = vld [vmem:[#allocation5 + $0x3e8] sm:$0xff]
    %v293 = vld [vmem:[#allocation5 + $0x3f0] sm:$0xff]
    %v294 = vld [vmem:[#allocation5 + $0x3f8] sm:$0xff]
    %v295 = vld [vmem:[#allocation5 + $0x400] sm:$0xff]
    %v296 = vld [vmem:[#allocation5 + $0x408] sm:$0xff]
    %v297 = vld [vmem:[#allocation5 + $0x410] sm:$0xff]
    %v298 = vld [vmem:[#allocation5 + $0x418] sm:$0xff]
    %v299 = vld [vmem:[#allocation5 + $0x420] sm:$0xff]
    %v300 = vld [vmem:[#allocation5 + $0x428] sm:$0xff]
    %v301 = vld [vmem:[#allocation5 + $0x430] sm:$0xff]
    %v302 = vld [vmem:[#allocation5 + $0x438] sm:$0xff]
    %v303 = vld [vmem:[#allocation5 + $0x440] sm:$0xff]
    %v304 = vld [vmem:[#allocation5 + $0x448] sm:$0xff]
    %v305 = vld [vmem:[#allocation5 + $0x450] sm:$0xff]
    %v306 = vld [vmem:[#allocation5 + $0x458] sm:$0xff]
    %v307 = vld [vmem:[#allocation5 + $0x460] sm:$0xff]
    %v308 = vld [vmem:[#allocation5 + $0x468] sm:$0xff]
    %v309 = vld [vmem:[#allocation5 + $0x470] sm:$0xff]
    %v310 = vld [vmem:[#allocation5 + $0x478] sm:$0xff]
    %v311 = vld [vmem:[#allocation5 + $0x480] sm:$0xff]
    %v312 = vld [vmem:[#allocation5 + $0x488] sm:$0xff]
    %v313 = vld [vmem:[#allocation5 + $0x490] sm:$0xff]
    %v314 = vld [vmem:[#allocation5 + $0x498] sm:$0xff]
    %v315 = vld [vmem:[#allocation5 + $0x4a0] sm:$0xff]
    %v316 = vld [vmem:[#allocation5 + $0x4a8] sm:$0xff]
    %v317 = vld [vmem:[#allocation5 + $0x4b0] sm:$0xff]
    %v318 = vld [vmem:[#allocation5 + $0x4b8] sm:$0xff]
    %v319 = vld [vmem:[#allocation5 + $0x4c0] sm:$0xff]
    %v320 = vld [vmem:[#allocation5 + $0x4c8] sm:$0xff]
    %v321 = vld [vmem:[#allocation5 + $0x4d0] sm:$0xff]
    %v322 = vld [vmem:[#allocation5 + $0x4d8] sm:$0xff]
    %v323 = vld [vmem:[#allocation5 + $0x4e0] sm:$0xff]
    %v324 = vld [vmem:[#allocation5 + $0x4e8] sm:$0xff]
    %v325 = vld [vmem:[#allocation5 + $0x4f0] sm:$0xff]
    %v326 = vld [vmem:[#allocation5 + $0x4f8] sm:$0xff]
    %v327 = vld [vmem:[#allocation5 + $0x500] sm:$0xff]
    %v328 = vld [vmem:[#allocation5 + $0x508] sm:$0xff]
    %v329 = vld [vmem:[#allocation5 + $0x510] sm:$0xff]
    %v330 = vld [vmem:[#allocation5 + $0x518] sm:$0xff]
    %v331 = vld [vmem:[#allocation5 + $0x520] sm:$0xff]
    %v332 = vld [vmem:[#allocation5 + $0x528] sm:$0xff]
    %v333 = vld [vmem:[#allocation5 + $0x530] sm:$0xff]
    %v334 = vld [vmem:[#allocation5 + $0x538] sm:$0xff]
    %v335 = vld [vmem:[#allocation5 + $0x540] sm:$0xff]
    %v336 = vld [vmem:[#allocation5 + $0x548] sm:$0xff]
    %v337 = vld [vmem:[#allocation5 + $0x550] sm:$0xff]
    %v338 = vld [vmem:[#allocation5 + $0x558] sm:$0xff]
    %v339 = vld [vmem:[#allocation5 + $0x560] sm:$0xff]
    %v340 = vld [vmem:[#allocation5 + $0x568] sm:$0xff]
    %v341 = vld [vmem:[#allocation5 + $0x570] sm:$0xff]
    %v342 = vld [vmem:[#allocation5 + $0x578] sm:$0xff]
    %v343 = vld [vmem:[#allocation5 + $0x580] sm:$0xff]
    %v344 = vld [vmem:[#allocation5 + $0x588] sm:$0xff]
    %v345 = vld [vmem:[#allocation5 + $0x590] sm:$0xff]
    %v346 = vld [vmem:[#allocation5 + $0x598] sm:$0xff]
    %v347 = vld [vmem:[#allocation5 + $0x5a0] sm:$0xff]
    %v348 = vld [vmem:[#allocation5 + $0x5a8] sm:$0xff]
    %v349 = vld [vmem:[#allocation5 + $0x5b0] sm:$0xff]
    %v350 = vld [vmem:[#allocation5 + $0x5b8] sm:$0xff]
    %v351 = vld [vmem:[#allocation5 + $0x5c0] sm:$0xff]
    %v352 = vld [vmem:[#allocation5 + $0x5c8] sm:$0xff]
    %v353 = vld [vmem:[#allocation5 + $0x5d0] sm:$0xff]
    %v354 = vld [vmem:[#allocation5 + $0x5d8] sm:$0xff]
    %v355 = vld [vmem:[#allocation5 + $0x5e0] sm:$0xff]
    %v356 = vld [vmem:[#allocation5 + $0x5e8] sm:$0xff]
    %v357 = vld [vmem:[#allocation5 + $0x5f0] sm:$0xff]
    %v358 = vld [vmem:[#allocation5 + $0x5f8] sm:$0xff]
    %v359 = vld [vmem:[#allocation5 + $0x600] sm:$0xff]
    %v360 = vld [vmem:[#allocation5 + $0x608] sm:$0xff]
    %v361 = vld [vmem:[#allocation5 + $0x610] sm:$0xff]
    %v362 = vld [vmem:[#allocation5 + $0x618] sm:$0xff]
    %v363 = vld [vmem:[#allocation5 + $0x620] sm:$0xff]
    %v364 = vld [vmem:[#allocation5 + $0x628] sm:$0xff]
    %v365 = vld [vmem:[#allocation5 + $0x630] sm:$0xff]
    %v366 = vld [vmem:[#allocation5 + $0x638] sm:$0xff]
    %v367 = vld [vmem:[#allocation5 + $0x640] sm:$0xff]
    %v368 = vld [vmem:[#allocation5 + $0x648] sm:$0xff]
    %v369 = vld [vmem:[#allocation5 + $0x650] sm:$0xff]
    %v370 = vld [vmem:[#allocation5 + $0x658] sm:$0xff]
    %v371 = vld [vmem:[#allocation5 + $0x660] sm:$0xff]
    %v372 = vld [vmem:[#allocation5 + $0x668] sm:$0xff]
    %v373 = vld [vmem:[#allocation5 + $0x670] sm:$0xff]
    %v374 = vld [vmem:[#allocation5 + $0x678] sm:$0xff]
    %v375 = vld [vmem:[#allocation5 + $0x680] sm:$0xff]
    %v376 = vld [vmem:[#allocation5 + $0x688] sm:$0xff]
    %v377 = vld [vmem:[#allocation5 + $0x690] sm:$0xff]
    %v378 = vld [vmem:[#allocation5 + $0x698] sm:$0xff]
    %v379 = vld [vmem:[#allocation5 + $0x6a0] sm:$0xff]
    %v380 = vld [vmem:[#allocation5 + $0x6a8] sm:$0xff]
    %v381 = vld [vmem:[#allocation5 + $0x6b0] sm:$0xff]
    %v382 = vld [vmem:[#allocation5 + $0x6b8] sm:$0xff]
    %v383 = vld [vmem:[#allocation5 + $0x6c0] sm:$0xff]
    %v384 = vld [vmem:[#allocation5 + $0x6c8] sm:$0xff]
    %v385 = vld [vmem:[#allocation5 + $0x6d0] sm:$0xff]
    %v386 = vld [vmem:[#allocation5 + $0x6d8] sm:$0xff]
    %v387 = vld [vmem:[#allocation5 + $0x6e0] sm:$0xff]
    %v388 = vld [vmem:[#allocation5 + $0x6e8] sm:$0xff]
    %v389 = vld [vmem:[#allocation5 + $0x6f0] sm:$0xff]
    %v390 = vld [vmem:[#allocation5 + $0x6f8] sm:$0xff]
    %v391 = vld [vmem:[#allocation5 + $0x700] sm:$0xff]
    %v392 = vld [vmem:[#allocation5 + $0x708] sm:$0xff]
    %v393 = vld [vmem:[#allocation5 + $0x710] sm:$0xff]
    %v394 = vld [vmem:[#allocation5 + $0x718] sm:$0xff]
    %v395 = vld [vmem:[#allocation5 + $0x720] sm:$0xff]
    %v396 = vld [vmem:[#allocation5 + $0x728] sm:$0xff]
    %v397 = vld [vmem:[#allocation5 + $0x730] sm:$0xff]
    %v398 = vld [vmem:[#allocation5 + $0x738] sm:$0xff]
    %v399 = vld [vmem:[#allocation5 + $0x740] sm:$0xff]
    %v400 = vld [vmem:[#allocation5 + $0x748] sm:$0xff]
    %v401 = vld [vmem:[#allocation5 + $0x750] sm:$0xff]
    %v402 = vld [vmem:[#allocation5 + $0x758] sm:$0xff]
    %v403 = vld [vmem:[#allocation5 + $0x760] sm:$0xff]
    %v404 = vld [vmem:[#allocation5 + $0x768] sm:$0xff]
    %v405 = vld [vmem:[#allocation5 + $0x770] sm:$0xff]
    %v406 = vld [vmem:[#allocation5 + $0x778] sm:$0xff]
    %v407 = vld [vmem:[#allocation5 + $0x780] sm:$0xff]
    %v408 = vld [vmem:[#allocation5 + $0x788] sm:$0xff]
    %v409 = vld [vmem:[#allocation5 + $0x790] sm:$0xff]
    %v410 = vld [vmem:[#allocation5 + $0x798] sm:$0xff]
    %v411 = vld [vmem:[#allocation5 + $0x7a0] sm:$0xff]
    %v412 = vld [vmem:[#allocation5 + $0x7a8] sm:$0xff]
    %v413 = vld [vmem:[#allocation5 + $0x7b0] sm:$0xff]
    %v414 = vld [vmem:[#allocation5 + $0x7b8] sm:$0xff]
    %v415 = vld [vmem:[#allocation5 + $0x7c0] sm:$0xff]
    %v416 = vld [vmem:[#allocation5 + $0x7c8] sm:$0xff]
    %v417 = vld [vmem:[#allocation5 + $0x7d0] sm:$0xff]
    %v418 = vld [vmem:[#allocation5 + $0x7d8] sm:$0xff]
    %v419 = vld [vmem:[#allocation5 + $0x7e0] sm:$0xff]
    %v420 = vld [vmem:[#allocation5 + $0x7e8] sm:$0xff]
    %v421 = vld [vmem:[#allocation5 + $0x7f0] sm:$0xff]
    %v422 = vld [vmem:[#allocation5 + $0x7f8] sm:$0xff]
    %v423 = vld [vmem:[#allocation5 + $0x800] sm:$0xff]
    %v424 = vld [vmem:[#allocation5 + $0x808] sm:$0xff]
    %v425 = vld [vmem:[#allocation5 + $0x810] sm:$0xff]
    %v426 = vld [vmem:[#allocation5 + $0x818] sm:$0xff]
    %v427 = vld [vmem:[#allocation5 + $0x820] sm:$0xff]
    %v428 = vld [vmem:[#allocation5 + $0x828] sm:$0xff]
    %v429 = vld [vmem:[#allocation5 + $0x830] sm:$0xff]
    %v430 = vld [vmem:[#allocation5 + $0x838] sm:$0xff]
    %v431 = vld [vmem:[#allocation5 + $0x840] sm:$0xff]
    %v432 = vld [vmem:[#allocation5 + $0x848] sm:$0xff]
    %v433 = vld [vmem:[#allocation5 + $0x850] sm:$0xff]
    %v434 = vld [vmem:[#allocation5 + $0x858] sm:$0xff]
    %v435 = vld [vmem:[#allocation5 + $0x860] sm:$0xff]
    %v436 = vld [vmem:[#allocation5 + $0x868] sm:$0xff]
    %v437 = vld [vmem:[#allocation5 + $0x870] sm:$0xff]
    %v438 = vld [vmem:[#allocation5 + $0x878] sm:$0xff]
    %v439 = vld [vmem:[#allocation5 + $0x880] sm:$0xff]
    %v440 = vld [vmem:[#allocation5 + $0x888] sm:$0xff]
    %v441 = vld [vmem:[#allocation5 + $0x890] sm:$0xff]
    %v442 = vld [vmem:[#allocation5 + $0x898] sm:$0xff]
    %v443 = vld [vmem:[#allocation5 + $0x8a0] sm:$0xff]
    %v444 = vld [vmem:[#allocation5 + $0x8a8] sm:$0xff]
    %v445 = vld [vmem:[#allocation5 + $0x8b0] sm:$0xff]
    %v446 = vld [vmem:[#allocation5 + $0x8b8] sm:$0xff]
    %v447 = vld [vmem:[#allocation5 + $0x8c0] sm:$0xff]
    %v448 = vld [vmem:[#allocation5 + $0x8c8] sm:$0xff]
    %v449 = vld [vmem:[#allocation5 + $0x8d0] sm:$0xff]
    %v450 = vld [vmem:[#allocation5 + $0x8d8] sm:$0xff]
    %v451 = vld [vmem:[#allocation5 + $0x8e0] sm:$0xff]
    %v452 = vld [vmem:[#allocation5 + $0x8e8] sm:$0xff]
    %v453 = vld [vmem:[#allocation5 + $0x8f0] sm:$0xff]
    %v454 = vld [vmem:[#allocation5 + $0x8f8] sm:$0xff]
    %v455 = vld [vmem:[#allocation5 + $0x900] sm:$0xff]
    %v456 = vld [vmem:[#allocation5 + $0x908] sm:$0xff]
    %v457 = vld [vmem:[#allocation5 + $0x910] sm:$0xff]
    %v458 = vld [vmem:[#allocation5 + $0x918] sm:$0xff]
    %v459 = vld [vmem:[#allocation5 + $0x920] sm:$0xff]
    %v460 = vld [vmem:[#allocation5 + $0x928] sm:$0xff]
    %v461 = vld [vmem:[#allocation5 + $0x930] sm:$0xff]
    %v462 = vld [vmem:[#allocation5 + $0x938] sm:$0xff]
    %v463 = vld [vmem:[#allocation5 + $0x940] sm:$0xff]
    %v464 = vld [vmem:[#allocation5 + $0x948] sm:$0xff]
    %v465 = vld [vmem:[#allocation5 + $0x950] sm:$0xff]
    %v466 = vld [vmem:[#allocation5 + $0x958] sm:$0xff]
    %v467 = vld [vmem:[#allocation5 + $0x960] sm:$0xff]
    %v468 = vld [vmem:[#allocation5 + $0x968] sm:$0xff]
    %v469 = vld [vmem:[#allocation5 + $0x970] sm:$0xff]
    %v470 = vld [vmem:[#allocation5 + $0x978] sm:$0xff]
    %v471 = vld [vmem:[#allocation5 + $0x980] sm:$0xff]
    %v472 = vld [vmem:[#allocation5 + $0x988] sm:$0xff]
    %v473 = vld [vmem:[#allocation5 + $0x990] sm:$0xff]
    %v474 = vld [vmem:[#allocation5 + $0x998] sm:$0xff]
    %v475 = vld [vmem:[#allocation5 + $0x9a0] sm:$0xff]
    %v476 = vld [vmem:[#allocation5 + $0x9a8] sm:$0xff]
    %v477 = vld [vmem:[#allocation5 + $0x9b0] sm:$0xff]
    %v478 = vld [vmem:[#allocation5 + $0x9b8] sm:$0xff]
    %v479 = vld [vmem:[#allocation5 + $0x9c0] sm:$0xff]
    %v480 = vld [vmem:[#allocation5 + $0x9c8] sm:$0xff]
    %v481 = vld [vmem:[#allocation5 + $0x9d0] sm:$0xff]
    %v482 = vld [vmem:[#allocation5 + $0x9d8] sm:$0xff]
    %v483 = vld [vmem:[#allocation5 + $0x9e0] sm:$0xff]
    %v484 = vld [vmem:[#allocation5 + $0x9e8] sm:$0xff]
    %v485 = vld [vmem:[#allocation5 + $0x9f0] sm:$0xff]
    %v486 = vld [vmem:[#allocation5 + $0x9f8] sm:$0xff]
    %v487 = vld [vmem:[#allocation5 + $0xa00] sm:$0xff]
    %v488 = vld [vmem:[#allocation5 + $0xa08] sm:$0xff]
    %v489 = vld [vmem:[#allocation5 + $0xa10] sm:$0xff]
    %v490 = vld [vmem:[#allocation5 + $0xa18] sm:$0xff]
    %v491 = vld [vmem:[#allocation5 + $0xa20] sm:$0xff]
    %v492 = vld [vmem:[#allocation5 + $0xa28] sm:$0xff]
    %v493 = vld [vmem:[#allocation5 + $0xa30] sm:$0xff]
    %v494 = vld [vmem:[#allocation5 + $0xa38] sm:$0xff]
    %v495 = vld [vmem:[#allocation5 + $0xa40] sm:$0xff]
    %v496 = vld [vmem:[#allocation5 + $0xa48] sm:$0xff]
    %v497 = vld [vmem:[#allocation5 + $0xa50] sm:$0xff]
    %v498 = vld [vmem:[#allocation5 + $0xa58] sm:$0xff]
    %v499 = vld [vmem:[#allocation5 + $0xa60] sm:$0xff]
    %v500 = vld [vmem:[#allocation5 + $0xa68] sm:$0xff]
    %v501 = vld [vmem:[#allocation5 + $0xa70] sm:$0xff]
    %v502 = vld [vmem:[#allocation5 + $0xa78] sm:$0xff]
    %v503 = vld [vmem:[#allocation5 + $0xa80] sm:$0xff]
    %v504 = vld [vmem:[#allocation5 + $0xa88] sm:$0xff]
    %v505 = vld [vmem:[#allocation5 + $0xa90] sm:$0xff]
    %v506 = vld [vmem:[#allocation5 + $0xa98] sm:$0xff]
    %v507 = vld [vmem:[#allocation5 + $0xaa0] sm:$0xff]
    %v508 = vld [vmem:[#allocation5 + $0xaa8] sm:$0xff]
    %v509 = vld [vmem:[#allocation5 + $0xab0] sm:$0xff]
    %v510 = vld [vmem:[#allocation5 + $0xab8] sm:$0xff]
    %v511 = vld [vmem:[#allocation5 + $0xac0] sm:$0xff]
    %v512 = vld [vmem:[#allocation5 + $0xac8] sm:$0xff]
    %v513 = vld [vmem:[#allocation5 + $0xad0] sm:$0xff]
    %v514 = vld [vmem:[#allocation5 + $0xad8] sm:$0xff]
    %v515 = vld [vmem:[#allocation5 + $0xae0] sm:$0xff]
    %v516 = vld [vmem:[#allocation5 + $0xae8] sm:$0xff]
    %v517 = vld [vmem:[#allocation5 + $0xaf0] sm:$0xff]
    %v518 = vld [vmem:[#allocation5 + $0xaf8] sm:$0xff]
    %v519 = vld [vmem:[#allocation5 + $0xb00] sm:$0xff]
    %v520 = vld [vmem:[#allocation5 + $0xb08] sm:$0xff]
    %v521 = vld [vmem:[#allocation5 + $0xb10] sm:$0xff]
    %v522 = vld [vmem:[#allocation5 + $0xb18] sm:$0xff]
    %v523 = vld [vmem:[#allocation5 + $0xb20] sm:$0xff]
    %v524 = vld [vmem:[#allocation5 + $0xb28] sm:$0xff]
    %v525 = vld [vmem:[#allocation5 + $0xb30] sm:$0xff]
    %v526 = vld [vmem:[#allocation5 + $0xb38] sm:$0xff]
    %v527 = vld [vmem:[#allocation5 + $0xb40] sm:$0xff]
    %v528 = vld [vmem:[#allocation5 + $0xb48] sm:$0xff]
    %v529 = vld [vmem:[#allocation5 + $0xb50] sm:$0xff]
    %v530 = vld [vmem:[#allocation5 + $0xb58] sm:$0xff]
    %v531 = vld [vmem:[#allocation5 + $0xb60] sm:$0xff]
    %v532 = vld [vmem:[#allocation5 + $0xb68] sm:$0xff]
    %v533 = vld [vmem:[#allocation5 + $0xb70] sm:$0xff]
    %v534 = vld [vmem:[#allocation5 + $0xb78] sm:$0xff]
    %v535 = vld [vmem:[#allocation5 + $0xb80] sm:$0xff]
    %v536 = vld [vmem:[#allocation5 + $0xb88] sm:$0xff]
    %v537 = vld [vmem:[#allocation5 + $0xb90] sm:$0xff]
    %v538 = vld [vmem:[#allocation5 + $0xb98] sm:$0xff]
    %v539 = vld [vmem:[#allocation5 + $0xba0] sm:$0xff]
    %v540 = vld [vmem:[#allocation5 + $0xba8] sm:$0xff]
    %v541 = vld [vmem:[#allocation5 + $0xbb0] sm:$0xff]
    %v542 = vld [vmem:[#allocation5 + $0xbb8] sm:$0xff]
    %v543 = vld [vmem:[#allocation5 + $0xbc0] sm:$0xff]
    %v544 = vld [vmem:[#allocation5 + $0xbc8] sm:$0xff]
    %v545 = vld [vmem:[#allocation5 + $0xbd0] sm:$0xff]
    %v546 = vld [vmem:[#allocation5 + $0xbd8] sm:$0xff]
    %v547 = vld [vmem:[#allocation5 + $0xbe0] sm:$0xff]
    %v548 = vld [vmem:[#allocation5 + $0xbe8] sm:$0xff]
    %v549 = vld [vmem:[#allocation5 + $0xbf0] sm:$0xff]
    %v550 = vld [vmem:[#allocation5 + $0xbf8] sm:$0xff]
    %v551 = vld [vmem:[#allocation5 + $0xc00] sm:$0xff]
    %v552 = vld [vmem:[#allocation5 + $0xc08] sm:$0xff]
    %v553 = vld [vmem:[#allocation5 + $0xc10] sm:$0xff]
    %v554 = vld [vmem:[#allocation5 + $0xc18] sm:$0xff]
    %v555 = vld [vmem:[#allocation5 + $0xc20] sm:$0xff]
    %v556 = vld [vmem:[#allocation5 + $0xc28] sm:$0xff]
    %v557 = vld [vmem:[#allocation5 + $0xc30] sm:$0xff]
    %v558 = vld [vmem:[#allocation5 + $0xc38] sm:$0xff]
    %v559 = vld [vmem:[#allocation5 + $0xc40] sm:$0xff]
    %v560 = vld [vmem:[#allocation5 + $0xc48] sm:$0xff]
    %v561 = vld [vmem:[#allocation5 + $0xc50] sm:$0xff]
    %v562 = vld [vmem:[#allocation5 + $0xc58] sm:$0xff]
    %v563 = vld [vmem:[#allocation5 + $0xc60] sm:$0xff]
    %v564 = vld [vmem:[#allocation5 + $0xc68] sm:$0xff]
    %v565 = vld [vmem:[#allocation5 + $0xc70] sm:$0xff]
    %v566 = vld [vmem:[#allocation5 + $0xc78] sm:$0xff]
    %v567 = vld [vmem:[#allocation5 + $0xc80] sm:$0xff]
    %v568 = vld [vmem:[#allocation5 + $0xc88] sm:$0xff]
    %v569 = vld [vmem:[#allocation5 + $0xc90] sm:$0xff]
    %v570 = vld [vmem:[#allocation5 + $0xc98] sm:$0xff]
    %v571 = vld [vmem:[#allocation5 + $0xca0] sm:$0xff]
    %v572 = vld [vmem:[#allocation5 + $0xca8] sm:$0xff]
    %v573 = vld [vmem:[#allocation5 + $0xcb0] sm:$0xff]
    %v574 = vld [vmem:[#allocation5 + $0xcb8] sm:$0xff]
    %v575 = vld [vmem:[#allocation5 + $0xcc0] sm:$0xff]
    %v576 = vld [vmem:[#allocation5 + $0xcc8] sm:$0xff]
    %v577 = vld [vmem:[#allocation5 + $0xcd0] sm:$0xff]
    %v578 = vld [vmem:[#allocation5 + $0xcd8] sm:$0xff]
    %v579 = vld [vmem:[#allocation5 + $0xce0] sm:$0xff]
    %v580 = vld [vmem:[#allocation5 + $0xce8] sm:$0xff]
    %v581 = vld [vmem:[#allocation5 + $0xcf0] sm:$0xff]
    %v582 = vld [vmem:[#allocation5 + $0xcf8] sm:$0xff]
    %v583 = vld [vmem:[#allocation5 + $0xd00] sm:$0xff]
    %v584 = vld [vmem:[#allocation5 + $0xd08] sm:$0xff]
    %v585 = vld [vmem:[#allocation5 + $0xd10] sm:$0xff]
    %v586 = vld [vmem:[#allocation5 + $0xd18] sm:$0xff]
    %v587 = vld [vmem:[#allocation5 + $0xd20] sm:$0xff]
    %v588 = vld [vmem:[#allocation5 + $0xd28] sm:$0xff]
    %v589 = vld [vmem:[#allocation5 + $0xd30] sm:$0xff]
    %v590 = vld [vmem:[#allocation5 + $0xd38] sm:$0xff]
    %v591 = vld [vmem:[#allocation5 + $0xd40] sm:$0xff]
    %v592 = vld [vmem:[#allocation5 + $0xd48] sm:$0xff]
    %v593 = vld [vmem:[#allocation5 + $0xd50] sm:$0xff]
    %v594 = vld [vmem:[#allocation5 + $0xd58] sm:$0xff]
    %v595 = vld [vmem:[#allocation5 + $0xd60] sm:$0xff]
    %v596 = vld [vmem:[#allocation5 + $0xd68] sm:$0xff]
    %v597 = vld [vmem:[#allocation5 + $0xd70] sm:$0xff]
    %v598 = vld [vmem:[#allocation5 + $0xd78] sm:$0xff]
    %v599 = vld [vmem:[#allocation5 + $0xd80] sm:$0xff]
    %v600 = vld [vmem:[#allocation5 + $0xd88] sm:$0xff]
    %v601 = vld [vmem:[#allocation5 + $0xd90] sm:$0xff]
    %v602 = vld [vmem:[#allocation5 + $0xd98] sm:$0xff]
    %v603 = vld [vmem:[#allocation5 + $0xda0] sm:$0xff]
    %v604 = vld [vmem:[#allocation5 + $0xda8] sm:$0xff]
    %v605 = vld [vmem:[#allocation5 + $0xdb0] sm:$0xff]
    %v606 = vld [vmem:[#allocation5 + $0xdb8] sm:$0xff]
    %v607 = vld [vmem:[#allocation5 + $0xdc0] sm:$0xff]
    %v608 = vld [vmem:[#allocation5 + $0xdc8] sm:$0xff]
    %v609 = vld [vmem:[#allocation5 + $0xdd0] sm:$0xff]
    %v610 = vld [vmem:[#allocation5 + $0xdd8] sm:$0xff]
    %v611 = vld [vmem:[#allocation5 + $0xde0] sm:$0xff]
    %v612 = vld [vmem:[#allocation5 + $0xde8] sm:$0xff]
    %v613 = vld [vmem:[#allocation5 + $0xdf0] sm:$0xff]
    %v614 = vld [vmem:[#allocation5 + $0xdf8] sm:$0xff]
    %v615 = vld [vmem:[#allocation7] sm:$0xff]
    %v617 = vperm.slane %v615, 0
    %v618 = vperm.slane %v615, 1
    %v619 = vperm.slane %v615, 2
    %v620 = vperm.slane %v615, 3
    %v621 = vperm.slane %v615, 4
    %v622 = vperm.slane %v615, 5
    %v623 = vperm.slane %v615, 6
    %v624 = vperm.slane %v615, 7
    %v637 = vunpack.c.l.b16 %v163
    %v638 = vunpack.c.h.b16 %v163
    %v639 = vunpack.c.l.b16 %v164
    %v640 = vunpack.c.h.b16 %v164
    %v641 = vunpack.c.l.b16 %v165
    %v642 = vunpack.c.h.b16 %v165
    %v643 = vunpack.c.l.b16 %v166
    %v644 = vpack.c.b16 %v637, %v637
    %v645 = vpack.c.b16 %v638, %v638
    %v646 = vpack.c.b16 %v639, %v639
    %v647 = vpack.c.b16 %v640, %v640
    %v648 = vpack.c.b16 %v641, %v641
    %v649 = vpack.c.b16 %v642, %v642
    %v650 = vpack.c.b16 %v643, %v643
    %v1106 = vunpack.c.l.b16 %v167
    %v1107 = vunpack.c.h.b16 %v167
    %v1108 = vunpack.c.l.b16 %v168
    %v1109 = vunpack.c.h.b16 %v168
    %v1110 = vunpack.c.l.b16 %v169
    %v1111 = vunpack.c.h.b16 %v169
    %v1112 = vunpack.c.l.b16 %v170
    %v1113 = vunpack.c.h.b16 %v170
    %v1114 = vunpack.c.l.b16 %v171
    %v1115 = vunpack.c.h.b16 %v171
    %v1116 = vunpack.c.l.b16 %v172
    %v1117 = vunpack.c.h.b16 %v172
    %v1118 = vunpack.c.l.b16 %v173
    %v1119 = vunpack.c.h.b16 %v173
    %v1120 = vunpack.c.l.b16 %v174
    %v1121 = vunpack.c.h.b16 %v174
    %v1122 = vunpack.c.l.b16 %v175
    %v1123 = vunpack.c.h.b16 %v175
    %v1124 = vunpack.c.l.b16 %v176
    %v1125 = vunpack.c.h.b16 %v176
    %v1126 = vunpack.c.l.b16 %v177
    %v1127 = vunpack.c.h.b16 %v177
    %v1128 = vunpack.c.l.b16 %v178
    %v1129 = vunpack.c.h.b16 %v178
    %v1130 = vunpack.c.l.b16 %v179
    %v1131 = vunpack.c.h.b16 %v179
    %v1132 = vunpack.c.l.b16 %v180
    %v1133 = vunpack.c.h.b16 %v180
    %v1134 = vunpack.c.l.b16 %v181
    %v1135 = vunpack.c.h.b16 %v181
    %v1136 = vunpack.c.l.b16 %v182
    %v1137 = vunpack.c.h.b16 %v182
    %v1138 = vunpack.c.l.b16 %v183
    %v1139 = vunpack.c.h.b16 %v183
    %v1140 = vunpack.c.l.b16 %v184
    %v1141 = vunpack.c.h.b16 %v184
    %v1142 = vunpack.c.l.b16 %v185
    %v1143 = vunpack.c.h.b16 %v185
    %v1144 = vunpack.c.l.b16 %v186
    %v1145 = vunpack.c.h.b16 %v186
    %v1146 = vunpack.c.l.b16 %v187
    %v1147 = vunpack.c.h.b16 %v187
    %v1148 = vunpack.c.l.b16 %v188
    %v1149 = vunpack.c.h.b16 %v188
    %v1150 = vunpack.c.l.b16 %v189
    %v1151 = vunpack.c.h.b16 %v189
    %v1152 = vunpack.c.l.b16 %v190
    %v1153 = vunpack.c.h.b16 %v190
    %v1154 = vunpack.c.l.b16 %v191
    %v1155 = vunpack.c.h.b16 %v191
    %v1156 = vunpack.c.l.b16 %v192
    %v1157 = vunpack.c.h.b16 %v192
    %v1158 = vunpack.c.l.b16 %v193
    %v1159 = vunpack.c.h.b16 %v193
    %v1160 = vunpack.c.l.b16 %v194
    %v1161 = vunpack.c.h.b16 %v194
    %v1162 = vunpack.c.l.b16 %v195
    %v1163 = vunpack.c.h.b16 %v195
    %v1164 = vunpack.c.l.b16 %v196
    %v1165 = vunpack.c.h.b16 %v196
    %v1166 = vunpack.c.l.b16 %v197
    %v1167 = vunpack.c.h.b16 %v197
    %v1168 = vunpack.c.l.b16 %v198
    %v1169 = vunpack.c.h.b16 %v198
    %v1170 = vunpack.c.l.b16 %v199
    %v1171 = vunpack.c.h.b16 %v199
    %v1172 = vunpack.c.l.b16 %v200
    %v1173 = vunpack.c.h.b16 %v200
    %v1174 = vunpack.c.l.b16 %v201
    %v1175 = vunpack.c.h.b16 %v201
    %v1176 = vunpack.c.l.b16 %v202
    %v1177 = vunpack.c.h.b16 %v202
    %v1178 = vunpack.c.l.b16 %v203
    %v1179 = vunpack.c.h.b16 %v203
    %v1180 = vunpack.c.l.b16 %v204
    %v1181 = vunpack.c.h.b16 %v204
    %v1182 = vunpack.c.l.b16 %v205
    %v1183 = vunpack.c.h.b16 %v205
    %v1184 = vunpack.c.l.b16 %v206
    %v1185 = vunpack.c.h.b16 %v206
    %v1186 = vunpack.c.l.b16 %v207
    %v1187 = vunpack.c.h.b16 %v207
    %v1188 = vunpack.c.l.b16 %v208
    %v1189 = vunpack.c.h.b16 %v208
    %v1190 = vunpack.c.l.b16 %v209
    %v1191 = vunpack.c.h.b16 %v209
    %v1192 = vunpack.c.l.b16 %v210
    %v1193 = vunpack.c.h.b16 %v210
    %v1194 = vunpack.c.l.b16 %v211
    %v1195 = vunpack.c.h.b16 %v211
    %v1196 = vunpack.c.l.b16 %v212
    %v1197 = vunpack.c.h.b16 %v212
    %v1198 = vunpack.c.l.b16 %v213
    %v1199 = vunpack.c.h.b16 %v213
    %v1200 = vunpack.c.l.b16 %v214
    %v1201 = vunpack.c.h.b16 %v214
    %v1202 = vunpack.c.l.b16 %v215
    %v1203 = vunpack.c.h.b16 %v215
    %v1204 = vunpack.c.l.b16 %v216
    %v1205 = vunpack.c.h.b16 %v216
    %v1206 = vunpack.c.l.b16 %v217
    %v1207 = vunpack.c.h.b16 %v217
    %v1208 = vunpack.c.l.b16 %v218
    %v1209 = vunpack.c.h.b16 %v218
    %v1210 = vunpack.c.l.b16 %v219
    %v1211 = vunpack.c.h.b16 %v219
    %v1212 = vunpack.c.l.b16 %v220
    %v1213 = vunpack.c.h.b16 %v220
    %v1214 = vunpack.c.l.b16 %v221
    %v1215 = vunpack.c.h.b16 %v221
    %v1216 = vunpack.c.l.b16 %v222
    %v1217 = vunpack.c.h.b16 %v222
    %v1218 = vunpack.c.l.b16 %v223
    %v1219 = vunpack.c.h.b16 %v223
    %v1220 = vunpack.c.l.b16 %v224
    %v1221 = vunpack.c.h.b16 %v224
    %v1222 = vunpack.c.l.b16 %v225
    %v1223 = vunpack.c.h.b16 %v225
    %v1224 = vunpack.c.l.b16 %v226
    %v1225 = vunpack.c.h.b16 %v226
    %v1226 = vunpack.c.l.b16 %v227
    %v1227 = vunpack.c.h.b16 %v227
    %v1228 = vunpack.c.l.b16 %v228
    %v1229 = vunpack.c.h.b16 %v228
    %v1230 = vunpack.c.l.b16 %v229
    %v1231 = vunpack.c.h.b16 %v229
    %v1232 = vunpack.c.l.b16 %v230
    %v1233 = vunpack.c.h.b16 %v230
    %v1234 = vunpack.c.l.b16 %v231
    %v1235 = vunpack.c.h.b16 %v231
    %v1236 = vunpack.c.l.b16 %v232
    %v1237 = vunpack.c.h.b16 %v232
    %v1238 = vunpack.c.l.b16 %v233
    %v1239 = vunpack.c.h.b16 %v233
    %v1240 = vunpack.c.l.b16 %v234
    %v1241 = vunpack.c.h.b16 %v234
    %v1242 = vunpack.c.l.b16 %v235
    %v1243 = vunpack.c.h.b16 %v235
    %v1244 = vunpack.c.l.b16 %v236
    %v1245 = vunpack.c.h.b16 %v236
    %v1246 = vunpack.c.l.b16 %v237
    %v1247 = vunpack.c.h.b16 %v237
    %v1248 = vunpack.c.l.b16 %v238
    %v1249 = vunpack.c.h.b16 %v238
    %v1250 = vunpack.c.l.b16 %v239
    %v1251 = vunpack.c.h.b16 %v239
    %v1252 = vunpack.c.l.b16 %v240
    %v1253 = vunpack.c.h.b16 %v240
    %v1254 = vunpack.c.l.b16 %v241
    %v1255 = vunpack.c.h.b16 %v241
    %v1256 = vunpack.c.l.b16 %v242
    %v1257 = vunpack.c.h.b16 %v242
    %v1258 = vunpack.c.l.b16 %v243
    %v1259 = vunpack.c.h.b16 %v243
    %v1260 = vunpack.c.l.b16 %v244
    %v1261 = vunpack.c.h.b16 %v244
    %v1262 = vunpack.c.l.b16 %v245
    %v1263 = vunpack.c.h.b16 %v245
    %v1264 = vunpack.c.l.b16 %v246
    %v1265 = vunpack.c.h.b16 %v246
    %v1266 = vunpack.c.l.b16 %v247
    %v1267 = vunpack.c.h.b16 %v247
    %v1268 = vunpack.c.l.b16 %v248
    %v1269 = vunpack.c.h.b16 %v248
    %v1270 = vunpack.c.l.b16 %v249
    %v1271 = vunpack.c.h.b16 %v249
    %v1272 = vunpack.c.l.b16 %v250
    %v1273 = vunpack.c.h.b16 %v250
    %v1274 = vunpack.c.l.b16 %v251
    %v1275 = vunpack.c.h.b16 %v251
    %v1276 = vunpack.c.l.b16 %v252
    %v1277 = vunpack.c.h.b16 %v252
    %v1278 = vunpack.c.l.b16 %v253
    %v1279 = vunpack.c.h.b16 %v253
    %v1280 = vunpack.c.l.b16 %v254
    %v1281 = vunpack.c.h.b16 %v254
    %v1282 = vunpack.c.l.b16 %v255
    %v1283 = vunpack.c.h.b16 %v255
    %v1284 = vunpack.c.l.b16 %v256
    %v1285 = vunpack.c.h.b16 %v256
    %v1286 = vunpack.c.l.b16 %v257
    %v1287 = vunpack.c.h.b16 %v257
    %v1288 = vunpack.c.l.b16 %v258
    %v1289 = vunpack.c.h.b16 %v258
    %v1290 = vunpack.c.l.b16 %v259
    %v1291 = vunpack.c.h.b16 %v259
    %v1292 = vunpack.c.l.b16 %v260
    %v1293 = vunpack.c.h.b16 %v260
    %v1294 = vunpack.c.l.b16 %v261
    %v1295 = vunpack.c.h.b16 %v261
    %v1296 = vunpack.c.l.b16 %v262
    %v1297 = vunpack.c.h.b16 %v262
    %v1298 = vunpack.c.l.b16 %v263
    %v1299 = vunpack.c.h.b16 %v263
    %v1300 = vunpack.c.l.b16 %v264
    %v1301 = vunpack.c.h.b16 %v264
    %v1302 = vunpack.c.l.b16 %v265
    %v1303 = vunpack.c.h.b16 %v265
    %v1304 = vunpack.c.l.b16 %v266
    %v1305 = vunpack.c.h.b16 %v266
    %v1306 = vunpack.c.l.b16 %v267
    %v1307 = vunpack.c.h.b16 %v267
    %v1308 = vunpack.c.l.b16 %v268
    %v1309 = vunpack.c.h.b16 %v268
    %v1310 = vunpack.c.l.b16 %v269
    %v1311 = vunpack.c.h.b16 %v269
    %v1312 = vunpack.c.l.b16 %v270
    %v1313 = vunpack.c.h.b16 %v270
    %v1314 = vunpack.c.l.b16 %v271
    %v1315 = vunpack.c.h.b16 %v271
    %v1316 = vunpack.c.l.b16 %v272
    %v1317 = vunpack.c.h.b16 %v272
    %v1318 = vunpack.c.l.b16 %v273
    %v1319 = vunpack.c.h.b16 %v273
    %v1320 = vunpack.c.l.b16 %v274
    %v1321 = vunpack.c.h.b16 %v274
    %v1322 = vunpack.c.l.b16 %v275
    %v1323 = vunpack.c.h.b16 %v275
    %v1324 = vunpack.c.l.b16 %v276
    %v1325 = vunpack.c.h.b16 %v276
    %v1326 = vunpack.c.l.b16 %v277
    %v1327 = vunpack.c.h.b16 %v277
    %v1328 = vunpack.c.l.b16 %v278
    %v1329 = vunpack.c.h.b16 %v278
    %v1330 = vunpack.c.l.b16 %v279
    %v1331 = vunpack.c.h.b16 %v279
    %v1332 = vunpack.c.l.b16 %v280
    %v1333 = vunpack.c.h.b16 %v280
    %v1334 = vunpack.c.l.b16 %v281
    %v1335 = vunpack.c.h.b16 %v281
    %v1336 = vunpack.c.l.b16 %v282
    %v1337 = vunpack.c.h.b16 %v282
    %v1338 = vunpack.c.l.b16 %v283
    %v1339 = vunpack.c.h.b16 %v283
    %v1340 = vunpack.c.l.b16 %v284
    %v1341 = vunpack.c.h.b16 %v284
    %v1342 = vunpack.c.l.b16 %v285
    %v1343 = vunpack.c.h.b16 %v285
    %v1344 = vunpack.c.l.b16 %v286
    %v1345 = vunpack.c.h.b16 %v286
    %v1346 = vunpack.c.l.b16 %v287
    %v1347 = vunpack.c.h.b16 %v287
    %v1348 = vunpack.c.l.b16 %v288
    %v1349 = vunpack.c.h.b16 %v288
    %v1350 = vunpack.c.l.b16 %v289
    %v1351 = vunpack.c.h.b16 %v289
    %v1352 = vunpack.c.l.b16 %v290
    %v1353 = vunpack.c.h.b16 %v290
    %v1354 = vunpack.c.l.b16 %v291
    %v1355 = vunpack.c.h.b16 %v291
    %v1356 = vunpack.c.l.b16 %v292
    %v1357 = vunpack.c.h.b16 %v292
    %v1358 = vunpack.c.l.b16 %v293
    %v1359 = vunpack.c.h.b16 %v293
    %v1360 = vunpack.c.l.b16 %v294
    %v1361 = vunpack.c.h.b16 %v294
    %v1362 = vunpack.c.l.b16 %v295
    %v1363 = vunpack.c.h.b16 %v295
    %v1364 = vunpack.c.l.b16 %v296
    %v1365 = vunpack.c.h.b16 %v296
    %v1366 = vunpack.c.l.b16 %v297
    %v1367 = vunpack.c.h.b16 %v297
    %v1368 = vunpack.c.l.b16 %v298
    %v1369 = vunpack.c.h.b16 %v298
    %v1370 = vunpack.c.l.b16 %v299
    %v1371 = vunpack.c.h.b16 %v299
    %v1372 = vunpack.c.l.b16 %v300
    %v1373 = vunpack.c.h.b16 %v300
    %v1374 = vunpack.c.l.b16 %v301
    %v1375 = vunpack.c.h.b16 %v301
    %v1376 = vunpack.c.l.b16 %v302
    %v1377 = vunpack.c.h.b16 %v302
    %v1378 = vunpack.c.l.b16 %v303
    %v1379 = vunpack.c.h.b16 %v303
    %v1380 = vunpack.c.l.b16 %v304
    %v1381 = vunpack.c.h.b16 %v304
    %v1382 = vunpack.c.l.b16 %v305
    %v1383 = vunpack.c.h.b16 %v305
    %v1384 = vunpack.c.l.b16 %v306
    %v1385 = vunpack.c.h.b16 %v306
    %v1386 = vunpack.c.l.b16 %v307
    %v1387 = vunpack.c.h.b16 %v307
    %v1388 = vunpack.c.l.b16 %v308
    %v1389 = vunpack.c.h.b16 %v308
    %v1390 = vunpack.c.l.b16 %v309
    %v1391 = vunpack.c.h.b16 %v309
    %v1392 = vunpack.c.l.b16 %v310
    %v1393 = vunpack.c.h.b16 %v310
    %v1394 = vunpack.c.l.b16 %v311
    %v1395 = vunpack.c.h.b16 %v311
    %v1396 = vunpack.c.l.b16 %v312
    %v1397 = vunpack.c.h.b16 %v312
    %v1398 = vunpack.c.l.b16 %v313
    %v1399 = vunpack.c.h.b16 %v313
    %v1400 = vunpack.c.l.b16 %v314
    %v1401 = vunpack.c.h.b16 %v314
    %v1402 = vunpack.c.l.b16 %v315
    %v1403 = vunpack.c.h.b16 %v315
    %v1404 = vunpack.c.l.b16 %v316
    %v1405 = vunpack.c.h.b16 %v316
    %v1406 = vunpack.c.l.b16 %v317
    %v1407 = vunpack.c.h.b16 %v317
    %v1408 = vunpack.c.l.b16 %v318
    %v1409 = vunpack.c.h.b16 %v318
    %v1410 = vunpack.c.l.b16 %v319
    %v1411 = vunpack.c.h.b16 %v319
    %v1412 = vunpack.c.l.b16 %v320
    %v1413 = vunpack.c.h.b16 %v320
    %v1414 = vunpack.c.l.b16 %v321
    %v1415 = vunpack.c.h.b16 %v321
    %v1416 = vunpack.c.l.b16 %v322
    %v1417 = vunpack.c.h.b16 %v322
    %v1418 = vunpack.c.l.b16 %v323
    %v1419 = vunpack.c.h.b16 %v323
    %v1420 = vunpack.c.l.b16 %v324
    %v1421 = vunpack.c.h.b16 %v324
    %v1422 = vunpack.c.l.b16 %v325
    %v1423 = vunpack.c.h.b16 %v325
    %v1424 = vunpack.c.l.b16 %v326
    %v1425 = vunpack.c.h.b16 %v326
    %v1426 = vunpack.c.l.b16 %v327
    %v1427 = vunpack.c.h.b16 %v327
    %v1428 = vunpack.c.l.b16 %v328
    %v1429 = vunpack.c.h.b16 %v328
    %v1430 = vunpack.c.l.b16 %v329
    %v1431 = vunpack.c.h.b16 %v329
    %v1432 = vunpack.c.l.b16 %v330
    %v1433 = vunpack.c.h.b16 %v330
    %v1434 = vunpack.c.l.b16 %v331
    %v1435 = vunpack.c.h.b16 %v331
    %v1436 = vunpack.c.l.b16 %v332
    %v1437 = vunpack.c.h.b16 %v332
    %v1438 = vunpack.c.l.b16 %v333
    %v1439 = vunpack.c.h.b16 %v333
    %v1440 = vunpack.c.l.b16 %v334
    %v1441 = vunpack.c.h.b16 %v334
    %v1442 = vunpack.c.l.b16 %v335
    %v1443 = vunpack.c.h.b16 %v335
    %v1444 = vunpack.c.l.b16 %v336
    %v1445 = vunpack.c.h.b16 %v336
    %v1446 = vunpack.c.l.b16 %v337
    %v1447 = vunpack.c.h.b16 %v337
    %v1448 = vunpack.c.l.b16 %v338
    %v1449 = vunpack.c.h.b16 %v338
    %v1450 = vunpack.c.l.b16 %v339
    %v1451 = vunpack.c.h.b16 %v339
    %v1452 = vunpack.c.l.b16 %v340
    %v1453 = vunpack.c.h.b16 %v340
    %v1454 = vunpack.c.l.b16 %v341
    %v1455 = vunpack.c.h.b16 %v341
    %v1456 = vunpack.c.l.b16 %v342
    %v1457 = vunpack.c.h.b16 %v342
    %v1458 = vunpack.c.l.b16 %v343
    %v1459 = vunpack.c.h.b16 %v343
    %v1460 = vunpack.c.l.b16 %v344
    %v1461 = vunpack.c.h.b16 %v344
    %v1462 = vunpack.c.l.b16 %v345
    %v1463 = vunpack.c.h.b16 %v345
    %v1464 = vunpack.c.l.b16 %v346
    %v1465 = vunpack.c.h.b16 %v346
    %v1466 = vunpack.c.l.b16 %v347
    %v1467 = vunpack.c.h.b16 %v347
    %v1468 = vunpack.c.l.b16 %v348
    %v1469 = vunpack.c.h.b16 %v348
    %v1470 = vunpack.c.l.b16 %v349
    %v1471 = vunpack.c.h.b16 %v349
    %v1472 = vunpack.c.l.b16 %v350
    %v1473 = vunpack.c.h.b16 %v350
    %v1474 = vunpack.c.l.b16 %v351
    %v1475 = vunpack.c.h.b16 %v351
    %v1476 = vunpack.c.l.b16 %v352
    %v1477 = vunpack.c.h.b16 %v352
    %v1478 = vunpack.c.l.b16 %v353
    %v1479 = vunpack.c.h.b16 %v353
    %v1480 = vunpack.c.l.b16 %v354
    %v1481 = vunpack.c.h.b16 %v354
    %v1482 = vunpack.c.l.b16 %v355
    %v1483 = vunpack.c.h.b16 %v355
    %v1484 = vunpack.c.l.b16 %v356
    %v1485 = vunpack.c.h.b16 %v356
    %v1486 = vunpack.c.l.b16 %v357
    %v1487 = vunpack.c.h.b16 %v357
    %v1488 = vunpack.c.l.b16 %v358
    %v1489 = vunpack.c.h.b16 %v358
    %v1490 = vunpack.c.l.b16 %v359
    %v1491 = vunpack.c.h.b16 %v359
    %v1492 = vunpack.c.l.b16 %v360
    %v1493 = vunpack.c.h.b16 %v360
    %v1494 = vunpack.c.l.b16 %v361
    %v1495 = vunpack.c.h.b16 %v361
    %v1496 = vunpack.c.l.b16 %v362
    %v1497 = vunpack.c.h.b16 %v362
    %v1498 = vunpack.c.l.b16 %v363
    %v1499 = vunpack.c.h.b16 %v363
    %v1500 = vunpack.c.l.b16 %v364
    %v1501 = vunpack.c.h.b16 %v364
    %v1502 = vunpack.c.l.b16 %v365
    %v1503 = vunpack.c.h.b16 %v365
    %v1504 = vunpack.c.l.b16 %v366
    %v1505 = vunpack.c.h.b16 %v366
    %v1506 = vunpack.c.l.b16 %v367
    %v1507 = vunpack.c.h.b16 %v367
    %v1508 = vunpack.c.l.b16 %v368
    %v1509 = vunpack.c.h.b16 %v368
    %v1510 = vunpack.c.l.b16 %v369
    %v1511 = vunpack.c.h.b16 %v369
    %v1512 = vunpack.c.l.b16 %v370
    %v1513 = vunpack.c.h.b16 %v370
    %v1514 = vunpack.c.l.b16 %v371
    %v1515 = vunpack.c.h.b16 %v371
    %v1516 = vunpack.c.l.b16 %v372
    %v1517 = vunpack.c.h.b16 %v372
    %v1518 = vunpack.c.l.b16 %v373
    %v1519 = vunpack.c.h.b16 %v373
    %v1520 = vunpack.c.l.b16 %v374
    %v1521 = vunpack.c.h.b16 %v374
    %v1522 = vunpack.c.l.b16 %v375
    %v1523 = vunpack.c.h.b16 %v375
    %v1524 = vunpack.c.l.b16 %v376
    %v1525 = vunpack.c.h.b16 %v376
    %v1526 = vunpack.c.l.b16 %v377
    %v1527 = vunpack.c.h.b16 %v377
    %v1528 = vunpack.c.l.b16 %v378
    %v1529 = vunpack.c.h.b16 %v378
    %v1530 = vunpack.c.l.b16 %v379
    %v1531 = vunpack.c.h.b16 %v379
    %v1532 = vunpack.c.l.b16 %v380
    %v1533 = vunpack.c.h.b16 %v380
    %v1534 = vunpack.c.l.b16 %v381
    %v1535 = vunpack.c.h.b16 %v381
    %v1536 = vunpack.c.l.b16 %v382
    %v1537 = vunpack.c.h.b16 %v382
    %v1538 = vunpack.c.l.b16 %v383
    %v1539 = vunpack.c.h.b16 %v383
    %v1540 = vunpack.c.l.b16 %v384
    %v1541 = vunpack.c.h.b16 %v384
    %v1542 = vunpack.c.l.b16 %v385
    %v1543 = vunpack.c.h.b16 %v385
    %v1544 = vunpack.c.l.b16 %v386
    %v1545 = vunpack.c.h.b16 %v386
    %v1546 = vunpack.c.l.b16 %v387
    %v1547 = vunpack.c.h.b16 %v387
    %v1548 = vunpack.c.l.b16 %v388
    %v1549 = vunpack.c.h.b16 %v388
    %v1550 = vunpack.c.l.b16 %v389
    %v1551 = vunpack.c.h.b16 %v389
    %v1552 = vunpack.c.l.b16 %v390
    %v1553 = vunpack.c.h.b16 %v390
    %v1554 = vunpack.c.l.b16 %v391
    %v1555 = vunpack.c.h.b16 %v391
    %v1556 = vunpack.c.l.b16 %v392
    %v1557 = vunpack.c.h.b16 %v392
    %v1558 = vunpack.c.l.b16 %v393
    %v1559 = vunpack.c.h.b16 %v393
    %v1560 = vunpack.c.l.b16 %v394
    %v1561 = vunpack.c.h.b16 %v394
    %v1562 = vunpack.c.l.b16 %v395
    %v1563 = vunpack.c.h.b16 %v395
    %v1564 = vunpack.c.l.b16 %v396
    %v1565 = vunpack.c.h.b16 %v396
    %v1566 = vunpack.c.l.b16 %v397
    %v1567 = vunpack.c.h.b16 %v397
    %v1568 = vunpack.c.l.b16 %v398
    %v1569 = vunpack.c.h.b16 %v398
    %v1570 = vunpack.c.l.b16 %v399
    %v1571 = vunpack.c.h.b16 %v399
    %v1572 = vunpack.c.l.b16 %v400
    %v1573 = vunpack.c.h.b16 %v400
    %v1574 = vunpack.c.l.b16 %v401
    %v1575 = vunpack.c.h.b16 %v401
    %v1576 = vunpack.c.l.b16 %v402
    %v1577 = vunpack.c.h.b16 %v402
    %v1578 = vunpack.c.l.b16 %v403
    %v1579 = vunpack.c.h.b16 %v403
    %v1580 = vunpack.c.l.b16 %v404
    %v1581 = vunpack.c.h.b16 %v404
    %v1582 = vunpack.c.l.b16 %v405
    %v1583 = vunpack.c.h.b16 %v405
    %v1584 = vunpack.c.l.b16 %v406
    %v1585 = vunpack.c.h.b16 %v406
    %v1586 = vunpack.c.l.b16 %v407
    %v1587 = vunpack.c.h.b16 %v407
    %v1588 = vunpack.c.l.b16 %v408
    %v1589 = vunpack.c.h.b16 %v408
    %v1590 = vunpack.c.l.b16 %v409
    %v1591 = vunpack.c.h.b16 %v409
    %v1592 = vunpack.c.l.b16 %v410
    %v1593 = vunpack.c.h.b16 %v410
    %v1594 = vunpack.c.l.b16 %v411
    %v1595 = vunpack.c.h.b16 %v411
    %v1596 = vunpack.c.l.b16 %v412
    %v1597 = vunpack.c.h.b16 %v412
    %v1598 = vunpack.c.l.b16 %v413
    %v1599 = vunpack.c.h.b16 %v413
    %v1600 = vunpack.c.l.b16 %v414
    %v1601 = vunpack.c.h.b16 %v414
    %v1602 = vunpack.c.l.b16 %v415
    %v1603 = vunpack.c.h.b16 %v415
    %v1604 = vunpack.c.l.b16 %v416
    %v1605 = vunpack.c.h.b16 %v416
    %v1606 = vunpack.c.l.b16 %v417
    %v1607 = vunpack.c.h.b16 %v417
    %v1608 = vunpack.c.l.b16 %v418
    %v1609 = vunpack.c.h.b16 %v418
    %v1610 = vunpack.c.l.b16 %v419
    %v1611 = vunpack.c.h.b16 %v419
    %v1612 = vunpack.c.l.b16 %v420
    %v1613 = vunpack.c.h.b16 %v420
    %v1614 = vunpack.c.l.b16 %v421
    %v1615 = vunpack.c.h.b16 %v421
    %v1616 = vunpack.c.l.b16 %v422
    %v1617 = vunpack.c.h.b16 %v422
    %v1618 = vunpack.c.l.b16 %v423
    %v1619 = vunpack.c.h.b16 %v423
    %v1620 = vunpack.c.l.b16 %v424
    %v1621 = vunpack.c.h.b16 %v424
    %v1622 = vunpack.c.l.b16 %v425
    %v1623 = vunpack.c.h.b16 %v425
    %v1624 = vunpack.c.l.b16 %v426
    %v1625 = vunpack.c.h.b16 %v426
    %v1626 = vunpack.c.l.b16 %v427
    %v1627 = vunpack.c.h.b16 %v427
    %v1628 = vunpack.c.l.b16 %v428
    %v1629 = vunpack.c.h.b16 %v428
    %v1630 = vunpack.c.l.b16 %v429
    %v1631 = vunpack.c.h.b16 %v429
    %v1632 = vunpack.c.l.b16 %v430
    %v1633 = vunpack.c.h.b16 %v430
    %v1634 = vunpack.c.l.b16 %v431
    %v1635 = vunpack.c.h.b16 %v431
    %v1636 = vunpack.c.l.b16 %v432
    %v1637 = vunpack.c.h.b16 %v432
    %v1638 = vunpack.c.l.b16 %v433
    %v1639 = vunpack.c.h.b16 %v433
    %v1640 = vunpack.c.l.b16 %v434
    %v1641 = vunpack.c.h.b16 %v434
    %v1642 = vunpack.c.l.b16 %v435
    %v1643 = vunpack.c.h.b16 %v435
    %v1644 = vunpack.c.l.b16 %v436
    %v1645 = vunpack.c.h.b16 %v436
    %v1646 = vunpack.c.l.b16 %v437
    %v1647 = vunpack.c.h.b16 %v437
    %v1648 = vunpack.c.l.b16 %v438
    %v1649 = vunpack.c.h.b16 %v438
    %v1650 = vunpack.c.l.b16 %v439
    %v1651 = vunpack.c.h.b16 %v439
    %v1652 = vunpack.c.l.b16 %v440
    %v1653 = vunpack.c.h.b16 %v440
    %v1654 = vunpack.c.l.b16 %v441
    %v1655 = vunpack.c.h.b16 %v441
    %v1656 = vunpack.c.l.b16 %v442
    %v1657 = vunpack.c.h.b16 %v442
    %v1658 = vunpack.c.l.b16 %v443
    %v1659 = vunpack.c.h.b16 %v443
    %v1660 = vunpack.c.l.b16 %v444
    %v1661 = vunpack.c.h.b16 %v444
    %v1662 = vunpack.c.l.b16 %v445
    %v1663 = vunpack.c.h.b16 %v445
    %v1664 = vunpack.c.l.b16 %v446
    %v1665 = vunpack.c.h.b16 %v446
    %v1666 = vunpack.c.l.b16 %v447
    %v1667 = vunpack.c.h.b16 %v447
    %v1668 = vunpack.c.l.b16 %v448
    %v1669 = vunpack.c.h.b16 %v448
    %v1670 = vunpack.c.l.b16 %v449
    %v1671 = vunpack.c.h.b16 %v449
    %v1672 = vunpack.c.l.b16 %v450
    %v1673 = vunpack.c.h.b16 %v450
    %v1674 = vunpack.c.l.b16 %v451
    %v1675 = vunpack.c.h.b16 %v451
    %v1676 = vunpack.c.l.b16 %v452
    %v1677 = vunpack.c.h.b16 %v452
    %v1678 = vunpack.c.l.b16 %v453
    %v1679 = vunpack.c.h.b16 %v453
    %v1680 = vunpack.c.l.b16 %v454
    %v1681 = vunpack.c.h.b16 %v454
    %v1682 = vunpack.c.l.b16 %v455
    %v1683 = vunpack.c.h.b16 %v455
    %v1684 = vunpack.c.l.b16 %v456
    %v1685 = vunpack.c.h.b16 %v456
    %v1686 = vunpack.c.l.b16 %v457
    %v1687 = vunpack.c.h.b16 %v457
    %v1688 = vunpack.c.l.b16 %v458
    %v1689 = vunpack.c.h.b16 %v458
    %v1690 = vunpack.c.l.b16 %v459
    %v1691 = vunpack.c.h.b16 %v459
    %v1692 = vunpack.c.l.b16 %v460
    %v1693 = vunpack.c.h.b16 %v460
    %v1694 = vunpack.c.l.b16 %v461
    %v1695 = vunpack.c.h.b16 %v461
    %v1696 = vunpack.c.l.b16 %v462
    %v1697 = vunpack.c.h.b16 %v462
    %v1698 = vunpack.c.l.b16 %v463
    %v1699 = vunpack.c.h.b16 %v463
    %v1700 = vunpack.c.l.b16 %v464
    %v1701 = vunpack.c.h.b16 %v464
    %v1702 = vunpack.c.l.b16 %v465
    %v1703 = vunpack.c.h.b16 %v465
    %v1704 = vunpack.c.l.b16 %v466
    %v1705 = vunpack.c.h.b16 %v466
    %v1706 = vunpack.c.l.b16 %v467
    %v1707 = vunpack.c.h.b16 %v467
    %v1708 = vunpack.c.l.b16 %v468
    %v1709 = vunpack.c.h.b16 %v468
    %v1710 = vunpack.c.l.b16 %v469
    %v1711 = vunpack.c.h.b16 %v469
    %v1712 = vunpack.c.l.b16 %v470
    %v1713 = vunpack.c.h.b16 %v470
    %v1714 = vunpack.c.l.b16 %v471
    %v1715 = vunpack.c.h.b16 %v471
    %v1716 = vunpack.c.l.b16 %v472
    %v1717 = vunpack.c.h.b16 %v472
    %v1718 = vunpack.c.l.b16 %v473
    %v1719 = vunpack.c.h.b16 %v473
    %v1720 = vunpack.c.l.b16 %v474
    %v1721 = vunpack.c.h.b16 %v474
    %v1722 = vunpack.c.l.b16 %v475
    %v1723 = vunpack.c.h.b16 %v475
    %v1724 = vunpack.c.l.b16 %v476
    %v1725 = vunpack.c.h.b16 %v476
    %v1726 = vunpack.c.l.b16 %v477
    %v1727 = vunpack.c.h.b16 %v477
    %v1728 = vunpack.c.l.b16 %v478
    %v1729 = vunpack.c.h.b16 %v478
    %v1730 = vunpack.c.l.b16 %v479
    %v1731 = vunpack.c.h.b16 %v479
    %v1732 = vunpack.c.l.b16 %v480
    %v1733 = vunpack.c.h.b16 %v480
    %v1734 = vunpack.c.l.b16 %v481
    %v1735 = vunpack.c.h.b16 %v481
    %v1736 = vunpack.c.l.b16 %v482
    %v1737 = vunpack.c.h.b16 %v482
    %v1738 = vunpack.c.l.b16 %v483
    %v1739 = vunpack.c.h.b16 %v483
    %v1740 = vunpack.c.l.b16 %v484
    %v1741 = vunpack.c.h.b16 %v484
    %v1742 = vunpack.c.l.b16 %v485
    %v1743 = vunpack.c.h.b16 %v485
    %v1744 = vunpack.c.l.b16 %v486
    %v1745 = vunpack.c.h.b16 %v486
    %v1746 = vunpack.c.l.b16 %v487
    %v1747 = vunpack.c.h.b16 %v487
    %v1748 = vunpack.c.l.b16 %v488
    %v1749 = vunpack.c.h.b16 %v488
    %v1750 = vunpack.c.l.b16 %v489
    %v1751 = vunpack.c.h.b16 %v489
    %v1752 = vunpack.c.l.b16 %v490
    %v1753 = vunpack.c.h.b16 %v490
    %v1754 = vunpack.c.l.b16 %v491
    %v1755 = vunpack.c.h.b16 %v491
    %v1756 = vunpack.c.l.b16 %v492
    %v1757 = vunpack.c.h.b16 %v492
    %v1758 = vunpack.c.l.b16 %v493
    %v1759 = vunpack.c.h.b16 %v493
    %v1760 = vunpack.c.l.b16 %v494
    %v1761 = vunpack.c.h.b16 %v494
    %v1762 = vunpack.c.l.b16 %v495
    %v1763 = vunpack.c.h.b16 %v495
    %v1764 = vunpack.c.l.b16 %v496
    %v1765 = vunpack.c.h.b16 %v496
    %v1766 = vunpack.c.l.b16 %v497
    %v1767 = vunpack.c.h.b16 %v497
    %v1768 = vunpack.c.l.b16 %v498
    %v1769 = vunpack.c.h.b16 %v498
    %v1770 = vunpack.c.l.b16 %v499
    %v1771 = vunpack.c.h.b16 %v499
    %v1772 = vunpack.c.l.b16 %v500
    %v1773 = vunpack.c.h.b16 %v500
    %v1774 = vunpack.c.l.b16 %v501
    %v1775 = vunpack.c.h.b16 %v501
    %v1776 = vunpack.c.l.b16 %v502
    %v1777 = vunpack.c.h.b16 %v502
    %v1778 = vunpack.c.l.b16 %v503
    %v1779 = vunpack.c.h.b16 %v503
    %v1780 = vunpack.c.l.b16 %v504
    %v1781 = vunpack.c.h.b16 %v504
    %v1782 = vunpack.c.l.b16 %v505
    %v1783 = vunpack.c.h.b16 %v505
    %v1784 = vunpack.c.l.b16 %v506
    %v1785 = vunpack.c.h.b16 %v506
    %v1786 = vunpack.c.l.b16 %v507
    %v1787 = vunpack.c.h.b16 %v507
    %v1788 = vunpack.c.l.b16 %v508
    %v1789 = vunpack.c.h.b16 %v508
    %v1790 = vunpack.c.l.b16 %v509
    %v1791 = vunpack.c.h.b16 %v509
    %v1792 = vunpack.c.l.b16 %v510
    %v1793 = vunpack.c.h.b16 %v510
    %v1794 = vunpack.c.l.b16 %v511
    %v1795 = vunpack.c.h.b16 %v511
    %v1796 = vunpack.c.l.b16 %v512
    %v1797 = vunpack.c.h.b16 %v512
    %v1798 = vunpack.c.l.b16 %v513
    %v1799 = vunpack.c.h.b16 %v513
    %v1800 = vunpack.c.l.b16 %v514
    %v1801 = vunpack.c.h.b16 %v514
    %v1802 = vunpack.c.l.b16 %v515
    %v1803 = vunpack.c.h.b16 %v515
    %v1804 = vunpack.c.l.b16 %v516
    %v1805 = vunpack.c.h.b16 %v516
    %v1806 = vunpack.c.l.b16 %v517
    %v1807 = vunpack.c.h.b16 %v517
    %v1808 = vunpack.c.l.b16 %v518
    %v1809 = vunpack.c.h.b16 %v518
    %v1810 = vunpack.c.l.b16 %v519
    %v1811 = vunpack.c.h.b16 %v519
    %v1812 = vunpack.c.l.b16 %v520
    %v1813 = vunpack.c.h.b16 %v520
    %v1814 = vunpack.c.l.b16 %v521
    %v1815 = vunpack.c.h.b16 %v521
    %v1816 = vunpack.c.l.b16 %v522
    %v1817 = vunpack.c.h.b16 %v522
    %v1818 = vunpack.c.l.b16 %v523
    %v1819 = vunpack.c.h.b16 %v523
    %v1820 = vunpack.c.l.b16 %v524
    %v1821 = vunpack.c.h.b16 %v524
    %v1822 = vunpack.c.l.b16 %v525
    %v1823 = vunpack.c.h.b16 %v525
    %v1824 = vunpack.c.l.b16 %v526
    %v1825 = vunpack.c.h.b16 %v526
    %v1826 = vunpack.c.l.b16 %v527
    %v1827 = vunpack.c.h.b16 %v527
    %v1828 = vunpack.c.l.b16 %v528
    %v1829 = vunpack.c.h.b16 %v528
    %v1830 = vunpack.c.l.b16 %v529
    %v1831 = vunpack.c.h.b16 %v529
    %v1832 = vunpack.c.l.b16 %v530
    %v1833 = vunpack.c.h.b16 %v530
    %v1834 = vunpack.c.l.b16 %v531
    %v1835 = vunpack.c.h.b16 %v531
    %v1836 = vunpack.c.l.b16 %v532
    %v1837 = vunpack.c.h.b16 %v532
    %v1838 = vunpack.c.l.b16 %v533
    %v1839 = vunpack.c.h.b16 %v533
    %v1840 = vunpack.c.l.b16 %v534
    %v1841 = vunpack.c.h.b16 %v534
    %v1842 = vunpack.c.l.b16 %v535
    %v1843 = vunpack.c.h.b16 %v535
    %v1844 = vunpack.c.l.b16 %v536
    %v1845 = vunpack.c.h.b16 %v536
    %v1846 = vunpack.c.l.b16 %v537
    %v1847 = vunpack.c.h.b16 %v537
    %v1848 = vunpack.c.l.b16 %v538
    %v1849 = vunpack.c.h.b16 %v538
    %v1850 = vunpack.c.l.b16 %v539
    %v1851 = vunpack.c.h.b16 %v539
    %v1852 = vunpack.c.l.b16 %v540
    %v1853 = vunpack.c.h.b16 %v540
    %v1854 = vunpack.c.l.b16 %v541
    %v1855 = vunpack.c.h.b16 %v541
    %v1856 = vunpack.c.l.b16 %v542
    %v1857 = vunpack.c.h.b16 %v542
    %v1858 = vunpack.c.l.b16 %v543
    %v1859 = vunpack.c.h.b16 %v543
    %v1860 = vunpack.c.l.b16 %v544
    %v1861 = vunpack.c.h.b16 %v544
    %v1862 = vunpack.c.l.b16 %v545
    %v1863 = vunpack.c.h.b16 %v545
    %v1864 = vunpack.c.l.b16 %v546
    %v1865 = vunpack.c.h.b16 %v546
    %v1866 = vunpack.c.l.b16 %v547
    %v1867 = vunpack.c.h.b16 %v547
    %v1868 = vunpack.c.l.b16 %v548
    %v1869 = vunpack.c.h.b16 %v548
    %v1870 = vunpack.c.l.b16 %v549
    %v1871 = vunpack.c.h.b16 %v549
    %v1872 = vunpack.c.l.b16 %v550
    %v1873 = vunpack.c.h.b16 %v550
    %v1874 = vunpack.c.l.b16 %v551
    %v1875 = vunpack.c.h.b16 %v551
    %v1876 = vunpack.c.l.b16 %v552
    %v1877 = vunpack.c.h.b16 %v552
    %v1878 = vunpack.c.l.b16 %v553
    %v1879 = vunpack.c.h.b16 %v553
    %v1880 = vunpack.c.l.b16 %v554
    %v1881 = vunpack.c.h.b16 %v554
    %v1882 = vunpack.c.l.b16 %v555
    %v1883 = vunpack.c.h.b16 %v555
    %v1884 = vunpack.c.l.b16 %v556
    %v1885 = vunpack.c.h.b16 %v556
    %v1886 = vunpack.c.l.b16 %v557
    %v1887 = vunpack.c.h.b16 %v557
    %v1888 = vunpack.c.l.b16 %v558
    %v1889 = vunpack.c.h.b16 %v558
    %v1890 = vunpack.c.l.b16 %v559
    %v1891 = vunpack.c.h.b16 %v559
    %v1892 = vunpack.c.l.b16 %v560
    %v1893 = vunpack.c.h.b16 %v560
    %v1894 = vunpack.c.l.b16 %v561
    %v1895 = vunpack.c.h.b16 %v561
    %v1896 = vunpack.c.l.b16 %v562
    %v1897 = vunpack.c.h.b16 %v562
    %v1898 = vunpack.c.l.b16 %v563
    %v1899 = vunpack.c.h.b16 %v563
    %v1900 = vunpack.c.l.b16 %v564
    %v1901 = vunpack.c.h.b16 %v564
    %v1902 = vunpack.c.l.b16 %v565
    %v1903 = vunpack.c.h.b16 %v565
    %v1904 = vunpack.c.l.b16 %v566
    %v1905 = vunpack.c.h.b16 %v566
    %v1906 = vunpack.c.l.b16 %v567
    %v1907 = vunpack.c.h.b16 %v567
    %v1908 = vunpack.c.l.b16 %v568
    %v1909 = vunpack.c.h.b16 %v568
    %v1910 = vunpack.c.l.b16 %v569
    %v1911 = vunpack.c.h.b16 %v569
    %v1912 = vunpack.c.l.b16 %v570
    %v1913 = vunpack.c.h.b16 %v570
    %v1914 = vunpack.c.l.b16 %v571
    %v1915 = vunpack.c.h.b16 %v571
    %v1916 = vunpack.c.l.b16 %v572
    %v1917 = vunpack.c.h.b16 %v572
    %v1918 = vunpack.c.l.b16 %v573
    %v1919 = vunpack.c.h.b16 %v573
    %v1920 = vunpack.c.l.b16 %v574
    %v1921 = vunpack.c.h.b16 %v574
    %v1922 = vunpack.c.l.b16 %v575
    %v1923 = vunpack.c.h.b16 %v575
    %v1924 = vunpack.c.l.b16 %v576
    %v1925 = vunpack.c.h.b16 %v576
    %v1926 = vunpack.c.l.b16 %v577
    %v1927 = vunpack.c.h.b16 %v577
    %v1928 = vunpack.c.l.b16 %v578
    %v1929 = vunpack.c.h.b16 %v578
    %v1930 = vunpack.c.l.b16 %v579
    %v1931 = vunpack.c.h.b16 %v579
    %v1932 = vunpack.c.l.b16 %v580
    %v1933 = vunpack.c.h.b16 %v580
    %v1934 = vunpack.c.l.b16 %v581
    %v1935 = vunpack.c.h.b16 %v581
    %v1936 = vunpack.c.l.b16 %v582
    %v1937 = vunpack.c.h.b16 %v582
    %v1938 = vunpack.c.l.b16 %v583
    %v1939 = vunpack.c.h.b16 %v583
    %v1940 = vunpack.c.l.b16 %v584
    %v1941 = vunpack.c.h.b16 %v584
    %v1942 = vunpack.c.l.b16 %v585
    %v1943 = vunpack.c.h.b16 %v585
    %v1944 = vunpack.c.l.b16 %v586
    %v1945 = vunpack.c.h.b16 %v586
    %v1946 = vunpack.c.l.b16 %v587
    %v1947 = vunpack.c.h.b16 %v587
    %v1948 = vunpack.c.l.b16 %v588
    %v1949 = vunpack.c.h.b16 %v588
    %v1950 = vunpack.c.l.b16 %v589
    %v1951 = vunpack.c.h.b16 %v589
    %v1952 = vunpack.c.l.b16 %v590
    %v1953 = vunpack.c.h.b16 %v590
    %v1954 = vunpack.c.l.b16 %v591
    %v1955 = vunpack.c.h.b16 %v591
    %v1956 = vunpack.c.l.b16 %v592
    %v1957 = vunpack.c.h.b16 %v592
    %v1958 = vunpack.c.l.b16 %v593
    %v1959 = vunpack.c.h.b16 %v593
    %v1960 = vunpack.c.l.b16 %v594
    %v1961 = vunpack.c.h.b16 %v594
    %v1962 = vunpack.c.l.b16 %v595
    %v1963 = vunpack.c.h.b16 %v595
    %v1964 = vunpack.c.l.b16 %v596
    %v1965 = vunpack.c.h.b16 %v596
    %v1966 = vunpack.c.l.b16 %v597
    %v1967 = vunpack.c.h.b16 %v597
    %v1968 = vunpack.c.l.b16 %v598
    %v1969 = vunpack.c.h.b16 %v598
    %v1970 = vunpack.c.l.b16 %v599
    %v1971 = vunpack.c.h.b16 %v599
    %v1972 = vunpack.c.l.b16 %v600
    %v1973 = vunpack.c.h.b16 %v600
    %v1974 = vunpack.c.l.b16 %v601
    %v1975 = vunpack.c.h.b16 %v601
    %v1976 = vunpack.c.l.b16 %v602
    %v1977 = vunpack.c.h.b16 %v602
    %v1978 = vunpack.c.l.b16 %v603
    %v1979 = vunpack.c.h.b16 %v603
    %v1980 = vunpack.c.l.b16 %v604
    %v1981 = vunpack.c.h.b16 %v604
    %v1982 = vunpack.c.l.b16 %v605
    %v1983 = vunpack.c.h.b16 %v605
    %v1984 = vunpack.c.l.b16 %v606
    %v1985 = vunpack.c.h.b16 %v606
    %v1986 = vunpack.c.l.b16 %v607
    %v1987 = vunpack.c.h.b16 %v607
    %v1988 = vunpack.c.l.b16 %v608
    %v1989 = vunpack.c.h.b16 %v608
    %v1990 = vunpack.c.l.b16 %v609
    %v1991 = vunpack.c.h.b16 %v609
    %v1992 = vunpack.c.l.b16 %v610
    %v1993 = vunpack.c.h.b16 %v610
    %v1994 = vunpack.c.l.b16 %v611
    %v1995 = vunpack.c.h.b16 %v611
    %v1996 = vunpack.c.l.b16 %v612
    %v1997 = vunpack.c.h.b16 %v612
    %v1998 = vunpack.c.l.b16 %v613
    %v1999 = vunpack.c.h.b16 %v613
    %v2000 = vunpack.c.l.b16 %v614
    %v2001 = vunpack.c.h.b16 %v614
    %v2002 = vpack.c.b16 %v1114, %v1106
    %v2003 = vpack.c.b16 %v1115, %v1107
    %v2004 = vpack.c.b16 %v1116, %v1108
    %v2005 = vpack.c.b16 %v1117, %v1109
    %v2006 = vpack.c.b16 %v1118, %v1110
    %v2007 = vpack.c.b16 %v1119, %v1111
    %v2008 = vpack.c.b16 %v1120, %v1112
    %v2009 = vpack.c.b16 %v1121, %v1113
    %v2010 = vpack.c.b16 %v1130, %v1122
    %v2011 = vpack.c.b16 %v1131, %v1123
    %v2012 = vpack.c.b16 %v1132, %v1124
    %v2013 = vpack.c.b16 %v1133, %v1125
    %v2014 = vpack.c.b16 %v1134, %v1126
    %v2015 = vpack.c.b16 %v1135, %v1127
    %v2016 = vpack.c.b16 %v1136, %v1128
    %v2017 = vpack.c.b16 %v1137, %v1129
    %v2018 = vpack.c.b16 %v1146, %v1138
    %v2019 = vpack.c.b16 %v1147, %v1139
    %v2020 = vpack.c.b16 %v1148, %v1140
    %v2021 = vpack.c.b16 %v1149, %v1141
    %v2022 = vpack.c.b16 %v1150, %v1142
    %v2023 = vpack.c.b16 %v1151, %v1143
    %v2024 = vpack.c.b16 %v1152, %v1144
    %v2025 = vpack.c.b16 %v1153, %v1145
    %v2026 = vpack.c.b16 %v1162, %v1154
    %v2027 = vpack.c.b16 %v1163, %v1155
    %v2028 = vpack.c.b16 %v1164, %v1156
    %v2029 = vpack.c.b16 %v1165, %v1157
    %v2030 = vpack.c.b16 %v1166, %v1158
    %v2031 = vpack.c.b16 %v1167, %v1159
    %v2032 = vpack.c.b16 %v1168, %v1160
    %v2033 = vpack.c.b16 %v1169, %v1161
    %v2034 = vpack.c.b16 %v1178, %v1170
    %v2035 = vpack.c.b16 %v1179, %v1171
    %v2036 = vpack.c.b16 %v1180, %v1172
    %v2037 = vpack.c.b16 %v1181, %v1173
    %v2038 = vpack.c.b16 %v1182, %v1174
    %v2039 = vpack.c.b16 %v1183, %v1175
    %v2040 = vpack.c.b16 %v1184, %v1176
    %v2041 = vpack.c.b16 %v1185, %v1177
    %v2042 = vpack.c.b16 %v1194, %v1186
    %v2043 = vpack.c.b16 %v1195, %v1187
    %v2044 = vpack.c.b16 %v1196, %v1188
    %v2045 = vpack.c.b16 %v1197, %v1189
    %v2046 = vpack.c.b16 %v1198, %v1190
    %v2047 = vpack.c.b16 %v1199, %v1191
    %v2048 = vpack.c.b16 %v1200, %v1192
    %v2049 = vpack.c.b16 %v1201, %v1193
    %v2050 = vpack.c.b16 %v1210, %v1202
    %v2051 = vpack.c.b16 %v1211, %v1203
    %v2052 = vpack.c.b16 %v1212, %v1204
    %v2053 = vpack.c.b16 %v1213, %v1205
    %v2054 = vpack.c.b16 %v1214, %v1206
    %v2055 = vpack.c.b16 %v1215, %v1207
    %v2056 = vpack.c.b16 %v1216, %v1208
    %v2057 = vpack.c.b16 %v1217, %v1209
    %v2058 = vpack.c.b16 %v1226, %v1218
    %v2059 = vpack.c.b16 %v1227, %v1219
    %v2060 = vpack.c.b16 %v1228, %v1220
    %v2061 = vpack.c.b16 %v1229, %v1221
    %v2062 = vpack.c.b16 %v1230, %v1222
    %v2063 = vpack.c.b16 %v1231, %v1223
    %v2064 = vpack.c.b16 %v1232, %v1224
    %v2065 = vpack.c.b16 %v1233, %v1225
    %v2066 = vpack.c.b16 %v1242, %v1234
    %v2067 = vpack.c.b16 %v1243, %v1235
    %v2068 = vpack.c.b16 %v1244, %v1236
    %v2069 = vpack.c.b16 %v1245, %v1237
    %v2070 = vpack.c.b16 %v1246, %v1238
    %v2071 = vpack.c.b16 %v1247, %v1239
    %v2072 = vpack.c.b16 %v1248, %v1240
    %v2073 = vpack.c.b16 %v1249, %v1241
    %v2074 = vpack.c.b16 %v1258, %v1250
    %v2075 = vpack.c.b16 %v1259, %v1251
    %v2076 = vpack.c.b16 %v1260, %v1252
    %v2077 = vpack.c.b16 %v1261, %v1253
    %v2078 = vpack.c.b16 %v1262, %v1254
    %v2079 = vpack.c.b16 %v1263, %v1255
    %v2080 = vpack.c.b16 %v1264, %v1256
    %v2081 = vpack.c.b16 %v1265, %v1257
    %v2082 = vpack.c.b16 %v1274, %v1266
    %v2083 = vpack.c.b16 %v1275, %v1267
    %v2084 = vpack.c.b16 %v1276, %v1268
    %v2085 = vpack.c.b16 %v1277, %v1269
    %v2086 = vpack.c.b16 %v1278, %v1270
    %v2087 = vpack.c.b16 %v1279, %v1271
    %v2088 = vpack.c.b16 %v1280, %v1272
    %v2089 = vpack.c.b16 %v1281, %v1273
    %v2090 = vpack.c.b16 %v1290, %v1282
    %v2091 = vpack.c.b16 %v1291, %v1283
    %v2092 = vpack.c.b16 %v1292, %v1284
    %v2093 = vpack.c.b16 %v1293, %v1285
    %v2094 = vpack.c.b16 %v1294, %v1286
    %v2095 = vpack.c.b16 %v1295, %v1287
    %v2096 = vpack.c.b16 %v1296, %v1288
    %v2097 = vpack.c.b16 %v1297, %v1289
    %v2098 = vpack.c.b16 %v1306, %v1298
    %v2099 = vpack.c.b16 %v1307, %v1299
    %v2100 = vpack.c.b16 %v1308, %v1300
    %v2101 = vpack.c.b16 %v1309, %v1301
    %v2102 = vpack.c.b16 %v1310, %v1302
    %v2103 = vpack.c.b16 %v1311, %v1303
    %v2104 = vpack.c.b16 %v1312, %v1304
    %v2105 = vpack.c.b16 %v1313, %v1305
    %v2106 = vpack.c.b16 %v1322, %v1314
    %v2107 = vpack.c.b16 %v1323, %v1315
    %v2108 = vpack.c.b16 %v1324, %v1316
    %v2109 = vpack.c.b16 %v1325, %v1317
    %v2110 = vpack.c.b16 %v1326, %v1318
    %v2111 = vpack.c.b16 %v1327, %v1319
    %v2112 = vpack.c.b16 %v1328, %v1320
    %v2113 = vpack.c.b16 %v1329, %v1321
    %v2114 = vpack.c.b16 %v1338, %v1330
    %v2115 = vpack.c.b16 %v1339, %v1331
    %v2116 = vpack.c.b16 %v1340, %v1332
    %v2117 = vpack.c.b16 %v1341, %v1333
    %v2118 = vpack.c.b16 %v1342, %v1334
    %v2119 = vpack.c.b16 %v1343, %v1335
    %v2120 = vpack.c.b16 %v1344, %v1336
    %v2121 = vpack.c.b16 %v1345, %v1337
    %v2122 = vpack.c.b16 %v1354, %v1346
    %v2123 = vpack.c.b16 %v1355, %v1347
    %v2124 = vpack.c.b16 %v1356, %v1348
    %v2125 = vpack.c.b16 %v1357, %v1349
    %v2126 = vpack.c.b16 %v1358, %v1350
    %v2127 = vpack.c.b16 %v1359, %v1351
    %v2128 = vpack.c.b16 %v1360, %v1352
    %v2129 = vpack.c.b16 %v1361, %v1353
    %v2130 = vpack.c.b16 %v1370, %v1362
    %v2131 = vpack.c.b16 %v1371, %v1363
    %v2132 = vpack.c.b16 %v1372, %v1364
    %v2133 = vpack.c.b16 %v1373, %v1365
    %v2134 = vpack.c.b16 %v1374, %v1366
    %v2135 = vpack.c.b16 %v1375, %v1367
    %v2136 = vpack.c.b16 %v1376, %v1368
    %v2137 = vpack.c.b16 %v1377, %v1369
    %v2138 = vpack.c.b16 %v1386, %v1378
    %v2139 = vpack.c.b16 %v1387, %v1379
    %v2140 = vpack.c.b16 %v1388, %v1380
    %v2141 = vpack.c.b16 %v1389, %v1381
    %v2142 = vpack.c.b16 %v1390, %v1382
    %v2143 = vpack.c.b16 %v1391, %v1383
    %v2144 = vpack.c.b16 %v1392, %v1384
    %v2145 = vpack.c.b16 %v1393, %v1385
    %v2146 = vpack.c.b16 %v1402, %v1394
    %v2147 = vpack.c.b16 %v1403, %v1395
    %v2148 = vpack.c.b16 %v1404, %v1396
    %v2149 = vpack.c.b16 %v1405, %v1397
    %v2150 = vpack.c.b16 %v1406, %v1398
    %v2151 = vpack.c.b16 %v1407, %v1399
    %v2152 = vpack.c.b16 %v1408, %v1400
    %v2153 = vpack.c.b16 %v1409, %v1401
    %v2154 = vpack.c.b16 %v1418, %v1410
    %v2155 = vpack.c.b16 %v1419, %v1411
    %v2156 = vpack.c.b16 %v1420, %v1412
    %v2157 = vpack.c.b16 %v1421, %v1413
    %v2158 = vpack.c.b16 %v1422, %v1414
    %v2159 = vpack.c.b16 %v1423, %v1415
    %v2160 = vpack.c.b16 %v1424, %v1416
    %v2161 = vpack.c.b16 %v1425, %v1417
    %v2162 = vpack.c.b16 %v1434, %v1426
    %v2163 = vpack.c.b16 %v1435, %v1427
    %v2164 = vpack.c.b16 %v1436, %v1428
    %v2165 = vpack.c.b16 %v1437, %v1429
    %v2166 = vpack.c.b16 %v1438, %v1430
    %v2167 = vpack.c.b16 %v1439, %v1431
    %v2168 = vpack.c.b16 %v1440, %v1432
    %v2169 = vpack.c.b16 %v1441, %v1433
    %v2170 = vpack.c.b16 %v1450, %v1442
    %v2171 = vpack.c.b16 %v1451, %v1443
    %v2172 = vpack.c.b16 %v1452, %v1444
    %v2173 = vpack.c.b16 %v1453, %v1445
    %v2174 = vpack.c.b16 %v1454, %v1446
    %v2175 = vpack.c.b16 %v1455, %v1447
    %v2176 = vpack.c.b16 %v1456, %v1448
    %v2177 = vpack.c.b16 %v1457, %v1449
    %v2178 = vpack.c.b16 %v1466, %v1458
    %v2179 = vpack.c.b16 %v1467, %v1459
    %v2180 = vpack.c.b16 %v1468, %v1460
    %v2181 = vpack.c.b16 %v1469, %v1461
    %v2182 = vpack.c.b16 %v1470, %v1462
    %v2183 = vpack.c.b16 %v1471, %v1463
    %v2184 = vpack.c.b16 %v1472, %v1464
    %v2185 = vpack.c.b16 %v1473, %v1465
    %v2186 = vpack.c.b16 %v1482, %v1474
    %v2187 = vpack.c.b16 %v1483, %v1475
    %v2188 = vpack.c.b16 %v1484, %v1476
    %v2189 = vpack.c.b16 %v1485, %v1477
    %v2190 = vpack.c.b16 %v1486, %v1478
    %v2191 = vpack.c.b16 %v1487, %v1479
    %v2192 = vpack.c.b16 %v1488, %v1480
    %v2193 = vpack.c.b16 %v1489, %v1481
    %v2194 = vpack.c.b16 %v1498, %v1490
    %v2195 = vpack.c.b16 %v1499, %v1491
    %v2196 = vpack.c.b16 %v1500, %v1492
    %v2197 = vpack.c.b16 %v1501, %v1493
    %v2198 = vpack.c.b16 %v1502, %v1494
    %v2199 = vpack.c.b16 %v1503, %v1495
    %v2200 = vpack.c.b16 %v1504, %v1496
    %v2201 = vpack.c.b16 %v1505, %v1497
    %v2202 = vpack.c.b16 %v1514, %v1506
    %v2203 = vpack.c.b16 %v1515, %v1507
    %v2204 = vpack.c.b16 %v1516, %v1508
    %v2205 = vpack.c.b16 %v1517, %v1509
    %v2206 = vpack.c.b16 %v1518, %v1510
    %v2207 = vpack.c.b16 %v1519, %v1511
    %v2208 = vpack.c.b16 %v1520, %v1512
    %v2209 = vpack.c.b16 %v1521, %v1513
    %v2210 = vpack.c.b16 %v1530, %v1522
    %v2211 = vpack.c.b16 %v1531, %v1523
    %v2212 = vpack.c.b16 %v1532, %v1524
    %v2213 = vpack.c.b16 %v1533, %v1525
    %v2214 = vpack.c.b16 %v1534, %v1526
    %v2215 = vpack.c.b16 %v1535, %v1527
    %v2216 = vpack.c.b16 %v1536, %v1528
    %v2217 = vpack.c.b16 %v1537, %v1529
    %v2218 = vpack.c.b16 %v1546, %v1538
    %v2219 = vpack.c.b16 %v1547, %v1539
    %v2220 = vpack.c.b16 %v1548, %v1540
    %v2221 = vpack.c.b16 %v1549, %v1541
    %v2222 = vpack.c.b16 %v1550, %v1542
    %v2223 = vpack.c.b16 %v1551, %v1543
    %v2224 = vpack.c.b16 %v1552, %v1544
    %v2225 = vpack.c.b16 %v1553, %v1545
    %v2226 = vpack.c.b16 %v1562, %v1554
    %v2227 = vpack.c.b16 %v1563, %v1555
    %v2228 = vpack.c.b16 %v1564, %v1556
    %v2229 = vpack.c.b16 %v1565, %v1557
    %v2230 = vpack.c.b16 %v1566, %v1558
    %v2231 = vpack.c.b16 %v1567, %v1559
    %v2232 = vpack.c.b16 %v1568, %v1560
    %v2233 = vpack.c.b16 %v1569, %v1561
    %v2234 = vpack.c.b16 %v1578, %v1570
    %v2235 = vpack.c.b16 %v1579, %v1571
    %v2236 = vpack.c.b16 %v1580, %v1572
    %v2237 = vpack.c.b16 %v1581, %v1573
    %v2238 = vpack.c.b16 %v1582, %v1574
    %v2239 = vpack.c.b16 %v1583, %v1575
    %v2240 = vpack.c.b16 %v1584, %v1576
    %v2241 = vpack.c.b16 %v1585, %v1577
    %v2242 = vpack.c.b16 %v1594, %v1586
    %v2243 = vpack.c.b16 %v1595, %v1587
    %v2244 = vpack.c.b16 %v1596, %v1588
    %v2245 = vpack.c.b16 %v1597, %v1589
    %v2246 = vpack.c.b16 %v1598, %v1590
    %v2247 = vpack.c.b16 %v1599, %v1591
    %v2248 = vpack.c.b16 %v1600, %v1592
    %v2249 = vpack.c.b16 %v1601, %v1593
    %v2250 = vpack.c.b16 %v1610, %v1602
    %v2251 = vpack.c.b16 %v1611, %v1603
    %v2252 = vpack.c.b16 %v1612, %v1604
    %v2253 = vpack.c.b16 %v1613, %v1605
    %v2254 = vpack.c.b16 %v1614, %v1606
    %v2255 = vpack.c.b16 %v1615, %v1607
    %v2256 = vpack.c.b16 %v1616, %v1608
    %v2257 = vpack.c.b16 %v1617, %v1609
    %v2258 = vpack.c.b16 %v1626, %v1618
    %v2259 = vpack.c.b16 %v1627, %v1619
    %v2260 = vpack.c.b16 %v1628, %v1620
    %v2261 = vpack.c.b16 %v1629, %v1621
    %v2262 = vpack.c.b16 %v1630, %v1622
    %v2263 = vpack.c.b16 %v1631, %v1623
    %v2264 = vpack.c.b16 %v1632, %v1624
    %v2265 = vpack.c.b16 %v1633, %v1625
    %v2266 = vpack.c.b16 %v1642, %v1634
    %v2267 = vpack.c.b16 %v1643, %v1635
    %v2268 = vpack.c.b16 %v1644, %v1636
    %v2269 = vpack.c.b16 %v1645, %v1637
    %v2270 = vpack.c.b16 %v1646, %v1638
    %v2271 = vpack.c.b16 %v1647, %v1639
    %v2272 = vpack.c.b16 %v1648, %v1640
    %v2273 = vpack.c.b16 %v1649, %v1641
    %v2274 = vpack.c.b16 %v1658, %v1650
    %v2275 = vpack.c.b16 %v1659, %v1651
    %v2276 = vpack.c.b16 %v1660, %v1652
    %v2277 = vpack.c.b16 %v1661, %v1653
    %v2278 = vpack.c.b16 %v1662, %v1654
    %v2279 = vpack.c.b16 %v1663, %v1655
    %v2280 = vpack.c.b16 %v1664, %v1656
    %v2281 = vpack.c.b16 %v1665, %v1657
    %v2282 = vpack.c.b16 %v1674, %v1666
    %v2283 = vpack.c.b16 %v1675, %v1667
    %v2284 = vpack.c.b16 %v1676, %v1668
    %v2285 = vpack.c.b16 %v1677, %v1669
    %v2286 = vpack.c.b16 %v1678, %v1670
    %v2287 = vpack.c.b16 %v1679, %v1671
    %v2288 = vpack.c.b16 %v1680, %v1672
    %v2289 = vpack.c.b16 %v1681, %v1673
    %v2290 = vpack.c.b16 %v1690, %v1682
    %v2291 = vpack.c.b16 %v1691, %v1683
    %v2292 = vpack.c.b16 %v1692, %v1684
    %v2293 = vpack.c.b16 %v1693, %v1685
    %v2294 = vpack.c.b16 %v1694, %v1686
    %v2295 = vpack.c.b16 %v1695, %v1687
    %v2296 = vpack.c.b16 %v1696, %v1688
    %v2297 = vpack.c.b16 %v1697, %v1689
    %v2298 = vpack.c.b16 %v1706, %v1698
    %v2299 = vpack.c.b16 %v1707, %v1699
    %v2300 = vpack.c.b16 %v1708, %v1700
    %v2301 = vpack.c.b16 %v1709, %v1701
    %v2302 = vpack.c.b16 %v1710, %v1702
    %v2303 = vpack.c.b16 %v1711, %v1703
    %v2304 = vpack.c.b16 %v1712, %v1704
    %v2305 = vpack.c.b16 %v1713, %v1705
    %v2306 = vpack.c.b16 %v1722, %v1714
    %v2307 = vpack.c.b16 %v1723, %v1715
    %v2308 = vpack.c.b16 %v1724, %v1716
    %v2309 = vpack.c.b16 %v1725, %v1717
    %v2310 = vpack.c.b16 %v1726, %v1718
    %v2311 = vpack.c.b16 %v1727, %v1719
    %v2312 = vpack.c.b16 %v1728, %v1720
    %v2313 = vpack.c.b16 %v1729, %v1721
    %v2314 = vpack.c.b16 %v1738, %v1730
    %v2315 = vpack.c.b16 %v1739, %v1731
    %v2316 = vpack.c.b16 %v1740, %v1732
    %v2317 = vpack.c.b16 %v1741, %v1733
    %v2318 = vpack.c.b16 %v1742, %v1734
    %v2319 = vpack.c.b16 %v1743, %v1735
    %v2320 = vpack.c.b16 %v1744, %v1736
    %v2321 = vpack.c.b16 %v1745, %v1737
    %v2322 = vpack.c.b16 %v1754, %v1746
    %v2323 = vpack.c.b16 %v1755, %v1747
    %v2324 = vpack.c.b16 %v1756, %v1748
    %v2325 = vpack.c.b16 %v1757, %v1749
    %v2326 = vpack.c.b16 %v1758, %v1750
    %v2327 = vpack.c.b16 %v1759, %v1751
    %v2328 = vpack.c.b16 %v1760, %v1752
    %v2329 = vpack.c.b16 %v1761, %v1753
    %v2330 = vpack.c.b16 %v1770, %v1762
    %v2331 = vpack.c.b16 %v1771, %v1763
    %v2332 = vpack.c.b16 %v1772, %v1764
    %v2333 = vpack.c.b16 %v1773, %v1765
    %v2334 = vpack.c.b16 %v1774, %v1766
    %v2335 = vpack.c.b16 %v1775, %v1767
    %v2336 = vpack.c.b16 %v1776, %v1768
    %v2337 = vpack.c.b16 %v1777, %v1769
    %v2338 = vpack.c.b16 %v1786, %v1778
    %v2339 = vpack.c.b16 %v1787, %v1779
    %v2340 = vpack.c.b16 %v1788, %v1780
    %v2341 = vpack.c.b16 %v1789, %v1781
    %v2342 = vpack.c.b16 %v1790, %v1782
    %v2343 = vpack.c.b16 %v1791, %v1783
    %v2344 = vpack.c.b16 %v1792, %v1784
    %v2345 = vpack.c.b16 %v1793, %v1785
    %v2346 = vpack.c.b16 %v1802, %v1794
    %v2347 = vpack.c.b16 %v1803, %v1795
    %v2348 = vpack.c.b16 %v1804, %v1796
    %v2349 = vpack.c.b16 %v1805, %v1797
    %v2350 = vpack.c.b16 %v1806, %v1798
    %v2351 = vpack.c.b16 %v1807, %v1799
    %v2352 = vpack.c.b16 %v1808, %v1800
    %v2353 = vpack.c.b16 %v1809, %v1801
    %v2354 = vpack.c.b16 %v1818, %v1810
    %v2355 = vpack.c.b16 %v1819, %v1811
    %v2356 = vpack.c.b16 %v1820, %v1812
    %v2357 = vpack.c.b16 %v1821, %v1813
    %v2358 = vpack.c.b16 %v1822, %v1814
    %v2359 = vpack.c.b16 %v1823, %v1815
    %v2360 = vpack.c.b16 %v1824, %v1816
    %v2361 = vpack.c.b16 %v1825, %v1817
    %v2362 = vpack.c.b16 %v1834, %v1826
    %v2363 = vpack.c.b16 %v1835, %v1827
    %v2364 = vpack.c.b16 %v1836, %v1828
    %v2365 = vpack.c.b16 %v1837, %v1829
    %v2366 = vpack.c.b16 %v1838, %v1830
    %v2367 = vpack.c.b16 %v1839, %v1831
    %v2368 = vpack.c.b16 %v1840, %v1832
    %v2369 = vpack.c.b16 %v1841, %v1833
    %v2370 = vpack.c.b16 %v1850, %v1842
    %v2371 = vpack.c.b16 %v1851, %v1843
    %v2372 = vpack.c.b16 %v1852, %v1844
    %v2373 = vpack.c.b16 %v1853, %v1845
    %v2374 = vpack.c.b16 %v1854, %v1846
    %v2375 = vpack.c.b16 %v1855, %v1847
    %v2376 = vpack.c.b16 %v1856, %v1848
    %v2377 = vpack.c.b16 %v1857, %v1849
    %v2378 = vpack.c.b16 %v1866, %v1858
    %v2379 = vpack.c.b16 %v1867, %v1859
    %v2380 = vpack.c.b16 %v1868, %v1860
    %v2381 = vpack.c.b16 %v1869, %v1861
    %v2382 = vpack.c.b16 %v1870, %v1862
    %v2383 = vpack.c.b16 %v1871, %v1863
    %v2384 = vpack.c.b16 %v1872, %v1864
    %v2385 = vpack.c.b16 %v1873, %v1865
    %v2386 = vpack.c.b16 %v1882, %v1874
    %v2387 = vpack.c.b16 %v1883, %v1875
    %v2388 = vpack.c.b16 %v1884, %v1876
    %v2389 = vpack.c.b16 %v1885, %v1877
    %v2390 = vpack.c.b16 %v1886, %v1878
    %v2391 = vpack.c.b16 %v1887, %v1879
    %v2392 = vpack.c.b16 %v1888, %v1880
    %v2393 = vpack.c.b16 %v1889, %v1881
    %v2394 = vpack.c.b16 %v1898, %v1890
    %v2395 = vpack.c.b16 %v1899, %v1891
    %v2396 = vpack.c.b16 %v1900, %v1892
    %v2397 = vpack.c.b16 %v1901, %v1893
    %v2398 = vpack.c.b16 %v1902, %v1894
    %v2399 = vpack.c.b16 %v1903, %v1895
    %v2400 = vpack.c.b16 %v1904, %v1896
    %v2401 = vpack.c.b16 %v1905, %v1897
    %v2402 = vpack.c.b16 %v1914, %v1906
    %v2403 = vpack.c.b16 %v1915, %v1907
    %v2404 = vpack.c.b16 %v1916, %v1908
    %v2405 = vpack.c.b16 %v1917, %v1909
    %v2406 = vpack.c.b16 %v1918, %v1910
    %v2407 = vpack.c.b16 %v1919, %v1911
    %v2408 = vpack.c.b16 %v1920, %v1912
    %v2409 = vpack.c.b16 %v1921, %v1913
    %v2410 = vpack.c.b16 %v1930, %v1922
    %v2411 = vpack.c.b16 %v1931, %v1923
    %v2412 = vpack.c.b16 %v1932, %v1924
    %v2413 = vpack.c.b16 %v1933, %v1925
    %v2414 = vpack.c.b16 %v1934, %v1926
    %v2415 = vpack.c.b16 %v1935, %v1927
    %v2416 = vpack.c.b16 %v1936, %v1928
    %v2417 = vpack.c.b16 %v1937, %v1929
    %v2418 = vpack.c.b16 %v1946, %v1938
    %v2419 = vpack.c.b16 %v1947, %v1939
    %v2420 = vpack.c.b16 %v1948, %v1940
    %v2421 = vpack.c.b16 %v1949, %v1941
    %v2422 = vpack.c.b16 %v1950, %v1942
    %v2423 = vpack.c.b16 %v1951, %v1943
    %v2424 = vpack.c.b16 %v1952, %v1944
    %v2425 = vpack.c.b16 %v1953, %v1945
    %v2426 = vpack.c.b16 %v1962, %v1954
    %v2427 = vpack.c.b16 %v1963, %v1955
    %v2428 = vpack.c.b16 %v1964, %v1956
    %v2429 = vpack.c.b16 %v1965, %v1957
    %v2430 = vpack.c.b16 %v1966, %v1958
    %v2431 = vpack.c.b16 %v1967, %v1959
    %v2432 = vpack.c.b16 %v1968, %v1960
    %v2433 = vpack.c.b16 %v1969, %v1961
    %v2434 = vpack.c.b16 %v1978, %v1970
    %v2435 = vpack.c.b16 %v1979, %v1971
    %v2436 = vpack.c.b16 %v1980, %v1972
    %v2437 = vpack.c.b16 %v1981, %v1973
    %v2438 = vpack.c.b16 %v1982, %v1974
    %v2439 = vpack.c.b16 %v1983, %v1975
    %v2440 = vpack.c.b16 %v1984, %v1976
    %v2441 = vpack.c.b16 %v1985, %v1977
    %v2442 = vpack.c.b16 %v1994, %v1986
    %v2443 = vpack.c.b16 %v1995, %v1987
    %v2444 = vpack.c.b16 %v1996, %v1988
    %v2445 = vpack.c.b16 %v1997, %v1989
    %v2446 = vpack.c.b16 %v1998, %v1990
    %v2447 = vpack.c.b16 %v1999, %v1991
    %v2448 = vpack.c.b16 %v2000, %v1992
    %v2449 = vpack.c.b16 %v2001, %v1993
    %2898 = vmatpush.bf16.msra.mxu0 %v2058
    %2899 = vmatpush.bf16.msra.mxu0 %v2050
    %2900 = vmatpush.bf16.msra.mxu0 %v2042
    %2901 = vmatpush.bf16.msra.mxu0 %v2034
    %2902 = vmatpush.bf16.msra.mxu0 %v2026
    %2903 = vmatpush.bf16.msra.mxu0 %v2018
    %2904 = vmatpush.bf16.msra.mxu0 %v2010
    %2905 = vmatpush.bf16.msra.mxu0 %v2002
    %2906 = vmatmul.bf16.gmra.mxu0 %v644
    %v2907 = vpop.f32.mrf.mxu0
    %v2908 = vadd.f32 %v617, %v2907
    %v2909 = vpop.f32.mrf.mxu0
    %2910 = vdwg.mxu0
    %2911 = vmatpush.bf16.msra.mxu0 %v2122
    %2912 = vmatpush.bf16.msra.mxu0 %v2114
    %2913 = vmatpush.bf16.msra.mxu0 %v2106
    %2914 = vmatpush.bf16.msra.mxu0 %v2098
    %2915 = vmatpush.bf16.msra.mxu0 %v2090
    %2916 = vmatpush.bf16.msra.mxu0 %v2082
    %2917 = vmatpush.bf16.msra.mxu0 %v2074
    %2918 = vmatpush.bf16.msra.mxu0 %v2066
    %2919 = vmatmul.bf16.gmra.mxu0 %v645
    %v2920 = vpop.f32.mrf.mxu0
    %v2921 = vadd.f32 %v2908, %v2920
    %v2922 = vpop.f32.mrf.mxu0
    %2923 = vdwg.mxu0
    %2924 = vmatpush.bf16.msra.mxu0 %v2186
    %2925 = vmatpush.bf16.msra.mxu0 %v2178
    %2926 = vmatpush.bf16.msra.mxu0 %v2170
    %2927 = vmatpush.bf16.msra.mxu0 %v2162
    %2928 = vmatpush.bf16.msra.mxu0 %v2154
    %2929 = vmatpush.bf16.msra.mxu0 %v2146
    %2930 = vmatpush.bf16.msra.mxu0 %v2138
    %2931 = vmatpush.bf16.msra.mxu0 %v2130
    %2932 = vmatmul.bf16.gmra.mxu0 %v646
    %v2933 = vpop.f32.mrf.mxu0
    %v2934 = vadd.f32 %v2921, %v2933
    %v2935 = vpop.f32.mrf.mxu0
    %2936 = vdwg.mxu0
    %2937 = vmatpush.bf16.msra.mxu0 %v2250
    %2938 = vmatpush.bf16.msra.mxu0 %v2242
    %2939 = vmatpush.bf16.msra.mxu0 %v2234
    %2940 = vmatpush.bf16.msra.mxu0 %v2226
    %2941 = vmatpush.bf16.msra.mxu0 %v2218
    %2942 = vmatpush.bf16.msra.mxu0 %v2210
    %2943 = vmatpush.bf16.msra.mxu0 %v2202
    %2944 = vmatpush.bf16.msra.mxu0 %v2194
    %2945 = vmatmul.bf16.gmra.mxu0 %v647
    %v2946 = vpop.f32.mrf.mxu0
    %v2947 = vadd.f32 %v2934, %v2946
    %v2948 = vpop.f32.mrf.mxu0
    %2949 = vdwg.mxu0
    %2950 = vmatpush.bf16.msra.mxu0 %v2314
    %2951 = vmatpush.bf16.msra.mxu0 %v2306
    %2952 = vmatpush.bf16.msra.mxu0 %v2298
    %2953 = vmatpush.bf16.msra.mxu0 %v2290
    %2954 = vmatpush.bf16.msra.mxu0 %v2282
    %2955 = vmatpush.bf16.msra.mxu0 %v2274
    %2956 = vmatpush.bf16.msra.mxu0 %v2266
    %2957 = vmatpush.bf16.msra.mxu0 %v2258
    %2958 = vmatmul.bf16.gmra.mxu0 %v648
    %v2959 = vpop.f32.mrf.mxu0
    %v2960 = vadd.f32 %v2947, %v2959
    %v2961 = vpop.f32.mrf.mxu0
    %2962 = vdwg.mxu0
    %2963 = vmatpush.bf16.msra.mxu0 %v2378
    %2964 = vmatpush.bf16.msra.mxu0 %v2370
    %2965 = vmatpush.bf16.msra.mxu0 %v2362
    %2966 = vmatpush.bf16.msra.mxu0 %v2354
    %2967 = vmatpush.bf16.msra.mxu0 %v2346
    %2968 = vmatpush.bf16.msra.mxu0 %v2338
    %2969 = vmatpush.bf16.msra.mxu0 %v2330
    %2970 = vmatpush.bf16.msra.mxu0 %v2322
    %2971 = vmatmul.bf16.gmra.mxu0 %v649
    %v2972 = vpop.f32.mrf.mxu0
    %v2973 = vadd.f32 %v2960, %v2972
    %v2974 = vpop.f32.mrf.mxu0
    %2975 = vdwg.mxu0
    %2976 = vmatpush.bf16.msra.mxu0 %v2442
    %2977 = vmatpush.bf16.msra.mxu0 %v2434
    %2978 = vmatpush.bf16.msra.mxu0 %v2426
    %2979 = vmatpush.bf16.msra.mxu0 %v2418
    %2980 = vmatpush.bf16.msra.mxu0 %v2410
    %2981 = vmatpush.bf16.msra.mxu0 %v2402
    %2982 = vmatpush.bf16.msra.mxu0 %v2394
    %2983 = vmatpush.bf16.msra.mxu0 %v2386
    %2984 = vmatmul.bf16.gmra.mxu0 %v650
    %v2985 = vpop.f32.mrf.mxu0
    %v2986 = vadd.f32 %v2973, %v2985
    %v2987 = vpop.f32.mrf.mxu0
    %2988 = vdwg.mxu0
    %2989 = vmatpush.bf16.msra.mxu0 %v2059
    %2990 = vmatpush.bf16.msra.mxu0 %v2051
    %2991 = vmatpush.bf16.msra.mxu0 %v2043
    %2992 = vmatpush.bf16.msra.mxu0 %v2035
    %2993 = vmatpush.bf16.msra.mxu0 %v2027
    %2994 = vmatpush.bf16.msra.mxu0 %v2019
    %2995 = vmatpush.bf16.msra.mxu0 %v2011
    %2996 = vmatpush.bf16.msra.mxu0 %v2003
    %2997 = vmatmul.bf16.gmra.mxu0 %v644
    %v2998 = vpop.f32.mrf.mxu0
    %v2999 = vadd.f32 %v618, %v2998
    %v3000 = vpop.f32.mrf.mxu0
    %3001 = vdwg.mxu0
    %3002 = vmatpush.bf16.msra.mxu0 %v2123
    %3003 = vmatpush.bf16.msra.mxu0 %v2115
    %3004 = vmatpush.bf16.msra.mxu0 %v2107
    %3005 = vmatpush.bf16.msra.mxu0 %v2099
    %3006 = vmatpush.bf16.msra.mxu0 %v2091
    %3007 = vmatpush.bf16.msra.mxu0 %v2083
    %3008 = vmatpush.bf16.msra.mxu0 %v2075
    %3009 = vmatpush.bf16.msra.mxu0 %v2067
    %3010 = vmatmul.bf16.gmra.mxu0 %v645
    %v3011 = vpop.f32.mrf.mxu0
    %v3012 = vadd.f32 %v2999, %v3011
    %v3013 = vpop.f32.mrf.mxu0
    %3014 = vdwg.mxu0
    %3015 = vmatpush.bf16.msra.mxu0 %v2187
    %3016 = vmatpush.bf16.msra.mxu0 %v2179
    %3017 = vmatpush.bf16.msra.mxu0 %v2171
    %3018 = vmatpush.bf16.msra.mxu0 %v2163
    %3019 = vmatpush.bf16.msra.mxu0 %v2155
    %3020 = vmatpush.bf16.msra.mxu0 %v2147
    %3021 = vmatpush.bf16.msra.mxu0 %v2139
    %3022 = vmatpush.bf16.msra.mxu0 %v2131
    %3023 = vmatmul.bf16.gmra.mxu0 %v646
    %v3024 = vpop.f32.mrf.mxu0
    %v3025 = vadd.f32 %v3012, %v3024
    %v3026 = vpop.f32.mrf.mxu0
    %3027 = vdwg.mxu0
    %3028 = vmatpush.bf16.msra.mxu0 %v2251
    %3029 = vmatpush.bf16.msra.mxu0 %v2243
    %3030 = vmatpush.bf16.msra.mxu0 %v2235
    %3031 = vmatpush.bf16.msra.mxu0 %v2227
    %3032 = vmatpush.bf16.msra.mxu0 %v2219
    %3033 = vmatpush.bf16.msra.mxu0 %v2211
    %3034 = vmatpush.bf16.msra.mxu0 %v2203
    %3035 = vmatpush.bf16.msra.mxu0 %v2195
    %3036 = vmatmul.bf16.gmra.mxu0 %v647
    %v3037 = vpop.f32.mrf.mxu0
    %v3038 = vadd.f32 %v3025, %v3037
    %v3039 = vpop.f32.mrf.mxu0
    %3040 = vdwg.mxu0
    %3041 = vmatpush.bf16.msra.mxu0 %v2315
    %3042 = vmatpush.bf16.msra.mxu0 %v2307
    %3043 = vmatpush.bf16.msra.mxu0 %v2299
    %3044 = vmatpush.bf16.msra.mxu0 %v2291
    %3045 = vmatpush.bf16.msra.mxu0 %v2283
    %3046 = vmatpush.bf16.msra.mxu0 %v2275
    %3047 = vmatpush.bf16.msra.mxu0 %v2267
    %3048 = vmatpush.bf16.msra.mxu0 %v2259
    %3049 = vmatmul.bf16.gmra.mxu0 %v648
    %v3050 = vpop.f32.mrf.mxu0
    %v3051 = vadd.f32 %v3038, %v3050
    %v3052 = vpop.f32.mrf.mxu0
    %3053 = vdwg.mxu0
    %3054 = vmatpush.bf16.msra.mxu0 %v2379
    %3055 = vmatpush.bf16.msra.mxu0 %v2371
    %3056 = vmatpush.bf16.msra.mxu0 %v2363
    %3057 = vmatpush.bf16.msra.mxu0 %v2355
    %3058 = vmatpush.bf16.msra.mxu0 %v2347
    %3059 = vmatpush.bf16.msra.mxu0 %v2339
    %3060 = vmatpush.bf16.msra.mxu0 %v2331
    %3061 = vmatpush.bf16.msra.mxu0 %v2323
    %3062 = vmatmul.bf16.gmra.mxu0 %v649
    %v3063 = vpop.f32.mrf.mxu0
    %v3064 = vadd.f32 %v3051, %v3063
    %v3065 = vpop.f32.mrf.mxu0
    %3066 = vdwg.mxu0
    %3067 = vmatpush.bf16.msra.mxu0 %v2443
    %3068 = vmatpush.bf16.msra.mxu0 %v2435
    %3069 = vmatpush.bf16.msra.mxu0 %v2427
    %3070 = vmatpush.bf16.msra.mxu0 %v2419
    %3071 = vmatpush.bf16.msra.mxu0 %v2411
    %3072 = vmatpush.bf16.msra.mxu0 %v2403
    %3073 = vmatpush.bf16.msra.mxu0 %v2395
    %3074 = vmatpush.bf16.msra.mxu0 %v2387
    %3075 = vmatmul.bf16.gmra.mxu0 %v650
    %v3076 = vpop.f32.mrf.mxu0
    %v3077 = vadd.f32 %v3064, %v3076
    %v3078 = vpop.f32.mrf.mxu0
    %3079 = vdwg.mxu0
    %3080 = vmatpush.bf16.msra.mxu0 %v2060
    %3081 = vmatpush.bf16.msra.mxu0 %v2052
    %3082 = vmatpush.bf16.msra.mxu0 %v2044
    %3083 = vmatpush.bf16.msra.mxu0 %v2036
    %3084 = vmatpush.bf16.msra.mxu0 %v2028
    %3085 = vmatpush.bf16.msra.mxu0 %v2020
    %3086 = vmatpush.bf16.msra.mxu0 %v2012
    %3087 = vmatpush.bf16.msra.mxu0 %v2004
    %3088 = vmatmul.bf16.gmra.mxu0 %v644
    %v3089 = vpop.f32.mrf.mxu0
    %v3090 = vadd.f32 %v619, %v3089
    %v3091 = vpop.f32.mrf.mxu0
    %3092 = vdwg.mxu0
    %3093 = vmatpush.bf16.msra.mxu0 %v2124
    %3094 = vmatpush.bf16.msra.mxu0 %v2116
    %3095 = vmatpush.bf16.msra.mxu0 %v2108
    %3096 = vmatpush.bf16.msra.mxu0 %v2100
    %3097 = vmatpush.bf16.msra.mxu0 %v2092
    %3098 = vmatpush.bf16.msra.mxu0 %v2084
    %3099 = vmatpush.bf16.msra.mxu0 %v2076
    %3100 = vmatpush.bf16.msra.mxu0 %v2068
    %3101 = vmatmul.bf16.gmra.mxu0 %v645
    %v3102 = vpop.f32.mrf.mxu0
    %v3103 = vadd.f32 %v3090, %v3102
    %v3104 = vpop.f32.mrf.mxu0
    %3105 = vdwg.mxu0
    %3106 = vmatpush.bf16.msra.mxu0 %v2188
    %3107 = vmatpush.bf16.msra.mxu0 %v2180
    %3108 = vmatpush.bf16.msra.mxu0 %v2172
    %3109 = vmatpush.bf16.msra.mxu0 %v2164
    %3110 = vmatpush.bf16.msra.mxu0 %v2156
    %3111 = vmatpush.bf16.msra.mxu0 %v2148
    %3112 = vmatpush.bf16.msra.mxu0 %v2140
    %3113 = vmatpush.bf16.msra.mxu0 %v2132
    %3114 = vmatmul.bf16.gmra.mxu0 %v646
    %v3115 = vpop.f32.mrf.mxu0
    %v3116 = vadd.f32 %v3103, %v3115
    %v3117 = vpop.f32.mrf.mxu0
    %3118 = vdwg.mxu0
    %3119 = vmatpush.bf16.msra.mxu0 %v2252
    %3120 = vmatpush.bf16.msra.mxu0 %v2244
    %3121 = vmatpush.bf16.msra.mxu0 %v2236
    %3122 = vmatpush.bf16.msra.mxu0 %v2228
    %3123 = vmatpush.bf16.msra.mxu0 %v2220
    %3124 = vmatpush.bf16.msra.mxu0 %v2212
    %3125 = vmatpush.bf16.msra.mxu0 %v2204
    %3126 = vmatpush.bf16.msra.mxu0 %v2196
    %3127 = vmatmul.bf16.gmra.mxu0 %v647
    %v3128 = vpop.f32.mrf.mxu0
    %v3129 = vadd.f32 %v3116, %v3128
    %v3130 = vpop.f32.mrf.mxu0
    %3131 = vdwg.mxu0
    %3132 = vmatpush.bf16.msra.mxu0 %v2316
    %3133 = vmatpush.bf16.msra.mxu0 %v2308
    %3134 = vmatpush.bf16.msra.mxu0 %v2300
    %3135 = vmatpush.bf16.msra.mxu0 %v2292
    %3136 = vmatpush.bf16.msra.mxu0 %v2284
    %3137 = vmatpush.bf16.msra.mxu0 %v2276
    %3138 = vmatpush.bf16.msra.mxu0 %v2268
    %3139 = vmatpush.bf16.msra.mxu0 %v2260
    %3140 = vmatmul.bf16.gmra.mxu0 %v648
    %v3141 = vpop.f32.mrf.mxu0
    %v3142 = vadd.f32 %v3129, %v3141
    %v3143 = vpop.f32.mrf.mxu0
    %3144 = vdwg.mxu0
    %3145 = vmatpush.bf16.msra.mxu0 %v2380
    %3146 = vmatpush.bf16.msra.mxu0 %v2372
    %3147 = vmatpush.bf16.msra.mxu0 %v2364
    %3148 = vmatpush.bf16.msra.mxu0 %v2356
    %3149 = vmatpush.bf16.msra.mxu0 %v2348
    %3150 = vmatpush.bf16.msra.mxu0 %v2340
    %3151 = vmatpush.bf16.msra.mxu0 %v2332
    %3152 = vmatpush.bf16.msra.mxu0 %v2324
    %3153 = vmatmul.bf16.gmra.mxu0 %v649
    %v3154 = vpop.f32.mrf.mxu0
    %v3155 = vadd.f32 %v3142, %v3154
    %v3156 = vpop.f32.mrf.mxu0
    %3157 = vdwg.mxu0
    %3158 = vmatpush.bf16.msra.mxu0 %v2444
    %3159 = vmatpush.bf16.msra.mxu0 %v2436
    %3160 = vmatpush.bf16.msra.mxu0 %v2428
    %3161 = vmatpush.bf16.msra.mxu0 %v2420
    %3162 = vmatpush.bf16.msra.mxu0 %v2412
    %3163 = vmatpush.bf16.msra.mxu0 %v2404
    %3164 = vmatpush.bf16.msra.mxu0 %v2396
    %3165 = vmatpush.bf16.msra.mxu0 %v2388
    %3166 = vmatmul.bf16.gmra.mxu0 %v650
    %v3167 = vpop.f32.mrf.mxu0
    %v3168 = vadd.f32 %v3155, %v3167
    %v3169 = vpop.f32.mrf.mxu0
    %3170 = vdwg.mxu0
    %3171 = vmatpush.bf16.msra.mxu0 %v2061
    %3172 = vmatpush.bf16.msra.mxu0 %v2053
    %3173 = vmatpush.bf16.msra.mxu0 %v2045
    %3174 = vmatpush.bf16.msra.mxu0 %v2037
    %3175 = vmatpush.bf16.msra.mxu0 %v2029
    %3176 = vmatpush.bf16.msra.mxu0 %v2021
    %3177 = vmatpush.bf16.msra.mxu0 %v2013
    %3178 = vmatpush.bf16.msra.mxu0 %v2005
    %3179 = vmatmul.bf16.gmra.mxu0 %v644
    %v3180 = vpop.f32.mrf.mxu0
    %v3181 = vadd.f32 %v620, %v3180
    %v3182 = vpop.f32.mrf.mxu0
    %3183 = vdwg.mxu0
    %3184 = vmatpush.bf16.msra.mxu0 %v2125
    %3185 = vmatpush.bf16.msra.mxu0 %v2117
    %3186 = vmatpush.bf16.msra.mxu0 %v2109
    %3187 = vmatpush.bf16.msra.mxu0 %v2101
    %3188 = vmatpush.bf16.msra.mxu0 %v2093
    %3189 = vmatpush.bf16.msra.mxu0 %v2085
    %3190 = vmatpush.bf16.msra.mxu0 %v2077
    %3191 = vmatpush.bf16.msra.mxu0 %v2069
    %3192 = vmatmul.bf16.gmra.mxu0 %v645
    %v3193 = vpop.f32.mrf.mxu0
    %v3194 = vadd.f32 %v3181, %v3193
    %v3195 = vpop.f32.mrf.mxu0
    %3196 = vdwg.mxu0
    %3197 = vmatpush.bf16.msra.mxu0 %v2189
    %3198 = vmatpush.bf16.msra.mxu0 %v2181
    %3199 = vmatpush.bf16.msra.mxu0 %v2173
    %3200 = vmatpush.bf16.msra.mxu0 %v2165
    %3201 = vmatpush.bf16.msra.mxu0 %v2157
    %3202 = vmatpush.bf16.msra.mxu0 %v2149
    %3203 = vmatpush.bf16.msra.mxu0 %v2141
    %3204 = vmatpush.bf16.msra.mxu0 %v2133
    %3205 = vmatmul.bf16.gmra.mxu0 %v646
    %v3206 = vpop.f32.mrf.mxu0
    %v3207 = vadd.f32 %v3194, %v3206
    %v3208 = vpop.f32.mrf.mxu0
    %3209 = vdwg.mxu0
    %3210 = vmatpush.bf16.msra.mxu0 %v2253
    %3211 = vmatpush.bf16.msra.mxu0 %v2245
    %3212 = vmatpush.bf16.msra.mxu0 %v2237
    %3213 = vmatpush.bf16.msra.mxu0 %v2229
    %3214 = vmatpush.bf16.msra.mxu0 %v2221
    %3215 = vmatpush.bf16.msra.mxu0 %v2213
    %3216 = vmatpush.bf16.msra.mxu0 %v2205
    %3217 = vmatpush.bf16.msra.mxu0 %v2197
    %3218 = vmatmul.bf16.gmra.mxu0 %v647
    %v3219 = vpop.f32.mrf.mxu0
    %v3220 = vadd.f32 %v3207, %v3219
    %v3221 = vpop.f32.mrf.mxu0
    %3222 = vdwg.mxu0
    %3223 = vmatpush.bf16.msra.mxu0 %v2317
    %3224 = vmatpush.bf16.msra.mxu0 %v2309
    %3225 = vmatpush.bf16.msra.mxu0 %v2301
    %3226 = vmatpush.bf16.msra.mxu0 %v2293
    %3227 = vmatpush.bf16.msra.mxu0 %v2285
    %3228 = vmatpush.bf16.msra.mxu0 %v2277
    %3229 = vmatpush.bf16.msra.mxu0 %v2269
    %3230 = vmatpush.bf16.msra.mxu0 %v2261
    %3231 = vmatmul.bf16.gmra.mxu0 %v648
    %v3232 = vpop.f32.mrf.mxu0
    %v3233 = vadd.f32 %v3220, %v3232
    %v3234 = vpop.f32.mrf.mxu0
    %3235 = vdwg.mxu0
    %3236 = vmatpush.bf16.msra.mxu0 %v2381
    %3237 = vmatpush.bf16.msra.mxu0 %v2373
    %3238 = vmatpush.bf16.msra.mxu0 %v2365
    %3239 = vmatpush.bf16.msra.mxu0 %v2357
    %3240 = vmatpush.bf16.msra.mxu0 %v2349
    %3241 = vmatpush.bf16.msra.mxu0 %v2341
    %3242 = vmatpush.bf16.msra.mxu0 %v2333
    %3243 = vmatpush.bf16.msra.mxu0 %v2325
    %3244 = vmatmul.bf16.gmra.mxu0 %v649
    %v3245 = vpop.f32.mrf.mxu0
    %v3246 = vadd.f32 %v3233, %v3245
    %v3247 = vpop.f32.mrf.mxu0
    %3248 = vdwg.mxu0
    %3249 = vmatpush.bf16.msra.mxu0 %v2445
    %3250 = vmatpush.bf16.msra.mxu0 %v2437
    %3251 = vmatpush.bf16.msra.mxu0 %v2429
    %3252 = vmatpush.bf16.msra.mxu0 %v2421
    %3253 = vmatpush.bf16.msra.mxu0 %v2413
    %3254 = vmatpush.bf16.msra.mxu0 %v2405
    %3255 = vmatpush.bf16.msra.mxu0 %v2397
    %3256 = vmatpush.bf16.msra.mxu0 %v2389
    %3257 = vmatmul.bf16.gmra.mxu0 %v650
    %v3258 = vpop.f32.mrf.mxu0
    %v3259 = vadd.f32 %v3246, %v3258
    %v3260 = vpop.f32.mrf.mxu0
    %3261 = vdwg.mxu0
    %3262 = vmatpush.bf16.msra.mxu0 %v2062
    %3263 = vmatpush.bf16.msra.mxu0 %v2054
    %3264 = vmatpush.bf16.msra.mxu0 %v2046
    %3265 = vmatpush.bf16.msra.mxu0 %v2038
    %3266 = vmatpush.bf16.msra.mxu0 %v2030
    %3267 = vmatpush.bf16.msra.mxu0 %v2022
    %3268 = vmatpush.bf16.msra.mxu0 %v2014
    %3269 = vmatpush.bf16.msra.mxu0 %v2006
    %3270 = vmatmul.bf16.gmra.mxu0 %v644
    %v3271 = vpop.f32.mrf.mxu0
    %v3272 = vadd.f32 %v621, %v3271
    %v3273 = vpop.f32.mrf.mxu0
    %3274 = vdwg.mxu0
    %3275 = vmatpush.bf16.msra.mxu0 %v2126
    %3276 = vmatpush.bf16.msra.mxu0 %v2118
    %3277 = vmatpush.bf16.msra.mxu0 %v2110
    %3278 = vmatpush.bf16.msra.mxu0 %v2102
    %3279 = vmatpush.bf16.msra.mxu0 %v2094
    %3280 = vmatpush.bf16.msra.mxu0 %v2086
    %3281 = vmatpush.bf16.msra.mxu0 %v2078
    %3282 = vmatpush.bf16.msra.mxu0 %v2070
    %3283 = vmatmul.bf16.gmra.mxu0 %v645
    %v3284 = vpop.f32.mrf.mxu0
    %v3285 = vadd.f32 %v3272, %v3284
    %v3286 = vpop.f32.mrf.mxu0
    %3287 = vdwg.mxu0
    %3288 = vmatpush.bf16.msra.mxu0 %v2190
    %3289 = vmatpush.bf16.msra.mxu0 %v2182
    %3290 = vmatpush.bf16.msra.mxu0 %v2174
    %3291 = vmatpush.bf16.msra.mxu0 %v2166
    %3292 = vmatpush.bf16.msra.mxu0 %v2158
    %3293 = vmatpush.bf16.msra.mxu0 %v2150
    %3294 = vmatpush.bf16.msra.mxu0 %v2142
    %3295 = vmatpush.bf16.msra.mxu0 %v2134
    %3296 = vmatmul.bf16.gmra.mxu0 %v646
    %v3297 = vpop.f32.mrf.mxu0
    %v3298 = vadd.f32 %v3285, %v3297
    %v3299 = vpop.f32.mrf.mxu0
    %3300 = vdwg.mxu0
    %3301 = vmatpush.bf16.msra.mxu0 %v2254
    %3302 = vmatpush.bf16.msra.mxu0 %v2246
    %3303 = vmatpush.bf16.msra.mxu0 %v2238
    %3304 = vmatpush.bf16.msra.mxu0 %v2230
    %3305 = vmatpush.bf16.msra.mxu0 %v2222
    %3306 = vmatpush.bf16.msra.mxu0 %v2214
    %3307 = vmatpush.bf16.msra.mxu0 %v2206
    %3308 = vmatpush.bf16.msra.mxu0 %v2198
    %3309 = vmatmul.bf16.gmra.mxu0 %v647
    %v3310 = vpop.f32.mrf.mxu0
    %v3311 = vadd.f32 %v3298, %v3310
    %v3312 = vpop.f32.mrf.mxu0
    %3313 = vdwg.mxu0
    %3314 = vmatpush.bf16.msra.mxu0 %v2318
    %3315 = vmatpush.bf16.msra.mxu0 %v2310
    %3316 = vmatpush.bf16.msra.mxu0 %v2302
    %3317 = vmatpush.bf16.msra.mxu0 %v2294
    %3318 = vmatpush.bf16.msra.mxu0 %v2286
    %3319 = vmatpush.bf16.msra.mxu0 %v2278
    %3320 = vmatpush.bf16.msra.mxu0 %v2270
    %3321 = vmatpush.bf16.msra.mxu0 %v2262
    %3322 = vmatmul.bf16.gmra.mxu0 %v648
    %v3323 = vpop.f32.mrf.mxu0
    %v3324 = vadd.f32 %v3311, %v3323
    %v3325 = vpop.f32.mrf.mxu0
    %3326 = vdwg.mxu0
    %3327 = vmatpush.bf16.msra.mxu0 %v2382
    %3328 = vmatpush.bf16.msra.mxu0 %v2374
    %3329 = vmatpush.bf16.msra.mxu0 %v2366
    %3330 = vmatpush.bf16.msra.mxu0 %v2358
    %3331 = vmatpush.bf16.msra.mxu0 %v2350
    %3332 = vmatpush.bf16.msra.mxu0 %v2342
    %3333 = vmatpush.bf16.msra.mxu0 %v2334
    %3334 = vmatpush.bf16.msra.mxu0 %v2326
    %3335 = vmatmul.bf16.gmra.mxu0 %v649
    %v3336 = vpop.f32.mrf.mxu0
    %v3337 = vadd.f32 %v3324, %v3336
    %v3338 = vpop.f32.mrf.mxu0
    %3339 = vdwg.mxu0
    %3340 = vmatpush.bf16.msra.mxu0 %v2446
    %3341 = vmatpush.bf16.msra.mxu0 %v2438
    %3342 = vmatpush.bf16.msra.mxu0 %v2430
    %3343 = vmatpush.bf16.msra.mxu0 %v2422
    %3344 = vmatpush.bf16.msra.mxu0 %v2414
    %3345 = vmatpush.bf16.msra.mxu0 %v2406
    %3346 = vmatpush.bf16.msra.mxu0 %v2398
    %3347 = vmatpush.bf16.msra.mxu0 %v2390
    %3348 = vmatmul.bf16.gmra.mxu0 %v650
    %v3349 = vpop.f32.mrf.mxu0
    %v3350 = vadd.f32 %v3337, %v3349
    %v3351 = vpop.f32.mrf.mxu0
    %3352 = vdwg.mxu0
    %3353 = vmatpush.bf16.msra.mxu0 %v2063
    %3354 = vmatpush.bf16.msra.mxu0 %v2055
    %3355 = vmatpush.bf16.msra.mxu0 %v2047
    %3356 = vmatpush.bf16.msra.mxu0 %v2039
    %3357 = vmatpush.bf16.msra.mxu0 %v2031
    %3358 = vmatpush.bf16.msra.mxu0 %v2023
    %3359 = vmatpush.bf16.msra.mxu0 %v2015
    %3360 = vmatpush.bf16.msra.mxu0 %v2007
    %3361 = vmatmul.bf16.gmra.mxu0 %v644
    %v3362 = vpop.f32.mrf.mxu0
    %v3363 = vadd.f32 %v622, %v3362
    %v3364 = vpop.f32.mrf.mxu0
    %3365 = vdwg.mxu0
    %3366 = vmatpush.bf16.msra.mxu0 %v2127
    %3367 = vmatpush.bf16.msra.mxu0 %v2119
    %3368 = vmatpush.bf16.msra.mxu0 %v2111
    %3369 = vmatpush.bf16.msra.mxu0 %v2103
    %3370 = vmatpush.bf16.msra.mxu0 %v2095
    %3371 = vmatpush.bf16.msra.mxu0 %v2087
    %3372 = vmatpush.bf16.msra.mxu0 %v2079
    %3373 = vmatpush.bf16.msra.mxu0 %v2071
    %3374 = vmatmul.bf16.gmra.mxu0 %v645
    %v3375 = vpop.f32.mrf.mxu0
    %v3376 = vadd.f32 %v3363, %v3375
    %v3377 = vpop.f32.mrf.mxu0
    %3378 = vdwg.mxu0
    %3379 = vmatpush.bf16.msra.mxu0 %v2191
    %3380 = vmatpush.bf16.msra.mxu0 %v2183
    %3381 = vmatpush.bf16.msra.mxu0 %v2175
    %3382 = vmatpush.bf16.msra.mxu0 %v2167
    %3383 = vmatpush.bf16.msra.mxu0 %v2159
    %3384 = vmatpush.bf16.msra.mxu0 %v2151
    %3385 = vmatpush.bf16.msra.mxu0 %v2143
    %3386 = vmatpush.bf16.msra.mxu0 %v2135
    %3387 = vmatmul.bf16.gmra.mxu0 %v646
    %v3388 = vpop.f32.mrf.mxu0
    %v3389 = vadd.f32 %v3376, %v3388
    %v3390 = vpop.f32.mrf.mxu0
    %3391 = vdwg.mxu0
    %3392 = vmatpush.bf16.msra.mxu0 %v2255
    %3393 = vmatpush.bf16.msra.mxu0 %v2247
    %3394 = vmatpush.bf16.msra.mxu0 %v2239
    %3395 = vmatpush.bf16.msra.mxu0 %v2231
    %3396 = vmatpush.bf16.msra.mxu0 %v2223
    %3397 = vmatpush.bf16.msra.mxu0 %v2215
    %3398 = vmatpush.bf16.msra.mxu0 %v2207
    %3399 = vmatpush.bf16.msra.mxu0 %v2199
    %3400 = vmatmul.bf16.gmra.mxu0 %v647
    %v3401 = vpop.f32.mrf.mxu0
    %v3402 = vadd.f32 %v3389, %v3401
    %v3403 = vpop.f32.mrf.mxu0
    %3404 = vdwg.mxu0
    %3405 = vmatpush.bf16.msra.mxu0 %v2319
    %3406 = vmatpush.bf16.msra.mxu0 %v2311
    %3407 = vmatpush.bf16.msra.mxu0 %v2303
    %3408 = vmatpush.bf16.msra.mxu0 %v2295
    %3409 = vmatpush.bf16.msra.mxu0 %v2287
    %3410 = vmatpush.bf16.msra.mxu0 %v2279
    %3411 = vmatpush.bf16.msra.mxu0 %v2271
    %3412 = vmatpush.bf16.msra.mxu0 %v2263
    %3413 = vmatmul.bf16.gmra.mxu0 %v648
    %v3414 = vpop.f32.mrf.mxu0
    %v3415 = vadd.f32 %v3402, %v3414
    %v3416 = vpop.f32.mrf.mxu0
    %3417 = vdwg.mxu0
    %3418 = vmatpush.bf16.msra.mxu0 %v2383
    %3419 = vmatpush.bf16.msra.mxu0 %v2375
    %3420 = vmatpush.bf16.msra.mxu0 %v2367
    %3421 = vmatpush.bf16.msra.mxu0 %v2359
    %3422 = vmatpush.bf16.msra.mxu0 %v2351
    %3423 = vmatpush.bf16.msra.mxu0 %v2343
    %3424 = vmatpush.bf16.msra.mxu0 %v2335
    %3425 = vmatpush.bf16.msra.mxu0 %v2327
    %3426 = vmatmul.bf16.gmra.mxu0 %v649
    %v3427 = vpop.f32.mrf.mxu0
    %v3428 = vadd.f32 %v3415, %v3427
    %v3429 = vpop.f32.mrf.mxu0
    %3430 = vdwg.mxu0
    %3431 = vmatpush.bf16.msra.mxu0 %v2447
    %3432 = vmatpush.bf16.msra.mxu0 %v2439
    %3433 = vmatpush.bf16.msra.mxu0 %v2431
    %3434 = vmatpush.bf16.msra.mxu0 %v2423
    %3435 = vmatpush.bf16.msra.mxu0 %v2415
    %3436 = vmatpush.bf16.msra.mxu0 %v2407
    %3437 = vmatpush.bf16.msra.mxu0 %v2399
    %3438 = vmatpush.bf16.msra.mxu0 %v2391
    %3439 = vmatmul.bf16.gmra.mxu0 %v650
    %v3440 = vpop.f32.mrf.mxu0
    %v3441 = vadd.f32 %v3428, %v3440
    %v3442 = vpop.f32.mrf.mxu0
    %3443 = vdwg.mxu0
    %3444 = vmatpush.bf16.msra.mxu0 %v2064
    %3445 = vmatpush.bf16.msra.mxu0 %v2056
    %3446 = vmatpush.bf16.msra.mxu0 %v2048
    %3447 = vmatpush.bf16.msra.mxu0 %v2040
    %3448 = vmatpush.bf16.msra.mxu0 %v2032
    %3449 = vmatpush.bf16.msra.mxu0 %v2024
    %3450 = vmatpush.bf16.msra.mxu0 %v2016
    %3451 = vmatpush.bf16.msra.mxu0 %v2008
    %3452 = vmatmul.bf16.gmra.mxu0 %v644
    %v3453 = vpop.f32.mrf.mxu0
    %v3454 = vadd.f32 %v623, %v3453
    %v3455 = vpop.f32.mrf.mxu0
    %3456 = vdwg.mxu0
    %3457 = vmatpush.bf16.msra.mxu0 %v2128
    %3458 = vmatpush.bf16.msra.mxu0 %v2120
    %3459 = vmatpush.bf16.msra.mxu0 %v2112
    %3460 = vmatpush.bf16.msra.mxu0 %v2104
    %3461 = vmatpush.bf16.msra.mxu0 %v2096
    %3462 = vmatpush.bf16.msra.mxu0 %v2088
    %3463 = vmatpush.bf16.msra.mxu0 %v2080
    %3464 = vmatpush.bf16.msra.mxu0 %v2072
    %3465 = vmatmul.bf16.gmra.mxu0 %v645
    %v3466 = vpop.f32.mrf.mxu0
    %v3467 = vadd.f32 %v3454, %v3466
    %v3468 = vpop.f32.mrf.mxu0
    %3469 = vdwg.mxu0
    %3470 = vmatpush.bf16.msra.mxu0 %v2192
    %3471 = vmatpush.bf16.msra.mxu0 %v2184
    %3472 = vmatpush.bf16.msra.mxu0 %v2176
    %3473 = vmatpush.bf16.msra.mxu0 %v2168
    %3474 = vmatpush.bf16.msra.mxu0 %v2160
    %3475 = vmatpush.bf16.msra.mxu0 %v2152
    %3476 = vmatpush.bf16.msra.mxu0 %v2144
    %3477 = vmatpush.bf16.msra.mxu0 %v2136
    %3478 = vmatmul.bf16.gmra.mxu0 %v646
    %v3479 = vpop.f32.mrf.mxu0
    %v3480 = vadd.f32 %v3467, %v3479
    %v3481 = vpop.f32.mrf.mxu0
    %3482 = vdwg.mxu0
    %3483 = vmatpush.bf16.msra.mxu0 %v2256
    %3484 = vmatpush.bf16.msra.mxu0 %v2248
    %3485 = vmatpush.bf16.msra.mxu0 %v2240
    %3486 = vmatpush.bf16.msra.mxu0 %v2232
    %3487 = vmatpush.bf16.msra.mxu0 %v2224
    %3488 = vmatpush.bf16.msra.mxu0 %v2216
    %3489 = vmatpush.bf16.msra.mxu0 %v2208
    %3490 = vmatpush.bf16.msra.mxu0 %v2200
    %3491 = vmatmul.bf16.gmra.mxu0 %v647
    %v3492 = vpop.f32.mrf.mxu0
    %v3493 = vadd.f32 %v3480, %v3492
    %v3494 = vpop.f32.mrf.mxu0
    %3495 = vdwg.mxu0
    %3496 = vmatpush.bf16.msra.mxu0 %v2320
    %3497 = vmatpush.bf16.msra.mxu0 %v2312
    %3498 = vmatpush.bf16.msra.mxu0 %v2304
    %3499 = vmatpush.bf16.msra.mxu0 %v2296
    %3500 = vmatpush.bf16.msra.mxu0 %v2288
    %3501 = vmatpush.bf16.msra.mxu0 %v2280
    %3502 = vmatpush.bf16.msra.mxu0 %v2272
    %3503 = vmatpush.bf16.msra.mxu0 %v2264
    %3504 = vmatmul.bf16.gmra.mxu0 %v648
    %v3505 = vpop.f32.mrf.mxu0
    %v3506 = vadd.f32 %v3493, %v3505
    %v3507 = vpop.f32.mrf.mxu0
    %3508 = vdwg.mxu0
    %3509 = vmatpush.bf16.msra.mxu0 %v2384
    %3510 = vmatpush.bf16.msra.mxu0 %v2376
    %3511 = vmatpush.bf16.msra.mxu0 %v2368
    %3512 = vmatpush.bf16.msra.mxu0 %v2360
    %3513 = vmatpush.bf16.msra.mxu0 %v2352
    %3514 = vmatpush.bf16.msra.mxu0 %v2344
    %3515 = vmatpush.bf16.msra.mxu0 %v2336
    %3516 = vmatpush.bf16.msra.mxu0 %v2328
    %3517 = vmatmul.bf16.gmra.mxu0 %v649
    %v3518 = vpop.f32.mrf.mxu0
    %v3519 = vadd.f32 %v3506, %v3518
    %v3520 = vpop.f32.mrf.mxu0
    %3521 = vdwg.mxu0
    %3522 = vmatpush.bf16.msra.mxu0 %v2448
    %3523 = vmatpush.bf16.msra.mxu0 %v2440
    %3524 = vmatpush.bf16.msra.mxu0 %v2432
    %3525 = vmatpush.bf16.msra.mxu0 %v2424
    %3526 = vmatpush.bf16.msra.mxu0 %v2416
    %3527 = vmatpush.bf16.msra.mxu0 %v2408
    %3528 = vmatpush.bf16.msra.mxu0 %v2400
    %3529 = vmatpush.bf16.msra.mxu0 %v2392
    %3530 = vmatmul.bf16.gmra.mxu0 %v650
    %v3531 = vpop.f32.mrf.mxu0
    %v3532 = vadd.f32 %v3519, %v3531
    %v3533 = vpop.f32.mrf.mxu0
    %3534 = vdwg.mxu0
    %3535 = vmatpush.bf16.msra.mxu0 %v2065
    %3536 = vmatpush.bf16.msra.mxu0 %v2057
    %3537 = vmatpush.bf16.msra.mxu0 %v2049
    %3538 = vmatpush.bf16.msra.mxu0 %v2041
    %3539 = vmatpush.bf16.msra.mxu0 %v2033
    %3540 = vmatpush.bf16.msra.mxu0 %v2025
    %3541 = vmatpush.bf16.msra.mxu0 %v2017
    %3542 = vmatpush.bf16.msra.mxu0 %v2009
    %3543 = vmatmul.bf16.gmra.mxu0 %v644
    %v3544 = vpop.f32.mrf.mxu0
    %v3545 = vadd.f32 %v624, %v3544
    %v3546 = vpop.f32.mrf.mxu0
    %3547 = vdwg.mxu0
    %3548 = vmatpush.bf16.msra.mxu0 %v2129
    %3549 = vmatpush.bf16.msra.mxu0 %v2121
    %3550 = vmatpush.bf16.msra.mxu0 %v2113
    %3551 = vmatpush.bf16.msra.mxu0 %v2105
    %3552 = vmatpush.bf16.msra.mxu0 %v2097
    %3553 = vmatpush.bf16.msra.mxu0 %v2089
    %3554 = vmatpush.bf16.msra.mxu0 %v2081
    %3555 = vmatpush.bf16.msra.mxu0 %v2073
    %3556 = vmatmul.bf16.gmra.mxu0 %v645
    %v3557 = vpop.f32.mrf.mxu0
    %v3558 = vadd.f32 %v3545, %v3557
    %v3559 = vpop.f32.mrf.mxu0
    %3560 = vdwg.mxu0
    %3561 = vmatpush.bf16.msra.mxu0 %v2193
    %3562 = vmatpush.bf16.msra.mxu0 %v2185
    %3563 = vmatpush.bf16.msra.mxu0 %v2177
    %3564 = vmatpush.bf16.msra.mxu0 %v2169
    %3565 = vmatpush.bf16.msra.mxu0 %v2161
    %3566 = vmatpush.bf16.msra.mxu0 %v2153
    %3567 = vmatpush.bf16.msra.mxu0 %v2145
    %3568 = vmatpush.bf16.msra.mxu0 %v2137
    %3569 = vmatmul.bf16.gmra.mxu0 %v646
    %v3570 = vpop.f32.mrf.mxu0
    %v3571 = vadd.f32 %v3558, %v3570
    %v3572 = vpop.f32.mrf.mxu0
    %3573 = vdwg.mxu0
    %3574 = vmatpush.bf16.msra.mxu0 %v2257
    %3575 = vmatpush.bf16.msra.mxu0 %v2249
    %3576 = vmatpush.bf16.msra.mxu0 %v2241
    %3577 = vmatpush.bf16.msra.mxu0 %v2233
    %3578 = vmatpush.bf16.msra.mxu0 %v2225
    %3579 = vmatpush.bf16.msra.mxu0 %v2217
    %3580 = vmatpush.bf16.msra.mxu0 %v2209
    %3581 = vmatpush.bf16.msra.mxu0 %v2201
    %3582 = vmatmul.bf16.gmra.mxu0 %v647
    %v3583 = vpop.f32.mrf.mxu0
    %v3584 = vadd.f32 %v3571, %v3583
    %v3585 = vpop.f32.mrf.mxu0
    %3586 = vdwg.mxu0
    %3587 = vmatpush.bf16.msra.mxu0 %v2321
    %3588 = vmatpush.bf16.msra.mxu0 %v2313
    %3589 = vmatpush.bf16.msra.mxu0 %v2305
    %3590 = vmatpush.bf16.msra.mxu0 %v2297
    %3591 = vmatpush.bf16.msra.mxu0 %v2289
    %3592 = vmatpush.bf16.msra.mxu0 %v2281
    %3593 = vmatpush.bf16.msra.mxu0 %v2273
    %3594 = vmatpush.bf16.msra.mxu0 %v2265
    %3595 = vmatmul.bf16.gmra.mxu0 %v648
    %v3596 = vpop.f32.mrf.mxu0
    %v3597 = vadd.f32 %v3584, %v3596
    %v3598 = vpop.f32.mrf.mxu0
    %3599 = vdwg.mxu0
    %3600 = vmatpush.bf16.msra.mxu0 %v2385
    %3601 = vmatpush.bf16.msra.mxu0 %v2377
    %3602 = vmatpush.bf16.msra.mxu0 %v2369
    %3603 = vmatpush.bf16.msra.mxu0 %v2361
    %3604 = vmatpush.bf16.msra.mxu0 %v2353
    %3605 = vmatpush.bf16.msra.mxu0 %v2345
    %3606 = vmatpush.bf16.msra.mxu0 %v2337
    %3607 = vmatpush.bf16.msra.mxu0 %v2329
    %3608 = vmatmul.bf16.gmra.mxu0 %v649
    %v3609 = vpop.f32.mrf.mxu0
    %v3610 = vadd.f32 %v3597, %v3609
    %v3611 = vpop.f32.mrf.mxu0
    %3612 = vdwg.mxu0
    %3613 = vmatpush.bf16.msra.mxu0 %v2449
    %3614 = vmatpush.bf16.msra.mxu0 %v2441
    %3615 = vmatpush.bf16.msra.mxu0 %v2433
    %3616 = vmatpush.bf16.msra.mxu0 %v2425
    %3617 = vmatpush.bf16.msra.mxu0 %v2417
    %3618 = vmatpush.bf16.msra.mxu0 %v2409
    %3619 = vmatpush.bf16.msra.mxu0 %v2401
    %3620 = vmatpush.bf16.msra.mxu0 %v2393
    %3621 = vmatmul.bf16.gmra.mxu0 %v650
    %v3622 = vpop.f32.mrf.mxu0
    %v3623 = vadd.f32 %v3610, %v3622
    %v3624 = vpop.f32.mrf.mxu0
    %3625 = vdwg.mxu0
    %v3626 = vmax.f32 %v2986, 0.0
    %v3627 = vmax.f32 %v3077, 0.0
    %v3628 = vmax.f32 %v3168, 0.0
    %v3629 = vmax.f32 %v3259, 0.0
    %v3630 = vmax.f32 %v3350, 0.0
    %v3631 = vmax.f32 %v3441, 0.0
    %v3632 = vmax.f32 %v3532, 0.0
    %v3633 = vmax.f32 %v3623, 0.0
    %v3634 = vpack.c.bf16 %v3626, %v3626
    %v3635 = vpack.c.bf16 %v3627, %v3627
    %v3636 = vpack.c.bf16 %v3628, %v3628
    %v3637 = vpack.c.bf16 %v3629, %v3629
    %v3638 = vpack.c.bf16 %v3630, %v3630
    %v3639 = vpack.c.bf16 %v3631, %v3631
    %v3640 = vpack.c.bf16 %v3632, %v3632
    %v3641 = vpack.c.bf16 %v3633, %v3633
    %v3642 = vld [vmem:[#allocation8] sm:$0xff]
    %v3643 = vld [vmem:[#allocation8 + $0x8] sm:$0xff]
    %v3644 = vld [vmem:[#allocation8 + $0x10] sm:$0xff]
    %v3645 = vld [vmem:[#allocation8 + $0x18] sm:$0xff]
    %v3646 = vld [vmem:[#allocation8 + $0x20] sm:$0xff]
    %v3647 = vld [vmem:[#allocation8 + $0x28] sm:$0xff]
    %v3648 = vld [vmem:[#allocation8 + $0x30] sm:$0xff]
    %v3649 = vld [vmem:[#allocation8 + $0x38] sm:$0xff]
    %v3650 = vld [vmem:[#allocation8 + $0x40] sm:$0xff]
    %v3651 = vld [vmem:[#allocation8 + $0x48] sm:$0xff]
    %v3652 = vld [vmem:[#allocation8 + $0x50] sm:$0xff]
    %v3653 = vld [vmem:[#allocation8 + $0x58] sm:$0xff]
    %v3654 = vld [vmem:[#allocation8 + $0x60] sm:$0xff]
    %v3655 = vld [vmem:[#allocation8 + $0x68] sm:$0xff]
    %v3656 = vld [vmem:[#allocation8 + $0x70] sm:$0xff]
    %v3657 = vld [vmem:[#allocation8 + $0x78] sm:$0xff]
    %v3658 = vld [vmem:[#allocation8 + $0x80] sm:$0xff]
    %v3659 = vld [vmem:[#allocation8 + $0x88] sm:$0xff]
    %v3660 = vld [vmem:[#allocation8 + $0x90] sm:$0xff]
    %v3661 = vld [vmem:[#allocation8 + $0x98] sm:$0xff]
    %v3662 = vld [vmem:[#allocation8 + $0xa0] sm:$0xff]
    %v3663 = vld [vmem:[#allocation8 + $0xa8] sm:$0xff]
    %v3664 = vld [vmem:[#allocation8 + $0xb0] sm:$0xff]
    %v3665 = vld [vmem:[#allocation8 + $0xb8] sm:$0xff]
    %v3666 = vld [vmem:[#allocation8 + $0xc0] sm:$0xff]
    %v3667 = vld [vmem:[#allocation8 + $0xc8] sm:$0xff]
    %v3668 = vld [vmem:[#allocation8 + $0xd0] sm:$0xff]
    %v3669 = vld [vmem:[#allocation8 + $0xd8] sm:$0xff]
    %v3670 = vld [vmem:[#allocation8 + $0xe0] sm:$0xff]
    %v3671 = vld [vmem:[#allocation8 + $0xe8] sm:$0xff]
    %v3672 = vld [vmem:[#allocation8 + $0xf0] sm:$0xff]
    %v3673 = vld [vmem:[#allocation8 + $0xf8] sm:$0xff]
    %v3674 = vld [vmem:[#allocation8 + $0x100] sm:$0xff]
    %v3675 = vld [vmem:[#allocation8 + $0x108] sm:$0xff]
    %v3676 = vld [vmem:[#allocation8 + $0x110] sm:$0xff]
    %v3677 = vld [vmem:[#allocation8 + $0x118] sm:$0xff]
    %v3678 = vld [vmem:[#allocation8 + $0x120] sm:$0xff]
    %v3679 = vld [vmem:[#allocation8 + $0x128] sm:$0xff]
    %v3680 = vld [vmem:[#allocation8 + $0x130] sm:$0xff]
    %v3681 = vld [vmem:[#allocation8 + $0x138] sm:$0xff]
    %v3682 = vld [vmem:[#allocation8 + $0x140] sm:$0xff]
    %v3683 = vld [vmem:[#allocation8 + $0x148] sm:$0xff]
    %v3684 = vld [vmem:[#allocation8 + $0x150] sm:$0xff]
    %v3685 = vld [vmem:[#allocation8 + $0x158] sm:$0xff]
    %v3686 = vld [vmem:[#allocation8 + $0x160] sm:$0xff]
    %v3687 = vld [vmem:[#allocation8 + $0x168] sm:$0xff]
    %v3688 = vld [vmem:[#allocation8 + $0x170] sm:$0xff]
    %v3689 = vld [vmem:[#allocation8 + $0x178] sm:$0xff]
    %v3690 = vld [vmem:[#allocation8 + $0x180] sm:$0xff]
    %v3691 = vld [vmem:[#allocation8 + $0x188] sm:$0xff]
    %v3692 = vld [vmem:[#allocation8 + $0x190] sm:$0xff]
    %v3693 = vld [vmem:[#allocation8 + $0x198] sm:$0xff]
    %v3694 = vld [vmem:[#allocation8 + $0x1a0] sm:$0xff]
    %v3695 = vld [vmem:[#allocation8 + $0x1a8] sm:$0xff]
    %v3696 = vld [vmem:[#allocation8 + $0x1b0] sm:$0xff]
    %v3697 = vld [vmem:[#allocation8 + $0x1b8] sm:$0xff]
    %v3698 = vld [vmem:[#allocation8 + $0x1c0] sm:$0xff]
    %v3699 = vld [vmem:[#allocation8 + $0x1c8] sm:$0xff]
    %v3700 = vld [vmem:[#allocation8 + $0x1d0] sm:$0xff]
    %v3701 = vld [vmem:[#allocation8 + $0x1d8] sm:$0xff]
    %v3702 = vld [vmem:[#allocation8 + $0x1e0] sm:$0xff]
    %v3703 = vld [vmem:[#allocation8 + $0x1e8] sm:$0xff]
    %v3704 = vld [vmem:[#allocation8 + $0x1f0] sm:$0xff]
    %v3705 = vld [vmem:[#allocation8 + $0x1f8] sm:$0xff]
    %v3706 = vld [vmem:[#allocation8 + $0x200] sm:$0xff]
    %v3707 = vld [vmem:[#allocation8 + $0x208] sm:$0xff]
    %v3708 = vld [vmem:[#allocation8 + $0x210] sm:$0xff]
    %v3709 = vld [vmem:[#allocation8 + $0x218] sm:$0xff]
    %v3710 = vld [vmem:[#allocation8 + $0x220] sm:$0xff]
    %v3711 = vld [vmem:[#allocation8 + $0x228] sm:$0xff]
    %v3712 = vld [vmem:[#allocation8 + $0x230] sm:$0xff]
    %v3713 = vld [vmem:[#allocation8 + $0x238] sm:$0xff]
    %v3714 = vld [vmem:[#allocation8 + $0x240] sm:$0xff]
    %v3715 = vld [vmem:[#allocation8 + $0x248] sm:$0xff]
    %v3716 = vld [vmem:[#allocation8 + $0x250] sm:$0xff]
    %v3717 = vld [vmem:[#allocation8 + $0x258] sm:$0xff]
    %v3718 = vld [vmem:[#allocation8 + $0x260] sm:$0xff]
    %v3719 = vld [vmem:[#allocation8 + $0x268] sm:$0xff]
    %v3720 = vld [vmem:[#allocation8 + $0x270] sm:$0xff]
    %v3721 = vld [vmem:[#allocation8 + $0x278] sm:$0xff]
    %v3722 = vld [vmem:[#allocation8 + $0x280] sm:$0xff]
    %v3723 = vld [vmem:[#allocation8 + $0x288] sm:$0xff]
    %v3724 = vld [vmem:[#allocation8 + $0x290] sm:$0xff]
    %v3725 = vld [vmem:[#allocation8 + $0x298] sm:$0xff]
    %v3726 = vld [vmem:[#allocation8 + $0x2a0] sm:$0xff]
    %v3727 = vld [vmem:[#allocation8 + $0x2a8] sm:$0xff]
    %v3728 = vld [vmem:[#allocation8 + $0x2b0] sm:$0xff]
    %v3729 = vld [vmem:[#allocation8 + $0x2b8] sm:$0xff]
    %v3730 = vld [vmem:[#allocation8 + $0x2c0] sm:$0xff]
    %v3731 = vld [vmem:[#allocation8 + $0x2c8] sm:$0xff]
    %v3732 = vld [vmem:[#allocation8 + $0x2d0] sm:$0xff]
    %v3733 = vld [vmem:[#allocation8 + $0x2d8] sm:$0xff]
    %v3734 = vld [vmem:[#allocation8 + $0x2e0] sm:$0xff]
    %v3735 = vld [vmem:[#allocation8 + $0x2e8] sm:$0xff]
    %v3736 = vld [vmem:[#allocation8 + $0x2f0] sm:$0xff]
    %v3737 = vld [vmem:[#allocation8 + $0x2f8] sm:$0xff]
    %v3738 = vld [vmem:[#allocation8 + $0x300] sm:$0xff]
    %v3739 = vld [vmem:[#allocation8 + $0x308] sm:$0xff]
    %v3740 = vld [vmem:[#allocation8 + $0x310] sm:$0xff]
    %v3741 = vld [vmem:[#allocation8 + $0x318] sm:$0xff]
    %v3742 = vld [vmem:[#allocation8 + $0x320] sm:$0xff]
    %v3743 = vld [vmem:[#allocation8 + $0x328] sm:$0xff]
    %v3744 = vld [vmem:[#allocation8 + $0x330] sm:$0xff]
    %v3745 = vld [vmem:[#allocation8 + $0x338] sm:$0xff]
    %v3746 = vld [vmem:[#allocation8 + $0x340] sm:$0xff]
    %v3747 = vld [vmem:[#allocation8 + $0x348] sm:$0xff]
    %v3748 = vld [vmem:[#allocation8 + $0x350] sm:$0xff]
    %v3749 = vld [vmem:[#allocation8 + $0x358] sm:$0xff]
    %v3750 = vld [vmem:[#allocation8 + $0x360] sm:$0xff]
    %v3751 = vld [vmem:[#allocation8 + $0x368] sm:$0xff]
    %v3752 = vld [vmem:[#allocation8 + $0x370] sm:$0xff]
    %v3753 = vld [vmem:[#allocation8 + $0x378] sm:$0xff]
    %v3754 = vld [vmem:[#allocation8 + $0x380] sm:$0xff]
    %v3755 = vld [vmem:[#allocation8 + $0x388] sm:$0xff]
    %v3756 = vld [vmem:[#allocation8 + $0x390] sm:$0xff]
    %v3757 = vld [vmem:[#allocation8 + $0x398] sm:$0xff]
    %v3758 = vld [vmem:[#allocation8 + $0x3a0] sm:$0xff]
    %v3759 = vld [vmem:[#allocation8 + $0x3a8] sm:$0xff]
    %v3760 = vld [vmem:[#allocation8 + $0x3b0] sm:$0xff]
    %v3761 = vld [vmem:[#allocation8 + $0x3b8] sm:$0xff]
    %v3762 = vld [vmem:[#allocation8 + $0x3c0] sm:$0xff]
    %v3763 = vld [vmem:[#allocation8 + $0x3c8] sm:$0xff]
    %v3764 = vld [vmem:[#allocation8 + $0x3d0] sm:$0xff]
    %v3765 = vld [vmem:[#allocation8 + $0x3d8] sm:$0xff]
    %v3766 = vld [vmem:[#allocation8 + $0x3e0] sm:$0xff]
    %v3767 = vld [vmem:[#allocation8 + $0x3e8] sm:$0xff]
    %v3768 = vld [vmem:[#allocation8 + $0x3f0] sm:$0xff]
    %v3769 = vld [vmem:[#allocation8 + $0x3f8] sm:$0xff]
    %v3770 = vld [vmem:[#allocation8 + $0x400] sm:$0xff]
    %v3771 = vld [vmem:[#allocation8 + $0x408] sm:$0xff]
    %v3772 = vld [vmem:[#allocation8 + $0x410] sm:$0xff]
    %v3773 = vld [vmem:[#allocation8 + $0x418] sm:$0xff]
    %v3774 = vld [vmem:[#allocation8 + $0x420] sm:$0xff]
    %v3775 = vld [vmem:[#allocation8 + $0x428] sm:$0xff]
    %v3776 = vld [vmem:[#allocation8 + $0x430] sm:$0xff]
    %v3777 = vld [vmem:[#allocation8 + $0x438] sm:$0xff]
    %v3778 = vld [vmem:[#allocation8 + $0x440] sm:$0xff]
    %v3779 = vld [vmem:[#allocation8 + $0x448] sm:$0xff]
    %v3780 = vld [vmem:[#allocation8 + $0x450] sm:$0xff]
    %v3781 = vld [vmem:[#allocation8 + $0x458] sm:$0xff]
    %v3782 = vld [vmem:[#allocation8 + $0x460] sm:$0xff]
    %v3783 = vld [vmem:[#allocation8 + $0x468] sm:$0xff]
    %v3784 = vld [vmem:[#allocation8 + $0x470] sm:$0xff]
    %v3785 = vld [vmem:[#allocation8 + $0x478] sm:$0xff]
    %v3786 = vld [vmem:[#allocation8 + $0x480] sm:$0xff]
    %v3787 = vld [vmem:[#allocation8 + $0x488] sm:$0xff]
    %v3788 = vld [vmem:[#allocation8 + $0x490] sm:$0xff]
    %v3789 = vld [vmem:[#allocation8 + $0x498] sm:$0xff]
    %v3790 = vld [vmem:[#allocation8 + $0x4a0] sm:$0xff]
    %v3791 = vld [vmem:[#allocation8 + $0x4a8] sm:$0xff]
    %v3792 = vld [vmem:[#allocation8 + $0x4b0] sm:$0xff]
    %v3793 = vld [vmem:[#allocation8 + $0x4b8] sm:$0xff]
    %v3794 = vld [vmem:[#allocation8 + $0x4c0] sm:$0xff]
    %v3795 = vld [vmem:[#allocation8 + $0x4c8] sm:$0xff]
    %v3796 = vld [vmem:[#allocation8 + $0x4d0] sm:$0xff]
    %v3797 = vld [vmem:[#allocation8 + $0x4d8] sm:$0xff]
    %v3798 = vld [vmem:[#allocation8 + $0x4e0] sm:$0xff]
    %v3799 = vld [vmem:[#allocation8 + $0x4e8] sm:$0xff]
    %v3800 = vld [vmem:[#allocation8 + $0x4f0] sm:$0xff]
    %v3801 = vld [vmem:[#allocation8 + $0x4f8] sm:$0xff]
    %v3802 = vld [vmem:[#allocation8 + $0x500] sm:$0xff]
    %v3803 = vld [vmem:[#allocation8 + $0x508] sm:$0xff]
    %v3804 = vld [vmem:[#allocation8 + $0x510] sm:$0xff]
    %v3805 = vld [vmem:[#allocation8 + $0x518] sm:$0xff]
    %v3806 = vld [vmem:[#allocation8 + $0x520] sm:$0xff]
    %v3807 = vld [vmem:[#allocation8 + $0x528] sm:$0xff]
    %v3808 = vld [vmem:[#allocation8 + $0x530] sm:$0xff]
    %v3809 = vld [vmem:[#allocation8 + $0x538] sm:$0xff]
    %v3810 = vld [vmem:[#allocation8 + $0x540] sm:$0xff]
    %v3811 = vld [vmem:[#allocation8 + $0x548] sm:$0xff]
    %v3812 = vld [vmem:[#allocation8 + $0x550] sm:$0xff]
    %v3813 = vld [vmem:[#allocation8 + $0x558] sm:$0xff]
    %v3814 = vld [vmem:[#allocation8 + $0x560] sm:$0xff]
    %v3815 = vld [vmem:[#allocation8 + $0x568] sm:$0xff]
    %v3816 = vld [vmem:[#allocation8 + $0x570] sm:$0xff]
    %v3817 = vld [vmem:[#allocation8 + $0x578] sm:$0xff]
    %v3818 = vld [vmem:[#allocation8 + $0x580] sm:$0xff]
    %v3819 = vld [vmem:[#allocation8 + $0x588] sm:$0xff]
    %v3820 = vld [vmem:[#allocation8 + $0x590] sm:$0xff]
    %v3821 = vld [vmem:[#allocation8 + $0x598] sm:$0xff]
    %v3822 = vld [vmem:[#allocation8 + $0x5a0] sm:$0xff]
    %v3823 = vld [vmem:[#allocation8 + $0x5a8] sm:$0xff]
    %v3824 = vld [vmem:[#allocation8 + $0x5b0] sm:$0xff]
    %v3825 = vld [vmem:[#allocation8 + $0x5b8] sm:$0xff]
    %v3826 = vld [vmem:[#allocation8 + $0x5c0] sm:$0xff]
    %v3827 = vld [vmem:[#allocation8 + $0x5c8] sm:$0xff]
    %v3828 = vld [vmem:[#allocation8 + $0x5d0] sm:$0xff]
    %v3829 = vld [vmem:[#allocation8 + $0x5d8] sm:$0xff]
    %v3830 = vld [vmem:[#allocation8 + $0x5e0] sm:$0xff]
    %v3831 = vld [vmem:[#allocation8 + $0x5e8] sm:$0xff]
    %v3832 = vld [vmem:[#allocation8 + $0x5f0] sm:$0xff]
    %v3833 = vld [vmem:[#allocation8 + $0x5f8] sm:$0xff]
    %v3834 = vld [vmem:[#allocation8 + $0x600] sm:$0xff]
    %v3835 = vld [vmem:[#allocation8 + $0x608] sm:$0xff]
    %v3836 = vld [vmem:[#allocation8 + $0x610] sm:$0xff]
    %v3837 = vld [vmem:[#allocation8 + $0x618] sm:$0xff]
    %v3838 = vld [vmem:[#allocation8 + $0x620] sm:$0xff]
    %v3839 = vld [vmem:[#allocation8 + $0x628] sm:$0xff]
    %v3840 = vld [vmem:[#allocation8 + $0x630] sm:$0xff]
    %v3841 = vld [vmem:[#allocation8 + $0x638] sm:$0xff]
    %v3842 = vld [vmem:[#allocation8 + $0x640] sm:$0xff]
    %v3843 = vld [vmem:[#allocation8 + $0x648] sm:$0xff]
    %v3844 = vld [vmem:[#allocation8 + $0x650] sm:$0xff]
    %v3845 = vld [vmem:[#allocation8 + $0x658] sm:$0xff]
    %v3846 = vld [vmem:[#allocation8 + $0x660] sm:$0xff]
    %v3847 = vld [vmem:[#allocation8 + $0x668] sm:$0xff]
    %v3848 = vld [vmem:[#allocation8 + $0x670] sm:$0xff]
    %v3849 = vld [vmem:[#allocation8 + $0x678] sm:$0xff]
    %v3850 = vld [vmem:[#allocation8 + $0x680] sm:$0xff]
    %v3851 = vld [vmem:[#allocation8 + $0x688] sm:$0xff]
    %v3852 = vld [vmem:[#allocation8 + $0x690] sm:$0xff]
    %v3853 = vld [vmem:[#allocation8 + $0x698] sm:$0xff]
    %v3854 = vld [vmem:[#allocation8 + $0x6a0] sm:$0xff]
    %v3855 = vld [vmem:[#allocation8 + $0x6a8] sm:$0xff]
    %v3856 = vld [vmem:[#allocation8 + $0x6b0] sm:$0xff]
    %v3857 = vld [vmem:[#allocation8 + $0x6b8] sm:$0xff]
    %v3858 = vld [vmem:[#allocation8 + $0x6c0] sm:$0xff]
    %v3859 = vld [vmem:[#allocation8 + $0x6c8] sm:$0xff]
    %v3860 = vld [vmem:[#allocation8 + $0x6d0] sm:$0xff]
    %v3861 = vld [vmem:[#allocation8 + $0x6d8] sm:$0xff]
    %v3862 = vld [vmem:[#allocation8 + $0x6e0] sm:$0xff]
    %v3863 = vld [vmem:[#allocation8 + $0x6e8] sm:$0xff]
    %v3864 = vld [vmem:[#allocation8 + $0x6f0] sm:$0xff]
    %v3865 = vld [vmem:[#allocation8 + $0x6f8] sm:$0xff]
    %v3866 = vld [vmem:[#allocation8 + $0x700] sm:$0xff]
    %v3867 = vld [vmem:[#allocation8 + $0x708] sm:$0xff]
    %v3868 = vld [vmem:[#allocation8 + $0x710] sm:$0xff]
    %v3869 = vld [vmem:[#allocation8 + $0x718] sm:$0xff]
    %v3870 = vld [vmem:[#allocation8 + $0x720] sm:$0xff]
    %v3871 = vld [vmem:[#allocation8 + $0x728] sm:$0xff]
    %v3872 = vld [vmem:[#allocation8 + $0x730] sm:$0xff]
    %v3873 = vld [vmem:[#allocation8 + $0x738] sm:$0xff]
    %v3874 = vld [vmem:[#allocation8 + $0x740] sm:$0xff]
    %v3875 = vld [vmem:[#allocation8 + $0x748] sm:$0xff]
    %v3876 = vld [vmem:[#allocation8 + $0x750] sm:$0xff]
    %v3877 = vld [vmem:[#allocation8 + $0x758] sm:$0xff]
    %v3878 = vld [vmem:[#allocation8 + $0x760] sm:$0xff]
    %v3879 = vld [vmem:[#allocation8 + $0x768] sm:$0xff]
    %v3880 = vld [vmem:[#allocation8 + $0x770] sm:$0xff]
    %v3881 = vld [vmem:[#allocation8 + $0x778] sm:$0xff]
    %v3882 = vld [vmem:[#allocation8 + $0x780] sm:$0xff]
    %v3883 = vld [vmem:[#allocation8 + $0x788] sm:$0xff]
    %v3884 = vld [vmem:[#allocation8 + $0x790] sm:$0xff]
    %v3885 = vld [vmem:[#allocation8 + $0x798] sm:$0xff]
    %v3886 = vld [vmem:[#allocation8 + $0x7a0] sm:$0xff]
    %v3887 = vld [vmem:[#allocation8 + $0x7a8] sm:$0xff]
    %v3888 = vld [vmem:[#allocation8 + $0x7b0] sm:$0xff]
    %v3889 = vld [vmem:[#allocation8 + $0x7b8] sm:$0xff]
    %v3890 = vld [vmem:[#allocation8 + $0x7c0] sm:$0xff]
    %v3891 = vld [vmem:[#allocation8 + $0x7c8] sm:$0xff]
    %v3892 = vld [vmem:[#allocation8 + $0x7d0] sm:$0xff]
    %v3893 = vld [vmem:[#allocation8 + $0x7d8] sm:$0xff]
    %v3894 = vld [vmem:[#allocation8 + $0x7e0] sm:$0xff]
    %v3895 = vld [vmem:[#allocation8 + $0x7e8] sm:$0xff]
    %v3896 = vld [vmem:[#allocation8 + $0x7f0] sm:$0xff]
    %v3897 = vld [vmem:[#allocation8 + $0x7f8] sm:$0xff]
    %v3898 = vld [vmem:[#allocation10] sm:$0xf]
    %v3900 = vperm.slane %v3898, 0
    %v3901 = vperm.slane %v3898, 1
    %v3902 = vperm.slane %v3898, 2
    %v3903 = vperm.slane %v3898, 3
    %v4164 = vunpack.c.l.b16 %v3642
    %v4165 = vunpack.c.h.b16 %v3642
    %v4166 = vunpack.c.l.b16 %v3643
    %v4167 = vunpack.c.h.b16 %v3643
    %v4168 = vunpack.c.l.b16 %v3644
    %v4169 = vunpack.c.h.b16 %v3644
    %v4170 = vunpack.c.l.b16 %v3645
    %v4171 = vunpack.c.h.b16 %v3645
    %v4172 = vunpack.c.l.b16 %v3646
    %v4173 = vunpack.c.h.b16 %v3646
    %v4174 = vunpack.c.l.b16 %v3647
    %v4175 = vunpack.c.h.b16 %v3647
    %v4176 = vunpack.c.l.b16 %v3648
    %v4177 = vunpack.c.h.b16 %v3648
    %v4178 = vunpack.c.l.b16 %v3649
    %v4179 = vunpack.c.h.b16 %v3649
    %v4180 = vunpack.c.l.b16 %v3650
    %v4181 = vunpack.c.h.b16 %v3650
    %v4182 = vunpack.c.l.b16 %v3651
    %v4183 = vunpack.c.h.b16 %v3651
    %v4184 = vunpack.c.l.b16 %v3652
    %v4185 = vunpack.c.h.b16 %v3652
    %v4186 = vunpack.c.l.b16 %v3653
    %v4187 = vunpack.c.h.b16 %v3653
    %v4188 = vunpack.c.l.b16 %v3654
    %v4189 = vunpack.c.h.b16 %v3654
    %v4190 = vunpack.c.l.b16 %v3655
    %v4191 = vunpack.c.h.b16 %v3655
    %v4192 = vunpack.c.l.b16 %v3656
    %v4193 = vunpack.c.h.b16 %v3656
    %v4194 = vunpack.c.l.b16 %v3657
    %v4195 = vunpack.c.h.b16 %v3657
    %v4196 = vunpack.c.l.b16 %v3658
    %v4197 = vunpack.c.h.b16 %v3658
    %v4198 = vunpack.c.l.b16 %v3659
    %v4199 = vunpack.c.h.b16 %v3659
    %v4200 = vunpack.c.l.b16 %v3660
    %v4201 = vunpack.c.h.b16 %v3660
    %v4202 = vunpack.c.l.b16 %v3661
    %v4203 = vunpack.c.h.b16 %v3661
    %v4204 = vunpack.c.l.b16 %v3662
    %v4205 = vunpack.c.h.b16 %v3662
    %v4206 = vunpack.c.l.b16 %v3663
    %v4207 = vunpack.c.h.b16 %v3663
    %v4208 = vunpack.c.l.b16 %v3664
    %v4209 = vunpack.c.h.b16 %v3664
    %v4210 = vunpack.c.l.b16 %v3665
    %v4211 = vunpack.c.h.b16 %v3665
    %v4212 = vunpack.c.l.b16 %v3666
    %v4213 = vunpack.c.h.b16 %v3666
    %v4214 = vunpack.c.l.b16 %v3667
    %v4215 = vunpack.c.h.b16 %v3667
    %v4216 = vunpack.c.l.b16 %v3668
    %v4217 = vunpack.c.h.b16 %v3668
    %v4218 = vunpack.c.l.b16 %v3669
    %v4219 = vunpack.c.h.b16 %v3669
    %v4220 = vunpack.c.l.b16 %v3670
    %v4221 = vunpack.c.h.b16 %v3670
    %v4222 = vunpack.c.l.b16 %v3671
    %v4223 = vunpack.c.h.b16 %v3671
    %v4224 = vunpack.c.l.b16 %v3672
    %v4225 = vunpack.c.h.b16 %v3672
    %v4226 = vunpack.c.l.b16 %v3673
    %v4227 = vunpack.c.h.b16 %v3673
    %v4228 = vunpack.c.l.b16 %v3674
    %v4229 = vunpack.c.h.b16 %v3674
    %v4230 = vunpack.c.l.b16 %v3675
    %v4231 = vunpack.c.h.b16 %v3675
    %v4232 = vunpack.c.l.b16 %v3676
    %v4233 = vunpack.c.h.b16 %v3676
    %v4234 = vunpack.c.l.b16 %v3677
    %v4235 = vunpack.c.h.b16 %v3677
    %v4236 = vunpack.c.l.b16 %v3678
    %v4237 = vunpack.c.h.b16 %v3678
    %v4238 = vunpack.c.l.b16 %v3679
    %v4239 = vunpack.c.h.b16 %v3679
    %v4240 = vunpack.c.l.b16 %v3680
    %v4241 = vunpack.c.h.b16 %v3680
    %v4242 = vunpack.c.l.b16 %v3681
    %v4243 = vunpack.c.h.b16 %v3681
    %v4244 = vunpack.c.l.b16 %v3682
    %v4245 = vunpack.c.h.b16 %v3682
    %v4246 = vunpack.c.l.b16 %v3683
    %v4247 = vunpack.c.h.b16 %v3683
    %v4248 = vunpack.c.l.b16 %v3684
    %v4249 = vunpack.c.h.b16 %v3684
    %v4250 = vunpack.c.l.b16 %v3685
    %v4251 = vunpack.c.h.b16 %v3685
    %v4252 = vunpack.c.l.b16 %v3686
    %v4253 = vunpack.c.h.b16 %v3686
    %v4254 = vunpack.c.l.b16 %v3687
    %v4255 = vunpack.c.h.b16 %v3687
    %v4256 = vunpack.c.l.b16 %v3688
    %v4257 = vunpack.c.h.b16 %v3688
    %v4258 = vunpack.c.l.b16 %v3689
    %v4259 = vunpack.c.h.b16 %v3689
    %v4260 = vunpack.c.l.b16 %v3690
    %v4261 = vunpack.c.h.b16 %v3690
    %v4262 = vunpack.c.l.b16 %v3691
    %v4263 = vunpack.c.h.b16 %v3691
    %v4264 = vunpack.c.l.b16 %v3692
    %v4265 = vunpack.c.h.b16 %v3692
    %v4266 = vunpack.c.l.b16 %v3693
    %v4267 = vunpack.c.h.b16 %v3693
    %v4268 = vunpack.c.l.b16 %v3694
    %v4269 = vunpack.c.h.b16 %v3694
    %v4270 = vunpack.c.l.b16 %v3695
    %v4271 = vunpack.c.h.b16 %v3695
    %v4272 = vunpack.c.l.b16 %v3696
    %v4273 = vunpack.c.h.b16 %v3696
    %v4274 = vunpack.c.l.b16 %v3697
    %v4275 = vunpack.c.h.b16 %v3697
    %v4276 = vunpack.c.l.b16 %v3698
    %v4277 = vunpack.c.h.b16 %v3698
    %v4278 = vunpack.c.l.b16 %v3699
    %v4279 = vunpack.c.h.b16 %v3699
    %v4280 = vunpack.c.l.b16 %v3700
    %v4281 = vunpack.c.h.b16 %v3700
    %v4282 = vunpack.c.l.b16 %v3701
    %v4283 = vunpack.c.h.b16 %v3701
    %v4284 = vunpack.c.l.b16 %v3702
    %v4285 = vunpack.c.h.b16 %v3702
    %v4286 = vunpack.c.l.b16 %v3703
    %v4287 = vunpack.c.h.b16 %v3703
    %v4288 = vunpack.c.l.b16 %v3704
    %v4289 = vunpack.c.h.b16 %v3704
    %v4290 = vunpack.c.l.b16 %v3705
    %v4291 = vunpack.c.h.b16 %v3705
    %v4292 = vunpack.c.l.b16 %v3706
    %v4293 = vunpack.c.h.b16 %v3706
    %v4294 = vunpack.c.l.b16 %v3707
    %v4295 = vunpack.c.h.b16 %v3707
    %v4296 = vunpack.c.l.b16 %v3708
    %v4297 = vunpack.c.h.b16 %v3708
    %v4298 = vunpack.c.l.b16 %v3709
    %v4299 = vunpack.c.h.b16 %v3709
    %v4300 = vunpack.c.l.b16 %v3710
    %v4301 = vunpack.c.h.b16 %v3710
    %v4302 = vunpack.c.l.b16 %v3711
    %v4303 = vunpack.c.h.b16 %v3711
    %v4304 = vunpack.c.l.b16 %v3712
    %v4305 = vunpack.c.h.b16 %v3712
    %v4306 = vunpack.c.l.b16 %v3713
    %v4307 = vunpack.c.h.b16 %v3713
    %v4308 = vunpack.c.l.b16 %v3714
    %v4309 = vunpack.c.h.b16 %v3714
    %v4310 = vunpack.c.l.b16 %v3715
    %v4311 = vunpack.c.h.b16 %v3715
    %v4312 = vunpack.c.l.b16 %v3716
    %v4313 = vunpack.c.h.b16 %v3716
    %v4314 = vunpack.c.l.b16 %v3717
    %v4315 = vunpack.c.h.b16 %v3717
    %v4316 = vunpack.c.l.b16 %v3718
    %v4317 = vunpack.c.h.b16 %v3718
    %v4318 = vunpack.c.l.b16 %v3719
    %v4319 = vunpack.c.h.b16 %v3719
    %v4320 = vunpack.c.l.b16 %v3720
    %v4321 = vunpack.c.h.b16 %v3720
    %v4322 = vunpack.c.l.b16 %v3721
    %v4323 = vunpack.c.h.b16 %v3721
    %v4324 = vunpack.c.l.b16 %v3722
    %v4325 = vunpack.c.h.b16 %v3722
    %v4326 = vunpack.c.l.b16 %v3723
    %v4327 = vunpack.c.h.b16 %v3723
    %v4328 = vunpack.c.l.b16 %v3724
    %v4329 = vunpack.c.h.b16 %v3724
    %v4330 = vunpack.c.l.b16 %v3725
    %v4331 = vunpack.c.h.b16 %v3725
    %v4332 = vunpack.c.l.b16 %v3726
    %v4333 = vunpack.c.h.b16 %v3726
    %v4334 = vunpack.c.l.b16 %v3727
    %v4335 = vunpack.c.h.b16 %v3727
    %v4336 = vunpack.c.l.b16 %v3728
    %v4337 = vunpack.c.h.b16 %v3728
    %v4338 = vunpack.c.l.b16 %v3729
    %v4339 = vunpack.c.h.b16 %v3729
    %v4340 = vunpack.c.l.b16 %v3730
    %v4341 = vunpack.c.h.b16 %v3730
    %v4342 = vunpack.c.l.b16 %v3731
    %v4343 = vunpack.c.h.b16 %v3731
    %v4344 = vunpack.c.l.b16 %v3732
    %v4345 = vunpack.c.h.b16 %v3732
    %v4346 = vunpack.c.l.b16 %v3733
    %v4347 = vunpack.c.h.b16 %v3733
    %v4348 = vunpack.c.l.b16 %v3734
    %v4349 = vunpack.c.h.b16 %v3734
    %v4350 = vunpack.c.l.b16 %v3735
    %v4351 = vunpack.c.h.b16 %v3735
    %v4352 = vunpack.c.l.b16 %v3736
    %v4353 = vunpack.c.h.b16 %v3736
    %v4354 = vunpack.c.l.b16 %v3737
    %v4355 = vunpack.c.h.b16 %v3737
    %v4356 = vunpack.c.l.b16 %v3738
    %v4357 = vunpack.c.h.b16 %v3738
    %v4358 = vunpack.c.l.b16 %v3739
    %v4359 = vunpack.c.h.b16 %v3739
    %v4360 = vunpack.c.l.b16 %v3740
    %v4361 = vunpack.c.h.b16 %v3740
    %v4362 = vunpack.c.l.b16 %v3741
    %v4363 = vunpack.c.h.b16 %v3741
    %v4364 = vunpack.c.l.b16 %v3742
    %v4365 = vunpack.c.h.b16 %v3742
    %v4366 = vunpack.c.l.b16 %v3743
    %v4367 = vunpack.c.h.b16 %v3743
    %v4368 = vunpack.c.l.b16 %v3744
    %v4369 = vunpack.c.h.b16 %v3744
    %v4370 = vunpack.c.l.b16 %v3745
    %v4371 = vunpack.c.h.b16 %v3745
    %v4372 = vunpack.c.l.b16 %v3746
    %v4373 = vunpack.c.h.b16 %v3746
    %v4374 = vunpack.c.l.b16 %v3747
    %v4375 = vunpack.c.h.b16 %v3747
    %v4376 = vunpack.c.l.b16 %v3748
    %v4377 = vunpack.c.h.b16 %v3748
    %v4378 = vunpack.c.l.b16 %v3749
    %v4379 = vunpack.c.h.b16 %v3749
    %v4380 = vunpack.c.l.b16 %v3750
    %v4381 = vunpack.c.h.b16 %v3750
    %v4382 = vunpack.c.l.b16 %v3751
    %v4383 = vunpack.c.h.b16 %v3751
    %v4384 = vunpack.c.l.b16 %v3752
    %v4385 = vunpack.c.h.b16 %v3752
    %v4386 = vunpack.c.l.b16 %v3753
    %v4387 = vunpack.c.h.b16 %v3753
    %v4388 = vunpack.c.l.b16 %v3754
    %v4389 = vunpack.c.h.b16 %v3754
    %v4390 = vunpack.c.l.b16 %v3755
    %v4391 = vunpack.c.h.b16 %v3755
    %v4392 = vunpack.c.l.b16 %v3756
    %v4393 = vunpack.c.h.b16 %v3756
    %v4394 = vunpack.c.l.b16 %v3757
    %v4395 = vunpack.c.h.b16 %v3757
    %v4396 = vunpack.c.l.b16 %v3758
    %v4397 = vunpack.c.h.b16 %v3758
    %v4398 = vunpack.c.l.b16 %v3759
    %v4399 = vunpack.c.h.b16 %v3759
    %v4400 = vunpack.c.l.b16 %v3760
    %v4401 = vunpack.c.h.b16 %v3760
    %v4402 = vunpack.c.l.b16 %v3761
    %v4403 = vunpack.c.h.b16 %v3761
    %v4404 = vunpack.c.l.b16 %v3762
    %v4405 = vunpack.c.h.b16 %v3762
    %v4406 = vunpack.c.l.b16 %v3763
    %v4407 = vunpack.c.h.b16 %v3763
    %v4408 = vunpack.c.l.b16 %v3764
    %v4409 = vunpack.c.h.b16 %v3764
    %v4410 = vunpack.c.l.b16 %v3765
    %v4411 = vunpack.c.h.b16 %v3765
    %v4412 = vunpack.c.l.b16 %v3766
    %v4413 = vunpack.c.h.b16 %v3766
    %v4414 = vunpack.c.l.b16 %v3767
    %v4415 = vunpack.c.h.b16 %v3767
    %v4416 = vunpack.c.l.b16 %v3768
    %v4417 = vunpack.c.h.b16 %v3768
    %v4418 = vunpack.c.l.b16 %v3769
    %v4419 = vunpack.c.h.b16 %v3769
    %v4420 = vunpack.c.l.b16 %v3770
    %v4421 = vunpack.c.h.b16 %v3770
    %v4422 = vunpack.c.l.b16 %v3771
    %v4423 = vunpack.c.h.b16 %v3771
    %v4424 = vunpack.c.l.b16 %v3772
    %v4425 = vunpack.c.h.b16 %v3772
    %v4426 = vunpack.c.l.b16 %v3773
    %v4427 = vunpack.c.h.b16 %v3773
    %v4428 = vunpack.c.l.b16 %v3774
    %v4429 = vunpack.c.h.b16 %v3774
    %v4430 = vunpack.c.l.b16 %v3775
    %v4431 = vunpack.c.h.b16 %v3775
    %v4432 = vunpack.c.l.b16 %v3776
    %v4433 = vunpack.c.h.b16 %v3776
    %v4434 = vunpack.c.l.b16 %v3777
    %v4435 = vunpack.c.h.b16 %v3777
    %v4436 = vunpack.c.l.b16 %v3778
    %v4437 = vunpack.c.h.b16 %v3778
    %v4438 = vunpack.c.l.b16 %v3779
    %v4439 = vunpack.c.h.b16 %v3779
    %v4440 = vunpack.c.l.b16 %v3780
    %v4441 = vunpack.c.h.b16 %v3780
    %v4442 = vunpack.c.l.b16 %v3781
    %v4443 = vunpack.c.h.b16 %v3781
    %v4444 = vunpack.c.l.b16 %v3782
    %v4445 = vunpack.c.h.b16 %v3782
    %v4446 = vunpack.c.l.b16 %v3783
    %v4447 = vunpack.c.h.b16 %v3783
    %v4448 = vunpack.c.l.b16 %v3784
    %v4449 = vunpack.c.h.b16 %v3784
    %v4450 = vunpack.c.l.b16 %v3785
    %v4451 = vunpack.c.h.b16 %v3785
    %v4452 = vunpack.c.l.b16 %v3786
    %v4453 = vunpack.c.h.b16 %v3786
    %v4454 = vunpack.c.l.b16 %v3787
    %v4455 = vunpack.c.h.b16 %v3787
    %v4456 = vunpack.c.l.b16 %v3788
    %v4457 = vunpack.c.h.b16 %v3788
    %v4458 = vunpack.c.l.b16 %v3789
    %v4459 = vunpack.c.h.b16 %v3789
    %v4460 = vunpack.c.l.b16 %v3790
    %v4461 = vunpack.c.h.b16 %v3790
    %v4462 = vunpack.c.l.b16 %v3791
    %v4463 = vunpack.c.h.b16 %v3791
    %v4464 = vunpack.c.l.b16 %v3792
    %v4465 = vunpack.c.h.b16 %v3792
    %v4466 = vunpack.c.l.b16 %v3793
    %v4467 = vunpack.c.h.b16 %v3793
    %v4468 = vunpack.c.l.b16 %v3794
    %v4469 = vunpack.c.h.b16 %v3794
    %v4470 = vunpack.c.l.b16 %v3795
    %v4471 = vunpack.c.h.b16 %v3795
    %v4472 = vunpack.c.l.b16 %v3796
    %v4473 = vunpack.c.h.b16 %v3796
    %v4474 = vunpack.c.l.b16 %v3797
    %v4475 = vunpack.c.h.b16 %v3797
    %v4476 = vunpack.c.l.b16 %v3798
    %v4477 = vunpack.c.h.b16 %v3798
    %v4478 = vunpack.c.l.b16 %v3799
    %v4479 = vunpack.c.h.b16 %v3799
    %v4480 = vunpack.c.l.b16 %v3800
    %v4481 = vunpack.c.h.b16 %v3800
    %v4482 = vunpack.c.l.b16 %v3801
    %v4483 = vunpack.c.h.b16 %v3801
    %v4484 = vunpack.c.l.b16 %v3802
    %v4485 = vunpack.c.h.b16 %v3802
    %v4486 = vunpack.c.l.b16 %v3803
    %v4487 = vunpack.c.h.b16 %v3803
    %v4488 = vunpack.c.l.b16 %v3804
    %v4489 = vunpack.c.h.b16 %v3804
    %v4490 = vunpack.c.l.b16 %v3805
    %v4491 = vunpack.c.h.b16 %v3805
    %v4492 = vunpack.c.l.b16 %v3806
    %v4493 = vunpack.c.h.b16 %v3806
    %v4494 = vunpack.c.l.b16 %v3807
    %v4495 = vunpack.c.h.b16 %v3807
    %v4496 = vunpack.c.l.b16 %v3808
    %v4497 = vunpack.c.h.b16 %v3808
    %v4498 = vunpack.c.l.b16 %v3809
    %v4499 = vunpack.c.h.b16 %v3809
    %v4500 = vunpack.c.l.b16 %v3810
    %v4501 = vunpack.c.h.b16 %v3810
    %v4502 = vunpack.c.l.b16 %v3811
    %v4503 = vunpack.c.h.b16 %v3811
    %v4504 = vunpack.c.l.b16 %v3812
    %v4505 = vunpack.c.h.b16 %v3812
    %v4506 = vunpack.c.l.b16 %v3813
    %v4507 = vunpack.c.h.b16 %v3813
    %v4508 = vunpack.c.l.b16 %v3814
    %v4509 = vunpack.c.h.b16 %v3814
    %v4510 = vunpack.c.l.b16 %v3815
    %v4511 = vunpack.c.h.b16 %v3815
    %v4512 = vunpack.c.l.b16 %v3816
    %v4513 = vunpack.c.h.b16 %v3816
    %v4514 = vunpack.c.l.b16 %v3817
    %v4515 = vunpack.c.h.b16 %v3817
    %v4516 = vunpack.c.l.b16 %v3818
    %v4517 = vunpack.c.h.b16 %v3818
    %v4518 = vunpack.c.l.b16 %v3819
    %v4519 = vunpack.c.h.b16 %v3819
    %v4520 = vunpack.c.l.b16 %v3820
    %v4521 = vunpack.c.h.b16 %v3820
    %v4522 = vunpack.c.l.b16 %v3821
    %v4523 = vunpack.c.h.b16 %v3821
    %v4524 = vunpack.c.l.b16 %v3822
    %v4525 = vunpack.c.h.b16 %v3822
    %v4526 = vunpack.c.l.b16 %v3823
    %v4527 = vunpack.c.h.b16 %v3823
    %v4528 = vunpack.c.l.b16 %v3824
    %v4529 = vunpack.c.h.b16 %v3824
    %v4530 = vunpack.c.l.b16 %v3825
    %v4531 = vunpack.c.h.b16 %v3825
    %v4532 = vunpack.c.l.b16 %v3826
    %v4533 = vunpack.c.h.b16 %v3826
    %v4534 = vunpack.c.l.b16 %v3827
    %v4535 = vunpack.c.h.b16 %v3827
    %v4536 = vunpack.c.l.b16 %v3828
    %v4537 = vunpack.c.h.b16 %v3828
    %v4538 = vunpack.c.l.b16 %v3829
    %v4539 = vunpack.c.h.b16 %v3829
    %v4540 = vunpack.c.l.b16 %v3830
    %v4541 = vunpack.c.h.b16 %v3830
    %v4542 = vunpack.c.l.b16 %v3831
    %v4543 = vunpack.c.h.b16 %v3831
    %v4544 = vunpack.c.l.b16 %v3832
    %v4545 = vunpack.c.h.b16 %v3832
    %v4546 = vunpack.c.l.b16 %v3833
    %v4547 = vunpack.c.h.b16 %v3833
    %v4548 = vunpack.c.l.b16 %v3834
    %v4549 = vunpack.c.h.b16 %v3834
    %v4550 = vunpack.c.l.b16 %v3835
    %v4551 = vunpack.c.h.b16 %v3835
    %v4552 = vunpack.c.l.b16 %v3836
    %v4553 = vunpack.c.h.b16 %v3836
    %v4554 = vunpack.c.l.b16 %v3837
    %v4555 = vunpack.c.h.b16 %v3837
    %v4556 = vunpack.c.l.b16 %v3838
    %v4557 = vunpack.c.h.b16 %v3838
    %v4558 = vunpack.c.l.b16 %v3839
    %v4559 = vunpack.c.h.b16 %v3839
    %v4560 = vunpack.c.l.b16 %v3840
    %v4561 = vunpack.c.h.b16 %v3840
    %v4562 = vunpack.c.l.b16 %v3841
    %v4563 = vunpack.c.h.b16 %v3841
    %v4564 = vunpack.c.l.b16 %v3842
    %v4565 = vunpack.c.h.b16 %v3842
    %v4566 = vunpack.c.l.b16 %v3843
    %v4567 = vunpack.c.h.b16 %v3843
    %v4568 = vunpack.c.l.b16 %v3844
    %v4569 = vunpack.c.h.b16 %v3844
    %v4570 = vunpack.c.l.b16 %v3845
    %v4571 = vunpack.c.h.b16 %v3845
    %v4572 = vunpack.c.l.b16 %v3846
    %v4573 = vunpack.c.h.b16 %v3846
    %v4574 = vunpack.c.l.b16 %v3847
    %v4575 = vunpack.c.h.b16 %v3847
    %v4576 = vunpack.c.l.b16 %v3848
    %v4577 = vunpack.c.h.b16 %v3848
    %v4578 = vunpack.c.l.b16 %v3849
    %v4579 = vunpack.c.h.b16 %v3849
    %v4580 = vunpack.c.l.b16 %v3850
    %v4581 = vunpack.c.h.b16 %v3850
    %v4582 = vunpack.c.l.b16 %v3851
    %v4583 = vunpack.c.h.b16 %v3851
    %v4584 = vunpack.c.l.b16 %v3852
    %v4585 = vunpack.c.h.b16 %v3852
    %v4586 = vunpack.c.l.b16 %v3853
    %v4587 = vunpack.c.h.b16 %v3853
    %v4588 = vunpack.c.l.b16 %v3854
    %v4589 = vunpack.c.h.b16 %v3854
    %v4590 = vunpack.c.l.b16 %v3855
    %v4591 = vunpack.c.h.b16 %v3855
    %v4592 = vunpack.c.l.b16 %v3856
    %v4593 = vunpack.c.h.b16 %v3856
    %v4594 = vunpack.c.l.b16 %v3857
    %v4595 = vunpack.c.h.b16 %v3857
    %v4596 = vunpack.c.l.b16 %v3858
    %v4597 = vunpack.c.h.b16 %v3858
    %v4598 = vunpack.c.l.b16 %v3859
    %v4599 = vunpack.c.h.b16 %v3859
    %v4600 = vunpack.c.l.b16 %v3860
    %v4601 = vunpack.c.h.b16 %v3860
    %v4602 = vunpack.c.l.b16 %v3861
    %v4603 = vunpack.c.h.b16 %v3861
    %v4604 = vunpack.c.l.b16 %v3862
    %v4605 = vunpack.c.h.b16 %v3862
    %v4606 = vunpack.c.l.b16 %v3863
    %v4607 = vunpack.c.h.b16 %v3863
    %v4608 = vunpack.c.l.b16 %v3864
    %v4609 = vunpack.c.h.b16 %v3864
    %v4610 = vunpack.c.l.b16 %v3865
    %v4611 = vunpack.c.h.b16 %v3865
    %v4612 = vunpack.c.l.b16 %v3866
    %v4613 = vunpack.c.h.b16 %v3866
    %v4614 = vunpack.c.l.b16 %v3867
    %v4615 = vunpack.c.h.b16 %v3867
    %v4616 = vunpack.c.l.b16 %v3868
    %v4617 = vunpack.c.h.b16 %v3868
    %v4618 = vunpack.c.l.b16 %v3869
    %v4619 = vunpack.c.h.b16 %v3869
    %v4620 = vunpack.c.l.b16 %v3870
    %v4621 = vunpack.c.h.b16 %v3870
    %v4622 = vunpack.c.l.b16 %v3871
    %v4623 = vunpack.c.h.b16 %v3871
    %v4624 = vunpack.c.l.b16 %v3872
    %v4625 = vunpack.c.h.b16 %v3872
    %v4626 = vunpack.c.l.b16 %v3873
    %v4627 = vunpack.c.h.b16 %v3873
    %v4628 = vunpack.c.l.b16 %v3874
    %v4629 = vunpack.c.h.b16 %v3874
    %v4630 = vunpack.c.l.b16 %v3875
    %v4631 = vunpack.c.h.b16 %v3875
    %v4632 = vunpack.c.l.b16 %v3876
    %v4633 = vunpack.c.h.b16 %v3876
    %v4634 = vunpack.c.l.b16 %v3877
    %v4635 = vunpack.c.h.b16 %v3877
    %v4636 = vunpack.c.l.b16 %v3878
    %v4637 = vunpack.c.h.b16 %v3878
    %v4638 = vunpack.c.l.b16 %v3879
    %v4639 = vunpack.c.h.b16 %v3879
    %v4640 = vunpack.c.l.b16 %v3880
    %v4641 = vunpack.c.h.b16 %v3880
    %v4642 = vunpack.c.l.b16 %v3881
    %v4643 = vunpack.c.h.b16 %v3881
    %v4644 = vunpack.c.l.b16 %v3882
    %v4645 = vunpack.c.h.b16 %v3882
    %v4646 = vunpack.c.l.b16 %v3883
    %v4647 = vunpack.c.h.b16 %v3883
    %v4648 = vunpack.c.l.b16 %v3884
    %v4649 = vunpack.c.h.b16 %v3884
    %v4650 = vunpack.c.l.b16 %v3885
    %v4651 = vunpack.c.h.b16 %v3885
    %v4652 = vunpack.c.l.b16 %v3886
    %v4653 = vunpack.c.h.b16 %v3886
    %v4654 = vunpack.c.l.b16 %v3887
    %v4655 = vunpack.c.h.b16 %v3887
    %v4656 = vunpack.c.l.b16 %v3888
    %v4657 = vunpack.c.h.b16 %v3888
    %v4658 = vunpack.c.l.b16 %v3889
    %v4659 = vunpack.c.h.b16 %v3889
    %v4660 = vunpack.c.l.b16 %v3890
    %v4661 = vunpack.c.h.b16 %v3890
    %v4662 = vunpack.c.l.b16 %v3891
    %v4663 = vunpack.c.h.b16 %v3891
    %v4664 = vunpack.c.l.b16 %v3892
    %v4665 = vunpack.c.h.b16 %v3892
    %v4666 = vunpack.c.l.b16 %v3893
    %v4667 = vunpack.c.h.b16 %v3893
    %v4668 = vunpack.c.l.b16 %v3894
    %v4669 = vunpack.c.h.b16 %v3894
    %v4670 = vunpack.c.l.b16 %v3895
    %v4671 = vunpack.c.h.b16 %v3895
    %v4672 = vunpack.c.l.b16 %v3896
    %v4673 = vunpack.c.h.b16 %v3896
    %v4674 = vunpack.c.l.b16 %v3897
    %v4675 = vunpack.c.h.b16 %v3897
    %v4676 = vpack.c.b16 %v4168, %v4164
    %v4677 = vpack.c.b16 %v4169, %v4165
    %v4678 = vpack.c.b16 %v4170, %v4166
    %v4679 = vpack.c.b16 %v4171, %v4167
    %v4680 = vpack.c.b16 %v4176, %v4172
    %v4681 = vpack.c.b16 %v4177, %v4173
    %v4682 = vpack.c.b16 %v4178, %v4174
    %v4683 = vpack.c.b16 %v4179, %v4175
    %v4684 = vpack.c.b16 %v4184, %v4180
    %v4685 = vpack.c.b16 %v4185, %v4181
    %v4686 = vpack.c.b16 %v4186, %v4182
    %v4687 = vpack.c.b16 %v4187, %v4183
    %v4688 = vpack.c.b16 %v4192, %v4188
    %v4689 = vpack.c.b16 %v4193, %v4189
    %v4690 = vpack.c.b16 %v4194, %v4190
    %v4691 = vpack.c.b16 %v4195, %v4191
    %v4692 = vpack.c.b16 %v4200, %v4196
    %v4693 = vpack.c.b16 %v4201, %v4197
    %v4694 = vpack.c.b16 %v4202, %v4198
    %v4695 = vpack.c.b16 %v4203, %v4199
    %v4696 = vpack.c.b16 %v4208, %v4204
    %v4697 = vpack.c.b16 %v4209, %v4205
    %v4698 = vpack.c.b16 %v4210, %v4206
    %v4699 = vpack.c.b16 %v4211, %v4207
    %v4700 = vpack.c.b16 %v4216, %v4212
    %v4701 = vpack.c.b16 %v4217, %v4213
    %v4702 = vpack.c.b16 %v4218, %v4214
    %v4703 = vpack.c.b16 %v4219, %v4215
    %v4704 = vpack.c.b16 %v4224, %v4220
    %v4705 = vpack.c.b16 %v4225, %v4221
    %v4706 = vpack.c.b16 %v4226, %v4222
    %v4707 = vpack.c.b16 %v4227, %v4223
    %v4708 = vpack.c.b16 %v4232, %v4228
    %v4709 = vpack.c.b16 %v4233, %v4229
    %v4710 = vpack.c.b16 %v4234, %v4230
    %v4711 = vpack.c.b16 %v4235, %v4231
    %v4712 = vpack.c.b16 %v4240, %v4236
    %v4713 = vpack.c.b16 %v4241, %v4237
    %v4714 = vpack.c.b16 %v4242, %v4238
    %v4715 = vpack.c.b16 %v4243, %v4239
    %v4716 = vpack.c.b16 %v4248, %v4244
    %v4717 = vpack.c.b16 %v4249, %v4245
    %v4718 = vpack.c.b16 %v4250, %v4246
    %v4719 = vpack.c.b16 %v4251, %v4247
    %v4720 = vpack.c.b16 %v4256, %v4252
    %v4721 = vpack.c.b16 %v4257, %v4253
    %v4722 = vpack.c.b16 %v4258, %v4254
    %v4723 = vpack.c.b16 %v4259, %v4255
    %v4724 = vpack.c.b16 %v4264, %v4260
    %v4725 = vpack.c.b16 %v4265, %v4261
    %v4726 = vpack.c.b16 %v4266, %v4262
    %v4727 = vpack.c.b16 %v4267, %v4263
    %v4728 = vpack.c.b16 %v4272, %v4268
    %v4729 = vpack.c.b16 %v4273, %v4269
    %v4730 = vpack.c.b16 %v4274, %v4270
    %v4731 = vpack.c.b16 %v4275, %v4271
    %v4732 = vpack.c.b16 %v4280, %v4276
    %v4733 = vpack.c.b16 %v4281, %v4277
    %v4734 = vpack.c.b16 %v4282, %v4278
    %v4735 = vpack.c.b16 %v4283, %v4279
    %v4736 = vpack.c.b16 %v4288, %v4284
    %v4737 = vpack.c.b16 %v4289, %v4285
    %v4738 = vpack.c.b16 %v4290, %v4286
    %v4739 = vpack.c.b16 %v4291, %v4287
    %v4740 = vpack.c.b16 %v4296, %v4292
    %v4741 = vpack.c.b16 %v4297, %v4293
    %v4742 = vpack.c.b16 %v4298, %v4294
    %v4743 = vpack.c.b16 %v4299, %v4295
    %v4744 = vpack.c.b16 %v4304, %v4300
    %v4745 = vpack.c.b16 %v4305, %v4301
    %v4746 = vpack.c.b16 %v4306, %v4302
    %v4747 = vpack.c.b16 %v4307, %v4303
    %v4748 = vpack.c.b16 %v4312, %v4308
    %v4749 = vpack.c.b16 %v4313, %v4309
    %v4750 = vpack.c.b16 %v4314, %v4310
    %v4751 = vpack.c.b16 %v4315, %v4311
    %v4752 = vpack.c.b16 %v4320, %v4316
    %v4753 = vpack.c.b16 %v4321, %v4317
    %v4754 = vpack.c.b16 %v4322, %v4318
    %v4755 = vpack.c.b16 %v4323, %v4319
    %v4756 = vpack.c.b16 %v4328, %v4324
    %v4757 = vpack.c.b16 %v4329, %v4325
    %v4758 = vpack.c.b16 %v4330, %v4326
    %v4759 = vpack.c.b16 %v4331, %v4327
    %v4760 = vpack.c.b16 %v4336, %v4332
    %v4761 = vpack.c.b16 %v4337, %v4333
    %v4762 = vpack.c.b16 %v4338, %v4334
    %v4763 = vpack.c.b16 %v4339, %v4335
    %v4764 = vpack.c.b16 %v4344, %v4340
    %v4765 = vpack.c.b16 %v4345, %v4341
    %v4766 = vpack.c.b16 %v4346, %v4342
    %v4767 = vpack.c.b16 %v4347, %v4343
    %v4768 = vpack.c.b16 %v4352, %v4348
    %v4769 = vpack.c.b16 %v4353, %v4349
    %v4770 = vpack.c.b16 %v4354, %v4350
    %v4771 = vpack.c.b16 %v4355, %v4351
    %v4772 = vpack.c.b16 %v4360, %v4356
    %v4773 = vpack.c.b16 %v4361, %v4357
    %v4774 = vpack.c.b16 %v4362, %v4358
    %v4775 = vpack.c.b16 %v4363, %v4359
    %v4776 = vpack.c.b16 %v4368, %v4364
    %v4777 = vpack.c.b16 %v4369, %v4365
    %v4778 = vpack.c.b16 %v4370, %v4366
    %v4779 = vpack.c.b16 %v4371, %v4367
    %v4780 = vpack.c.b16 %v4376, %v4372
    %v4781 = vpack.c.b16 %v4377, %v4373
    %v4782 = vpack.c.b16 %v4378, %v4374
    %v4783 = vpack.c.b16 %v4379, %v4375
    %v4784 = vpack.c.b16 %v4384, %v4380
    %v4785 = vpack.c.b16 %v4385, %v4381
    %v4786 = vpack.c.b16 %v4386, %v4382
    %v4787 = vpack.c.b16 %v4387, %v4383
    %v4788 = vpack.c.b16 %v4392, %v4388
    %v4789 = vpack.c.b16 %v4393, %v4389
    %v4790 = vpack.c.b16 %v4394, %v4390
    %v4791 = vpack.c.b16 %v4395, %v4391
    %v4792 = vpack.c.b16 %v4400, %v4396
    %v4793 = vpack.c.b16 %v4401, %v4397
    %v4794 = vpack.c.b16 %v4402, %v4398
    %v4795 = vpack.c.b16 %v4403, %v4399
    %v4796 = vpack.c.b16 %v4408, %v4404
    %v4797 = vpack.c.b16 %v4409, %v4405
    %v4798 = vpack.c.b16 %v4410, %v4406
    %v4799 = vpack.c.b16 %v4411, %v4407
    %v4800 = vpack.c.b16 %v4416, %v4412
    %v4801 = vpack.c.b16 %v4417, %v4413
    %v4802 = vpack.c.b16 %v4418, %v4414
    %v4803 = vpack.c.b16 %v4419, %v4415
    %v4804 = vpack.c.b16 %v4424, %v4420
    %v4805 = vpack.c.b16 %v4425, %v4421
    %v4806 = vpack.c.b16 %v4426, %v4422
    %v4807 = vpack.c.b16 %v4427, %v4423
    %v4808 = vpack.c.b16 %v4432, %v4428
    %v4809 = vpack.c.b16 %v4433, %v4429
    %v4810 = vpack.c.b16 %v4434, %v4430
    %v4811 = vpack.c.b16 %v4435, %v4431
    %v4812 = vpack.c.b16 %v4440, %v4436
    %v4813 = vpack.c.b16 %v4441, %v4437
    %v4814 = vpack.c.b16 %v4442, %v4438
    %v4815 = vpack.c.b16 %v4443, %v4439
    %v4816 = vpack.c.b16 %v4448, %v4444
    %v4817 = vpack.c.b16 %v4449, %v4445
    %v4818 = vpack.c.b16 %v4450, %v4446
    %v4819 = vpack.c.b16 %v4451, %v4447
    %v4820 = vpack.c.b16 %v4456, %v4452
    %v4821 = vpack.c.b16 %v4457, %v4453
    %v4822 = vpack.c.b16 %v4458, %v4454
    %v4823 = vpack.c.b16 %v4459, %v4455
    %v4824 = vpack.c.b16 %v4464, %v4460
    %v4825 = vpack.c.b16 %v4465, %v4461
    %v4826 = vpack.c.b16 %v4466, %v4462
    %v4827 = vpack.c.b16 %v4467, %v4463
    %v4828 = vpack.c.b16 %v4472, %v4468
    %v4829 = vpack.c.b16 %v4473, %v4469
    %v4830 = vpack.c.b16 %v4474, %v4470
    %v4831 = vpack.c.b16 %v4475, %v4471
    %v4832 = vpack.c.b16 %v4480, %v4476
    %v4833 = vpack.c.b16 %v4481, %v4477
    %v4834 = vpack.c.b16 %v4482, %v4478
    %v4835 = vpack.c.b16 %v4483, %v4479
    %v4836 = vpack.c.b16 %v4488, %v4484
    %v4837 = vpack.c.b16 %v4489, %v4485
    %v4838 = vpack.c.b16 %v4490, %v4486
    %v4839 = vpack.c.b16 %v4491, %v4487
    %v4840 = vpack.c.b16 %v4496, %v4492
    %v4841 = vpack.c.b16 %v4497, %v4493
    %v4842 = vpack.c.b16 %v4498, %v4494
    %v4843 = vpack.c.b16 %v4499, %v4495
    %v4844 = vpack.c.b16 %v4504, %v4500
    %v4845 = vpack.c.b16 %v4505, %v4501
    %v4846 = vpack.c.b16 %v4506, %v4502
    %v4847 = vpack.c.b16 %v4507, %v4503
    %v4848 = vpack.c.b16 %v4512, %v4508
    %v4849 = vpack.c.b16 %v4513, %v4509
    %v4850 = vpack.c.b16 %v4514, %v4510
    %v4851 = vpack.c.b16 %v4515, %v4511
    %v4852 = vpack.c.b16 %v4520, %v4516
    %v4853 = vpack.c.b16 %v4521, %v4517
    %v4854 = vpack.c.b16 %v4522, %v4518
    %v4855 = vpack.c.b16 %v4523, %v4519
    %v4856 = vpack.c.b16 %v4528, %v4524
    %v4857 = vpack.c.b16 %v4529, %v4525
    %v4858 = vpack.c.b16 %v4530, %v4526
    %v4859 = vpack.c.b16 %v4531, %v4527
    %v4860 = vpack.c.b16 %v4536, %v4532
    %v4861 = vpack.c.b16 %v4537, %v4533
    %v4862 = vpack.c.b16 %v4538, %v4534
    %v4863 = vpack.c.b16 %v4539, %v4535
    %v4864 = vpack.c.b16 %v4544, %v4540
    %v4865 = vpack.c.b16 %v4545, %v4541
    %v4866 = vpack.c.b16 %v4546, %v4542
    %v4867 = vpack.c.b16 %v4547, %v4543
    %v4868 = vpack.c.b16 %v4552, %v4548
    %v4869 = vpack.c.b16 %v4553, %v4549
    %v4870 = vpack.c.b16 %v4554, %v4550
    %v4871 = vpack.c.b16 %v4555, %v4551
    %v4872 = vpack.c.b16 %v4560, %v4556
    %v4873 = vpack.c.b16 %v4561, %v4557
    %v4874 = vpack.c.b16 %v4562, %v4558
    %v4875 = vpack.c.b16 %v4563, %v4559
    %v4876 = vpack.c.b16 %v4568, %v4564
    %v4877 = vpack.c.b16 %v4569, %v4565
    %v4878 = vpack.c.b16 %v4570, %v4566
    %v4879 = vpack.c.b16 %v4571, %v4567
    %v4880 = vpack.c.b16 %v4576, %v4572
    %v4881 = vpack.c.b16 %v4577, %v4573
    %v4882 = vpack.c.b16 %v4578, %v4574
    %v4883 = vpack.c.b16 %v4579, %v4575
    %v4884 = vpack.c.b16 %v4584, %v4580
    %v4885 = vpack.c.b16 %v4585, %v4581
    %v4886 = vpack.c.b16 %v4586, %v4582
    %v4887 = vpack.c.b16 %v4587, %v4583
    %v4888 = vpack.c.b16 %v4592, %v4588
    %v4889 = vpack.c.b16 %v4593, %v4589
    %v4890 = vpack.c.b16 %v4594, %v4590
    %v4891 = vpack.c.b16 %v4595, %v4591
    %v4892 = vpack.c.b16 %v4600, %v4596
    %v4893 = vpack.c.b16 %v4601, %v4597
    %v4894 = vpack.c.b16 %v4602, %v4598
    %v4895 = vpack.c.b16 %v4603, %v4599
    %v4896 = vpack.c.b16 %v4608, %v4604
    %v4897 = vpack.c.b16 %v4609, %v4605
    %v4898 = vpack.c.b16 %v4610, %v4606
    %v4899 = vpack.c.b16 %v4611, %v4607
    %v4900 = vpack.c.b16 %v4616, %v4612
    %v4901 = vpack.c.b16 %v4617, %v4613
    %v4902 = vpack.c.b16 %v4618, %v4614
    %v4903 = vpack.c.b16 %v4619, %v4615
    %v4904 = vpack.c.b16 %v4624, %v4620
    %v4905 = vpack.c.b16 %v4625, %v4621
    %v4906 = vpack.c.b16 %v4626, %v4622
    %v4907 = vpack.c.b16 %v4627, %v4623
    %v4908 = vpack.c.b16 %v4632, %v4628
    %v4909 = vpack.c.b16 %v4633, %v4629
    %v4910 = vpack.c.b16 %v4634, %v4630
    %v4911 = vpack.c.b16 %v4635, %v4631
    %v4912 = vpack.c.b16 %v4640, %v4636
    %v4913 = vpack.c.b16 %v4641, %v4637
    %v4914 = vpack.c.b16 %v4642, %v4638
    %v4915 = vpack.c.b16 %v4643, %v4639
    %v4916 = vpack.c.b16 %v4648, %v4644
    %v4917 = vpack.c.b16 %v4649, %v4645
    %v4918 = vpack.c.b16 %v4650, %v4646
    %v4919 = vpack.c.b16 %v4651, %v4647
    %v4920 = vpack.c.b16 %v4656, %v4652
    %v4921 = vpack.c.b16 %v4657, %v4653
    %v4922 = vpack.c.b16 %v4658, %v4654
    %v4923 = vpack.c.b16 %v4659, %v4655
    %v4924 = vpack.c.b16 %v4664, %v4660
    %v4925 = vpack.c.b16 %v4665, %v4661
    %v4926 = vpack.c.b16 %v4666, %v4662
    %v4927 = vpack.c.b16 %v4667, %v4663
    %v4928 = vpack.c.b16 %v4672, %v4668
    %v4929 = vpack.c.b16 %v4673, %v4669
    %v4930 = vpack.c.b16 %v4674, %v4670
    %v4931 = vpack.c.b16 %v4675, %v4671
    %5188 = vmatpush.bf16.msra.mxu0 %v4704
    %5189 = vmatpush.bf16.msra.mxu0 %v4700
    %5190 = vmatpush.bf16.msra.mxu0 %v4696
    %5191 = vmatpush.bf16.msra.mxu0 %v4692
    %5192 = vmatpush.bf16.msra.mxu0 %v4688
    %5193 = vmatpush.bf16.msra.mxu0 %v4684
    %5194 = vmatpush.bf16.msra.mxu0 %v4680
    %5195 = vmatpush.bf16.msra.mxu0 %v4676
    %5196 = vmatmul.bf16.gmra.mxu0 %v3634
    %v5197 = vpop.f32.mrf.mxu0
    %v5198 = vadd.f32 %v3900, %v5197
    %v5199 = vpop.f32.mrf.mxu0
    %5200 = vdwg.mxu0
    %5201 = vmatpush.bf16.msra.mxu0 %v4736
    %5202 = vmatpush.bf16.msra.mxu0 %v4732
    %5203 = vmatpush.bf16.msra.mxu0 %v4728
    %5204 = vmatpush.bf16.msra.mxu0 %v4724
    %5205 = vmatpush.bf16.msra.mxu0 %v4720
    %5206 = vmatpush.bf16.msra.mxu0 %v4716
    %5207 = vmatpush.bf16.msra.mxu0 %v4712
    %5208 = vmatpush.bf16.msra.mxu0 %v4708
    %5209 = vmatmul.bf16.gmra.mxu0 %v3635
    %v5210 = vpop.f32.mrf.mxu0
    %v5211 = vadd.f32 %v5198, %v5210
    %v5212 = vpop.f32.mrf.mxu0
    %5213 = vdwg.mxu0
    %5214 = vmatpush.bf16.msra.mxu0 %v4768
    %5215 = vmatpush.bf16.msra.mxu0 %v4764
    %5216 = vmatpush.bf16.msra.mxu0 %v4760
    %5217 = vmatpush.bf16.msra.mxu0 %v4756
    %5218 = vmatpush.bf16.msra.mxu0 %v4752
    %5219 = vmatpush.bf16.msra.mxu0 %v4748
    %5220 = vmatpush.bf16.msra.mxu0 %v4744
    %5221 = vmatpush.bf16.msra.mxu0 %v4740
    %5222 = vmatmul.bf16.gmra.mxu0 %v3636
    %v5223 = vpop.f32.mrf.mxu0
    %v5224 = vadd.f32 %v5211, %v5223
    %v5225 = vpop.f32.mrf.mxu0
    %5226 = vdwg.mxu0
    %5227 = vmatpush.bf16.msra.mxu0 %v4800
    %5228 = vmatpush.bf16.msra.mxu0 %v4796
    %5229 = vmatpush.bf16.msra.mxu0 %v4792
    %5230 = vmatpush.bf16.msra.mxu0 %v4788
    %5231 = vmatpush.bf16.msra.mxu0 %v4784
    %5232 = vmatpush.bf16.msra.mxu0 %v4780
    %5233 = vmatpush.bf16.msra.mxu0 %v4776
    %5234 = vmatpush.bf16.msra.mxu0 %v4772
    %5235 = vmatmul.bf16.gmra.mxu0 %v3637
    %v5236 = vpop.f32.mrf.mxu0
    %v5237 = vadd.f32 %v5224, %v5236
    %v5238 = vpop.f32.mrf.mxu0
    %5239 = vdwg.mxu0
    %5240 = vmatpush.bf16.msra.mxu0 %v4832
    %5241 = vmatpush.bf16.msra.mxu0 %v4828
    %5242 = vmatpush.bf16.msra.mxu0 %v4824
    %5243 = vmatpush.bf16.msra.mxu0 %v4820
    %5244 = vmatpush.bf16.msra.mxu0 %v4816
    %5245 = vmatpush.bf16.msra.mxu0 %v4812
    %5246 = vmatpush.bf16.msra.mxu0 %v4808
    %5247 = vmatpush.bf16.msra.mxu0 %v4804
    %5248 = vmatmul.bf16.gmra.mxu0 %v3638
    %v5249 = vpop.f32.mrf.mxu0
    %v5250 = vadd.f32 %v5237, %v5249
    %v5251 = vpop.f32.mrf.mxu0
    %5252 = vdwg.mxu0
    %5253 = vmatpush.bf16.msra.mxu0 %v4864
    %5254 = vmatpush.bf16.msra.mxu0 %v4860
    %5255 = vmatpush.bf16.msra.mxu0 %v4856
    %5256 = vmatpush.bf16.msra.mxu0 %v4852
    %5257 = vmatpush.bf16.msra.mxu0 %v4848
    %5258 = vmatpush.bf16.msra.mxu0 %v4844
    %5259 = vmatpush.bf16.msra.mxu0 %v4840
    %5260 = vmatpush.bf16.msra.mxu0 %v4836
    %5261 = vmatmul.bf16.gmra.mxu0 %v3639
    %v5262 = vpop.f32.mrf.mxu0
    %v5263 = vadd.f32 %v5250, %v5262
    %v5264 = vpop.f32.mrf.mxu0
    %5265 = vdwg.mxu0
    %5266 = vmatpush.bf16.msra.mxu0 %v4896
    %5267 = vmatpush.bf16.msra.mxu0 %v4892
    %5268 = vmatpush.bf16.msra.mxu0 %v4888
    %5269 = vmatpush.bf16.msra.mxu0 %v4884
    %5270 = vmatpush.bf16.msra.mxu0 %v4880
    %5271 = vmatpush.bf16.msra.mxu0 %v4876
    %5272 = vmatpush.bf16.msra.mxu0 %v4872
    %5273 = vmatpush.bf16.msra.mxu0 %v4868
    %5274 = vmatmul.bf16.gmra.mxu0 %v3640
    %v5275 = vpop.f32.mrf.mxu0
    %v5276 = vadd.f32 %v5263, %v5275
    %v5277 = vpop.f32.mrf.mxu0
    %5278 = vdwg.mxu0
    %5279 = vmatpush.bf16.msra.mxu0 %v4928
    %5280 = vmatpush.bf16.msra.mxu0 %v4924
    %5281 = vmatpush.bf16.msra.mxu0 %v4920
    %5282 = vmatpush.bf16.msra.mxu0 %v4916
    %5283 = vmatpush.bf16.msra.mxu0 %v4912
    %5284 = vmatpush.bf16.msra.mxu0 %v4908
    %5285 = vmatpush.bf16.msra.mxu0 %v4904
    %5286 = vmatpush.bf16.msra.mxu0 %v4900
    %5287 = vmatmul.bf16.gmra.mxu0 %v3641
    %v5288 = vpop.f32.mrf.mxu0
    %v5289 = vadd.f32 %v5276, %v5288
    %v5290 = vpop.f32.mrf.mxu0
    %5291 = vdwg.mxu0
    %5292 = vmatpush.bf16.msra.mxu0 %v4705
    %5293 = vmatpush.bf16.msra.mxu0 %v4701
    %5294 = vmatpush.bf16.msra.mxu0 %v4697
    %5295 = vmatpush.bf16.msra.mxu0 %v4693
    %5296 = vmatpush.bf16.msra.mxu0 %v4689
    %5297 = vmatpush.bf16.msra.mxu0 %v4685
    %5298 = vmatpush.bf16.msra.mxu0 %v4681
    %5299 = vmatpush.bf16.msra.mxu0 %v4677
    %5300 = vmatmul.bf16.gmra.mxu0 %v3634
    %v5301 = vpop.f32.mrf.mxu0
    %v5302 = vadd.f32 %v3901, %v5301
    %v5303 = vpop.f32.mrf.mxu0
    %5304 = vdwg.mxu0
    %5305 = vmatpush.bf16.msra.mxu0 %v4737
    %5306 = vmatpush.bf16.msra.mxu0 %v4733
    %5307 = vmatpush.bf16.msra.mxu0 %v4729
    %5308 = vmatpush.bf16.msra.mxu0 %v4725
    %5309 = vmatpush.bf16.msra.mxu0 %v4721
    %5310 = vmatpush.bf16.msra.mxu0 %v4717
    %5311 = vmatpush.bf16.msra.mxu0 %v4713
    %5312 = vmatpush.bf16.msra.mxu0 %v4709
    %5313 = vmatmul.bf16.gmra.mxu0 %v3635
    %v5314 = vpop.f32.mrf.mxu0
    %v5315 = vadd.f32 %v5302, %v5314
    %v5316 = vpop.f32.mrf.mxu0
    %5317 = vdwg.mxu0
    %5318 = vmatpush.bf16.msra.mxu0 %v4769
    %5319 = vmatpush.bf16.msra.mxu0 %v4765
    %5320 = vmatpush.bf16.msra.mxu0 %v4761
    %5321 = vmatpush.bf16.msra.mxu0 %v4757
    %5322 = vmatpush.bf16.msra.mxu0 %v4753
    %5323 = vmatpush.bf16.msra.mxu0 %v4749
    %5324 = vmatpush.bf16.msra.mxu0 %v4745
    %5325 = vmatpush.bf16.msra.mxu0 %v4741
    %5326 = vmatmul.bf16.gmra.mxu0 %v3636
    %v5327 = vpop.f32.mrf.mxu0
    %v5328 = vadd.f32 %v5315, %v5327
    %v5329 = vpop.f32.mrf.mxu0
    %5330 = vdwg.mxu0
    %5331 = vmatpush.bf16.msra.mxu0 %v4801
    %5332 = vmatpush.bf16.msra.mxu0 %v4797
    %5333 = vmatpush.bf16.msra.mxu0 %v4793
    %5334 = vmatpush.bf16.msra.mxu0 %v4789
    %5335 = vmatpush.bf16.msra.mxu0 %v4785
    %5336 = vmatpush.bf16.msra.mxu0 %v4781
    %5337 = vmatpush.bf16.msra.mxu0 %v4777
    %5338 = vmatpush.bf16.msra.mxu0 %v4773
    %5339 = vmatmul.bf16.gmra.mxu0 %v3637
    %v5340 = vpop.f32.mrf.mxu0
    %v5341 = vadd.f32 %v5328, %v5340
    %v5342 = vpop.f32.mrf.mxu0
    %5343 = vdwg.mxu0
    %5344 = vmatpush.bf16.msra.mxu0 %v4833
    %5345 = vmatpush.bf16.msra.mxu0 %v4829
    %5346 = vmatpush.bf16.msra.mxu0 %v4825
    %5347 = vmatpush.bf16.msra.mxu0 %v4821
    %5348 = vmatpush.bf16.msra.mxu0 %v4817
    %5349 = vmatpush.bf16.msra.mxu0 %v4813
    %5350 = vmatpush.bf16.msra.mxu0 %v4809
    %5351 = vmatpush.bf16.msra.mxu0 %v4805
    %5352 = vmatmul.bf16.gmra.mxu0 %v3638
    %v5353 = vpop.f32.mrf.mxu0
    %v5354 = vadd.f32 %v5341, %v5353
    %v5355 = vpop.f32.mrf.mxu0
    %5356 = vdwg.mxu0
    %5357 = vmatpush.bf16.msra.mxu0 %v4865
    %5358 = vmatpush.bf16.msra.mxu0 %v4861
    %5359 = vmatpush.bf16.msra.mxu0 %v4857
    %5360 = vmatpush.bf16.msra.mxu0 %v4853
    %5361 = vmatpush.bf16.msra.mxu0 %v4849
    %5362 = vmatpush.bf16.msra.mxu0 %v4845
    %5363 = vmatpush.bf16.msra.mxu0 %v4841
    %5364 = vmatpush.bf16.msra.mxu0 %v4837
    %5365 = vmatmul.bf16.gmra.mxu0 %v3639
    %v5366 = vpop.f32.mrf.mxu0
    %v5367 = vadd.f32 %v5354, %v5366
    %v5368 = vpop.f32.mrf.mxu0
    %5369 = vdwg.mxu0
    %5370 = vmatpush.bf16.msra.mxu0 %v4897
    %5371 = vmatpush.bf16.msra.mxu0 %v4893
    %5372 = vmatpush.bf16.msra.mxu0 %v4889
    %5373 = vmatpush.bf16.msra.mxu0 %v4885
    %5374 = vmatpush.bf16.msra.mxu0 %v4881
    %5375 = vmatpush.bf16.msra.mxu0 %v4877
    %5376 = vmatpush.bf16.msra.mxu0 %v4873
    %5377 = vmatpush.bf16.msra.mxu0 %v4869
    %5378 = vmatmul.bf16.gmra.mxu0 %v3640
    %v5379 = vpop.f32.mrf.mxu0
    %v5380 = vadd.f32 %v5367, %v5379
    %v5381 = vpop.f32.mrf.mxu0
    %5382 = vdwg.mxu0
    %5383 = vmatpush.bf16.msra.mxu0 %v4929
    %5384 = vmatpush.bf16.msra.mxu0 %v4925
    %5385 = vmatpush.bf16.msra.mxu0 %v4921
    %5386 = vmatpush.bf16.msra.mxu0 %v4917
    %5387 = vmatpush.bf16.msra.mxu0 %v4913
    %5388 = vmatpush.bf16.msra.mxu0 %v4909
    %5389 = vmatpush.bf16.msra.mxu0 %v4905
    %5390 = vmatpush.bf16.msra.mxu0 %v4901
    %5391 = vmatmul.bf16.gmra.mxu0 %v3641
    %v5392 = vpop.f32.mrf.mxu0
    %v5393 = vadd.f32 %v5380, %v5392
    %v5394 = vpop.f32.mrf.mxu0
    %5395 = vdwg.mxu0
    %5396 = vmatpush.bf16.msra.mxu0 %v4706
    %5397 = vmatpush.bf16.msra.mxu0 %v4702
    %5398 = vmatpush.bf16.msra.mxu0 %v4698
    %5399 = vmatpush.bf16.msra.mxu0 %v4694
    %5400 = vmatpush.bf16.msra.mxu0 %v4690
    %5401 = vmatpush.bf16.msra.mxu0 %v4686
    %5402 = vmatpush.bf16.msra.mxu0 %v4682
    %5403 = vmatpush.bf16.msra.mxu0 %v4678
    %5404 = vmatmul.bf16.gmra.mxu0 %v3634
    %v5405 = vpop.f32.mrf.mxu0
    %v5406 = vadd.f32 %v3902, %v5405
    %v5407 = vpop.f32.mrf.mxu0
    %5408 = vdwg.mxu0
    %5409 = vmatpush.bf16.msra.mxu0 %v4738
    %5410 = vmatpush.bf16.msra.mxu0 %v4734
    %5411 = vmatpush.bf16.msra.mxu0 %v4730
    %5412 = vmatpush.bf16.msra.mxu0 %v4726
    %5413 = vmatpush.bf16.msra.mxu0 %v4722
    %5414 = vmatpush.bf16.msra.mxu0 %v4718
    %5415 = vmatpush.bf16.msra.mxu0 %v4714
    %5416 = vmatpush.bf16.msra.mxu0 %v4710
    %5417 = vmatmul.bf16.gmra.mxu0 %v3635
    %v5418 = vpop.f32.mrf.mxu0
    %v5419 = vadd.f32 %v5406, %v5418
    %v5420 = vpop.f32.mrf.mxu0
    %5421 = vdwg.mxu0
    %5422 = vmatpush.bf16.msra.mxu0 %v4770
    %5423 = vmatpush.bf16.msra.mxu0 %v4766
    %5424 = vmatpush.bf16.msra.mxu0 %v4762
    %5425 = vmatpush.bf16.msra.mxu0 %v4758
    %5426 = vmatpush.bf16.msra.mxu0 %v4754
    %5427 = vmatpush.bf16.msra.mxu0 %v4750
    %5428 = vmatpush.bf16.msra.mxu0 %v4746
    %5429 = vmatpush.bf16.msra.mxu0 %v4742
    %5430 = vmatmul.bf16.gmra.mxu0 %v3636
    %v5431 = vpop.f32.mrf.mxu0
    %v5432 = vadd.f32 %v5419, %v5431
    %v5433 = vpop.f32.mrf.mxu0
    %5434 = vdwg.mxu0
    %5435 = vmatpush.bf16.msra.mxu0 %v4802
    %5436 = vmatpush.bf16.msra.mxu0 %v4798
    %5437 = vmatpush.bf16.msra.mxu0 %v4794
    %5438 = vmatpush.bf16.msra.mxu0 %v4790
    %5439 = vmatpush.bf16.msra.mxu0 %v4786
    %5440 = vmatpush.bf16.msra.mxu0 %v4782
    %5441 = vmatpush.bf16.msra.mxu0 %v4778
    %5442 = vmatpush.bf16.msra.mxu0 %v4774
    %5443 = vmatmul.bf16.gmra.mxu0 %v3637
    %v5444 = vpop.f32.mrf.mxu0
    %v5445 = vadd.f32 %v5432, %v5444
    %v5446 = vpop.f32.mrf.mxu0
    %5447 = vdwg.mxu0
    %5448 = vmatpush.bf16.msra.mxu0 %v4834
    %5449 = vmatpush.bf16.msra.mxu0 %v4830
    %5450 = vmatpush.bf16.msra.mxu0 %v4826
    %5451 = vmatpush.bf16.msra.mxu0 %v4822
    %5452 = vmatpush.bf16.msra.mxu0 %v4818
    %5453 = vmatpush.bf16.msra.mxu0 %v4814
    %5454 = vmatpush.bf16.msra.mxu0 %v4810
    %5455 = vmatpush.bf16.msra.mxu0 %v4806
    %5456 = vmatmul.bf16.gmra.mxu0 %v3638
    %v5457 = vpop.f32.mrf.mxu0
    %v5458 = vadd.f32 %v5445, %v5457
    %v5459 = vpop.f32.mrf.mxu0
    %5460 = vdwg.mxu0
    %5461 = vmatpush.bf16.msra.mxu0 %v4866
    %5462 = vmatpush.bf16.msra.mxu0 %v4862
    %5463 = vmatpush.bf16.msra.mxu0 %v4858
    %5464 = vmatpush.bf16.msra.mxu0 %v4854
    %5465 = vmatpush.bf16.msra.mxu0 %v4850
    %5466 = vmatpush.bf16.msra.mxu0 %v4846
    %5467 = vmatpush.bf16.msra.mxu0 %v4842
    %5468 = vmatpush.bf16.msra.mxu0 %v4838
    %5469 = vmatmul.bf16.gmra.mxu0 %v3639
    %v5470 = vpop.f32.mrf.mxu0
    %v5471 = vadd.f32 %v5458, %v5470
    %v5472 = vpop.f32.mrf.mxu0
    %5473 = vdwg.mxu0
    %5474 = vmatpush.bf16.msra.mxu0 %v4898
    %5475 = vmatpush.bf16.msra.mxu0 %v4894
    %5476 = vmatpush.bf16.msra.mxu0 %v4890
    %5477 = vmatpush.bf16.msra.mxu0 %v4886
    %5478 = vmatpush.bf16.msra.mxu0 %v4882
    %5479 = vmatpush.bf16.msra.mxu0 %v4878
    %5480 = vmatpush.bf16.msra.mxu0 %v4874
    %5481 = vmatpush.bf16.msra.mxu0 %v4870
    %5482 = vmatmul.bf16.gmra.mxu0 %v3640
    %v5483 = vpop.f32.mrf.mxu0
    %v5484 = vadd.f32 %v5471, %v5483
    %v5485 = vpop.f32.mrf.mxu0
    %5486 = vdwg.mxu0
    %5487 = vmatpush.bf16.msra.mxu0 %v4930
    %5488 = vmatpush.bf16.msra.mxu0 %v4926
    %5489 = vmatpush.bf16.msra.mxu0 %v4922
    %5490 = vmatpush.bf16.msra.mxu0 %v4918
    %5491 = vmatpush.bf16.msra.mxu0 %v4914
    %5492 = vmatpush.bf16.msra.mxu0 %v4910
    %5493 = vmatpush.bf16.msra.mxu0 %v4906
    %5494 = vmatpush.bf16.msra.mxu0 %v4902
    %5495 = vmatmul.bf16.gmra.mxu0 %v3641
    %v5496 = vpop.f32.mrf.mxu0
    %v5497 = vadd.f32 %v5484, %v5496
    %v5498 = vpop.f32.mrf.mxu0
    %5499 = vdwg.mxu0
    %5500 = vmatpush.bf16.msra.mxu0 %v4707
    %5501 = vmatpush.bf16.msra.mxu0 %v4703
    %5502 = vmatpush.bf16.msra.mxu0 %v4699
    %5503 = vmatpush.bf16.msra.mxu0 %v4695
    %5504 = vmatpush.bf16.msra.mxu0 %v4691
    %5505 = vmatpush.bf16.msra.mxu0 %v4687
    %5506 = vmatpush.bf16.msra.mxu0 %v4683
    %5507 = vmatpush.bf16.msra.mxu0 %v4679
    %5508 = vmatmul.bf16.gmra.mxu0 %v3634
    %v5509 = vpop.f32.mrf.mxu0
    %v5510 = vadd.f32 %v3903, %v5509
    %v5511 = vpop.f32.mrf.mxu0
    %5512 = vdwg.mxu0
    %5513 = vmatpush.bf16.msra.mxu0 %v4739
    %5514 = vmatpush.bf16.msra.mxu0 %v4735
    %5515 = vmatpush.bf16.msra.mxu0 %v4731
    %5516 = vmatpush.bf16.msra.mxu0 %v4727
    %5517 = vmatpush.bf16.msra.mxu0 %v4723
    %5518 = vmatpush.bf16.msra.mxu0 %v4719
    %5519 = vmatpush.bf16.msra.mxu0 %v4715
    %5520 = vmatpush.bf16.msra.mxu0 %v4711
    %5521 = vmatmul.bf16.gmra.mxu0 %v3635
    %v5522 = vpop.f32.mrf.mxu0
    %v5523 = vadd.f32 %v5510, %v5522
    %v5524 = vpop.f32.mrf.mxu0
    %5525 = vdwg.mxu0
    %5526 = vmatpush.bf16.msra.mxu0 %v4771
    %5527 = vmatpush.bf16.msra.mxu0 %v4767
    %5528 = vmatpush.bf16.msra.mxu0 %v4763
    %5529 = vmatpush.bf16.msra.mxu0 %v4759
    %5530 = vmatpush.bf16.msra.mxu0 %v4755
    %5531 = vmatpush.bf16.msra.mxu0 %v4751
    %5532 = vmatpush.bf16.msra.mxu0 %v4747
    %5533 = vmatpush.bf16.msra.mxu0 %v4743
    %5534 = vmatmul.bf16.gmra.mxu0 %v3636
    %v5535 = vpop.f32.mrf.mxu0
    %v5536 = vadd.f32 %v5523, %v5535
    %v5537 = vpop.f32.mrf.mxu0
    %5538 = vdwg.mxu0
    %5539 = vmatpush.bf16.msra.mxu0 %v4803
    %5540 = vmatpush.bf16.msra.mxu0 %v4799
    %5541 = vmatpush.bf16.msra.mxu0 %v4795
    %5542 = vmatpush.bf16.msra.mxu0 %v4791
    %5543 = vmatpush.bf16.msra.mxu0 %v4787
    %5544 = vmatpush.bf16.msra.mxu0 %v4783
    %5545 = vmatpush.bf16.msra.mxu0 %v4779
    %5546 = vmatpush.bf16.msra.mxu0 %v4775
    %5547 = vmatmul.bf16.gmra.mxu0 %v3637
    %v5548 = vpop.f32.mrf.mxu0
    %v5549 = vadd.f32 %v5536, %v5548
    %v5550 = vpop.f32.mrf.mxu0
    %5551 = vdwg.mxu0
    %5552 = vmatpush.bf16.msra.mxu0 %v4835
    %5553 = vmatpush.bf16.msra.mxu0 %v4831
    %5554 = vmatpush.bf16.msra.mxu0 %v4827
    %5555 = vmatpush.bf16.msra.mxu0 %v4823
    %5556 = vmatpush.bf16.msra.mxu0 %v4819
    %5557 = vmatpush.bf16.msra.mxu0 %v4815
    %5558 = vmatpush.bf16.msra.mxu0 %v4811
    %5559 = vmatpush.bf16.msra.mxu0 %v4807
    %5560 = vmatmul.bf16.gmra.mxu0 %v3638
    %v5561 = vpop.f32.mrf.mxu0
    %v5562 = vadd.f32 %v5549, %v5561
    %v5563 = vpop.f32.mrf.mxu0
    %5564 = vdwg.mxu0
    %5565 = vmatpush.bf16.msra.mxu0 %v4867
    %5566 = vmatpush.bf16.msra.mxu0 %v4863
    %5567 = vmatpush.bf16.msra.mxu0 %v4859
    %5568 = vmatpush.bf16.msra.mxu0 %v4855
    %5569 = vmatpush.bf16.msra.mxu0 %v4851
    %5570 = vmatpush.bf16.msra.mxu0 %v4847
    %5571 = vmatpush.bf16.msra.mxu0 %v4843
    %5572 = vmatpush.bf16.msra.mxu0 %v4839
    %5573 = vmatmul.bf16.gmra.mxu0 %v3639
    %v5574 = vpop.f32.mrf.mxu0
    %v5575 = vadd.f32 %v5562, %v5574
    %v5576 = vpop.f32.mrf.mxu0
    %5577 = vdwg.mxu0
    %5578 = vmatpush.bf16.msra.mxu0 %v4899
    %5579 = vmatpush.bf16.msra.mxu0 %v4895
    %5580 = vmatpush.bf16.msra.mxu0 %v4891
    %5581 = vmatpush.bf16.msra.mxu0 %v4887
    %5582 = vmatpush.bf16.msra.mxu0 %v4883
    %5583 = vmatpush.bf16.msra.mxu0 %v4879
    %5584 = vmatpush.bf16.msra.mxu0 %v4875
    %5585 = vmatpush.bf16.msra.mxu0 %v4871
    %5586 = vmatmul.bf16.gmra.mxu0 %v3640
    %v5587 = vpop.f32.mrf.mxu0
    %v5588 = vadd.f32 %v5575, %v5587
    %v5589 = vpop.f32.mrf.mxu0
    %5590 = vdwg.mxu0
    %5591 = vmatpush.bf16.msra.mxu0 %v4931
    %5592 = vmatpush.bf16.msra.mxu0 %v4927
    %5593 = vmatpush.bf16.msra.mxu0 %v4923
    %5594 = vmatpush.bf16.msra.mxu0 %v4919
    %5595 = vmatpush.bf16.msra.mxu0 %v4915
    %5596 = vmatpush.bf16.msra.mxu0 %v4911
    %5597 = vmatpush.bf16.msra.mxu0 %v4907
    %5598 = vmatpush.bf16.msra.mxu0 %v4903
    %5599 = vmatmul.bf16.gmra.mxu0 %v3641
    %v5600 = vpop.f32.mrf.mxu0
    %v5601 = vadd.f32 %v5588, %v5600
    %v5602 = vpop.f32.mrf.mxu0
    %5603 = vdwg.mxu0
    %v5604 = vmax.f32 %v5289, 0.0
    %v5605 = vmax.f32 %v5393, 0.0
    %v5606 = vmax.f32 %v5497, 0.0
    %v5607 = vmax.f32 %v5601, 0.0
    %v5608 = vpack.c.bf16 %v5604, %v5604
    %v5609 = vpack.c.bf16 %v5605, %v5605
    %v5610 = vpack.c.bf16 %v5606, %v5606
    %v5611 = vpack.c.bf16 %v5607, %v5607
    %v5612 = vld [vmem:[#allocation11] sm:$0xff]
    %v5613 = vld [vmem:[#allocation11 + $0x8] sm:$0xff]
    %v5614 = vld [vmem:[#allocation11 + $0x10] sm:$0xff]
    %v5615 = vld [vmem:[#allocation11 + $0x18] sm:$0xff]
    %v5616 = vld [vmem:[#allocation11 + $0x20] sm:$0xff]
    %v5617 = vld [vmem:[#allocation11 + $0x28] sm:$0xff]
    %v5618 = vld [vmem:[#allocation11 + $0x30] sm:$0xff]
    %v5619 = vld [vmem:[#allocation11 + $0x38] sm:$0xff]
    %v5620 = vld [vmem:[#allocation11 + $0x40] sm:$0xff]
    %v5621 = vld [vmem:[#allocation11 + $0x48] sm:$0xff]
    %v5622 = vld [vmem:[#allocation11 + $0x50] sm:$0xff]
    %v5623 = vld [vmem:[#allocation11 + $0x58] sm:$0xff]
    %v5624 = vld [vmem:[#allocation11 + $0x60] sm:$0xff]
    %v5625 = vld [vmem:[#allocation11 + $0x68] sm:$0xff]
    %v5626 = vld [vmem:[#allocation11 + $0x70] sm:$0xff]
    %v5627 = vld [vmem:[#allocation11 + $0x78] sm:$0xff]
    %v5628 = vld [vmem:[#allocation11 + $0x80] sm:$0xff]
    %v5629 = vld [vmem:[#allocation11 + $0x88] sm:$0xff]
    %v5630 = vld [vmem:[#allocation11 + $0x90] sm:$0xff]
    %v5631 = vld [vmem:[#allocation11 + $0x98] sm:$0xff]
    %v5632 = vld [vmem:[#allocation11 + $0xa0] sm:$0xff]
    %v5633 = vld [vmem:[#allocation11 + $0xa8] sm:$0xff]
    %v5634 = vld [vmem:[#allocation11 + $0xb0] sm:$0xff]
    %v5635 = vld [vmem:[#allocation11 + $0xb8] sm:$0xff]
    %v5636 = vld [vmem:[#allocation11 + $0xc0] sm:$0xff]
    %v5637 = vld [vmem:[#allocation11 + $0xc8] sm:$0xff]
    %v5638 = vld [vmem:[#allocation11 + $0xd0] sm:$0xff]
    %v5639 = vld [vmem:[#allocation11 + $0xd8] sm:$0xff]
    %v5640 = vld [vmem:[#allocation11 + $0xe0] sm:$0xff]
    %v5641 = vld [vmem:[#allocation11 + $0xe8] sm:$0xff]
    %v5642 = vld [vmem:[#allocation11 + $0xf0] sm:$0xff]
    %v5643 = vld [vmem:[#allocation11 + $0xf8] sm:$0xff]
    %v5644 = vld [vmem:[#allocation11 + $0x100] sm:$0xff]
    %v5645 = vld [vmem:[#allocation11 + $0x108] sm:$0xff]
    %v5646 = vld [vmem:[#allocation11 + $0x110] sm:$0xff]
    %v5647 = vld [vmem:[#allocation11 + $0x118] sm:$0xff]
    %v5648 = vld [vmem:[#allocation11 + $0x120] sm:$0xff]
    %v5649 = vld [vmem:[#allocation11 + $0x128] sm:$0xff]
    %v5650 = vld [vmem:[#allocation11 + $0x130] sm:$0xff]
    %v5651 = vld [vmem:[#allocation11 + $0x138] sm:$0xff]
    %v5652 = vld [vmem:[#allocation11 + $0x140] sm:$0xff]
    %v5653 = vld [vmem:[#allocation11 + $0x148] sm:$0xff]
    %v5654 = vld [vmem:[#allocation11 + $0x150] sm:$0xff]
    %v5655 = vld [vmem:[#allocation11 + $0x158] sm:$0xff]
    %v5656 = vld [vmem:[#allocation11 + $0x160] sm:$0xff]
    %v5657 = vld [vmem:[#allocation11 + $0x168] sm:$0xff]
    %v5658 = vld [vmem:[#allocation11 + $0x170] sm:$0xff]
    %v5659 = vld [vmem:[#allocation11 + $0x178] sm:$0xff]
    %v5660 = vld [vmem:[#allocation11 + $0x180] sm:$0xff]
    %v5661 = vld [vmem:[#allocation11 + $0x188] sm:$0xff]
    %v5662 = vld [vmem:[#allocation11 + $0x190] sm:$0xff]
    %v5663 = vld [vmem:[#allocation11 + $0x198] sm:$0xff]
    %v5664 = vld [vmem:[#allocation11 + $0x1a0] sm:$0xff]
    %v5665 = vld [vmem:[#allocation11 + $0x1a8] sm:$0xff]
    %v5666 = vld [vmem:[#allocation11 + $0x1b0] sm:$0xff]
    %v5667 = vld [vmem:[#allocation11 + $0x1b8] sm:$0xff]
    %v5668 = vld [vmem:[#allocation11 + $0x1c0] sm:$0xff]
    %v5669 = vld [vmem:[#allocation11 + $0x1c8] sm:$0xff]
    %v5670 = vld [vmem:[#allocation11 + $0x1d0] sm:$0xff]
    %v5671 = vld [vmem:[#allocation11 + $0x1d8] sm:$0xff]
    %v5672 = vld [vmem:[#allocation11 + $0x1e0] sm:$0xff]
    %v5673 = vld [vmem:[#allocation11 + $0x1e8] sm:$0xff]
    %v5674 = vld [vmem:[#allocation11 + $0x1f0] sm:$0xff]
    %v5675 = vld [vmem:[#allocation11 + $0x1f8] sm:$0xff]
    %v5676 = vld [vmem:[#allocation13] sm:$0x3]
    %v5678 = vperm.slane %v5676, 0
    %v5679 = vperm.slane %v5676, 1
    %v5746 = vunpack.c.l.b16 %v5612
    %v5747 = vunpack.c.h.b16 %v5612
    %v5748 = vunpack.c.l.b16 %v5613
    %v5749 = vunpack.c.h.b16 %v5613
    %v5750 = vunpack.c.l.b16 %v5614
    %v5751 = vunpack.c.h.b16 %v5614
    %v5752 = vunpack.c.l.b16 %v5615
    %v5753 = vunpack.c.h.b16 %v5615
    %v5754 = vunpack.c.l.b16 %v5616
    %v5755 = vunpack.c.h.b16 %v5616
    %v5756 = vunpack.c.l.b16 %v5617
    %v5757 = vunpack.c.h.b16 %v5617
    %v5758 = vunpack.c.l.b16 %v5618
    %v5759 = vunpack.c.h.b16 %v5618
    %v5760 = vunpack.c.l.b16 %v5619
    %v5761 = vunpack.c.h.b16 %v5619
    %v5762 = vunpack.c.l.b16 %v5620
    %v5763 = vunpack.c.h.b16 %v5620
    %v5764 = vunpack.c.l.b16 %v5621
    %v5765 = vunpack.c.h.b16 %v5621
    %v5766 = vunpack.c.l.b16 %v5622
    %v5767 = vunpack.c.h.b16 %v5622
    %v5768 = vunpack.c.l.b16 %v5623
    %v5769 = vunpack.c.h.b16 %v5623
    %v5770 = vunpack.c.l.b16 %v5624
    %v5771 = vunpack.c.h.b16 %v5624
    %v5772 = vunpack.c.l.b16 %v5625
    %v5773 = vunpack.c.h.b16 %v5625
    %v5774 = vunpack.c.l.b16 %v5626
    %v5775 = vunpack.c.h.b16 %v5626
    %v5776 = vunpack.c.l.b16 %v5627
    %v5777 = vunpack.c.h.b16 %v5627
    %v5778 = vunpack.c.l.b16 %v5628
    %v5779 = vunpack.c.h.b16 %v5628
    %v5780 = vunpack.c.l.b16 %v5629
    %v5781 = vunpack.c.h.b16 %v5629
    %v5782 = vunpack.c.l.b16 %v5630
    %v5783 = vunpack.c.h.b16 %v5630
    %v5784 = vunpack.c.l.b16 %v5631
    %v5785 = vunpack.c.h.b16 %v5631
    %v5786 = vunpack.c.l.b16 %v5632
    %v5787 = vunpack.c.h.b16 %v5632
    %v5788 = vunpack.c.l.b16 %v5633
    %v5789 = vunpack.c.h.b16 %v5633
    %v5790 = vunpack.c.l.b16 %v5634
    %v5791 = vunpack.c.h.b16 %v5634
    %v5792 = vunpack.c.l.b16 %v5635
    %v5793 = vunpack.c.h.b16 %v5635
    %v5794 = vunpack.c.l.b16 %v5636
    %v5795 = vunpack.c.h.b16 %v5636
    %v5796 = vunpack.c.l.b16 %v5637
    %v5797 = vunpack.c.h.b16 %v5637
    %v5798 = vunpack.c.l.b16 %v5638
    %v5799 = vunpack.c.h.b16 %v5638
    %v5800 = vunpack.c.l.b16 %v5639
    %v5801 = vunpack.c.h.b16 %v5639
    %v5802 = vunpack.c.l.b16 %v5640
    %v5803 = vunpack.c.h.b16 %v5640
    %v5804 = vunpack.c.l.b16 %v5641
    %v5805 = vunpack.c.h.b16 %v5641
    %v5806 = vunpack.c.l.b16 %v5642
    %v5807 = vunpack.c.h.b16 %v5642
    %v5808 = vunpack.c.l.b16 %v5643
    %v5809 = vunpack.c.h.b16 %v5643
    %v5810 = vunpack.c.l.b16 %v5644
    %v5811 = vunpack.c.h.b16 %v5644
    %v5812 = vunpack.c.l.b16 %v5645
    %v5813 = vunpack.c.h.b16 %v5645
    %v5814 = vunpack.c.l.b16 %v5646
    %v5815 = vunpack.c.h.b16 %v5646
    %v5816 = vunpack.c.l.b16 %v5647
    %v5817 = vunpack.c.h.b16 %v5647
    %v5818 = vunpack.c.l.b16 %v5648
    %v5819 = vunpack.c.h.b16 %v5648
    %v5820 = vunpack.c.l.b16 %v5649
    %v5821 = vunpack.c.h.b16 %v5649
    %v5822 = vunpack.c.l.b16 %v5650
    %v5823 = vunpack.c.h.b16 %v5650
    %v5824 = vunpack.c.l.b16 %v5651
    %v5825 = vunpack.c.h.b16 %v5651
    %v5826 = vunpack.c.l.b16 %v5652
    %v5827 = vunpack.c.h.b16 %v5652
    %v5828 = vunpack.c.l.b16 %v5653
    %v5829 = vunpack.c.h.b16 %v5653
    %v5830 = vunpack.c.l.b16 %v5654
    %v5831 = vunpack.c.h.b16 %v5654
    %v5832 = vunpack.c.l.b16 %v5655
    %v5833 = vunpack.c.h.b16 %v5655
    %v5834 = vunpack.c.l.b16 %v5656
    %v5835 = vunpack.c.h.b16 %v5656
    %v5836 = vunpack.c.l.b16 %v5657
    %v5837 = vunpack.c.h.b16 %v5657
    %v5838 = vunpack.c.l.b16 %v5658
    %v5839 = vunpack.c.h.b16 %v5658
    %v5840 = vunpack.c.l.b16 %v5659
    %v5841 = vunpack.c.h.b16 %v5659
    %v5842 = vunpack.c.l.b16 %v5660
    %v5843 = vunpack.c.h.b16 %v5660
    %v5844 = vunpack.c.l.b16 %v5661
    %v5845 = vunpack.c.h.b16 %v5661
    %v5846 = vunpack.c.l.b16 %v5662
    %v5847 = vunpack.c.h.b16 %v5662
    %v5848 = vunpack.c.l.b16 %v5663
    %v5849 = vunpack.c.h.b16 %v5663
    %v5850 = vunpack.c.l.b16 %v5664
    %v5851 = vunpack.c.h.b16 %v5664
    %v5852 = vunpack.c.l.b16 %v5665
    %v5853 = vunpack.c.h.b16 %v5665
    %v5854 = vunpack.c.l.b16 %v5666
    %v5855 = vunpack.c.h.b16 %v5666
    %v5856 = vunpack.c.l.b16 %v5667
    %v5857 = vunpack.c.h.b16 %v5667
    %v5858 = vunpack.c.l.b16 %v5668
    %v5859 = vunpack.c.h.b16 %v5668
    %v5860 = vunpack.c.l.b16 %v5669
    %v5861 = vunpack.c.h.b16 %v5669
    %v5862 = vunpack.c.l.b16 %v5670
    %v5863 = vunpack.c.h.b16 %v5670
    %v5864 = vunpack.c.l.b16 %v5671
    %v5865 = vunpack.c.h.b16 %v5671
    %v5866 = vunpack.c.l.b16 %v5672
    %v5867 = vunpack.c.h.b16 %v5672
    %v5868 = vunpack.c.l.b16 %v5673
    %v5869 = vunpack.c.h.b16 %v5673
    %v5870 = vunpack.c.l.b16 %v5674
    %v5871 = vunpack.c.h.b16 %v5674
    %v5872 = vunpack.c.l.b16 %v5675
    %v5873 = vunpack.c.h.b16 %v5675
    %v5874 = vpack.c.b16 %v5748, %v5746
    %v5875 = vpack.c.b16 %v5749, %v5747
    %v5876 = vpack.c.b16 %v5752, %v5750
    %v5877 = vpack.c.b16 %v5753, %v5751
    %v5878 = vpack.c.b16 %v5756, %v5754
    %v5879 = vpack.c.b16 %v5757, %v5755
    %v5880 = vpack.c.b16 %v5760, %v5758
    %v5881 = vpack.c.b16 %v5761, %v5759
    %v5882 = vpack.c.b16 %v5764, %v5762
    %v5883 = vpack.c.b16 %v5765, %v5763
    %v5884 = vpack.c.b16 %v5768, %v5766
    %v5885 = vpack.c.b16 %v5769, %v5767
    %v5886 = vpack.c.b16 %v5772, %v5770
    %v5887 = vpack.c.b16 %v5773, %v5771
    %v5888 = vpack.c.b16 %v5776, %v5774
    %v5889 = vpack.c.b16 %v5777, %v5775
    %v5890 = vpack.c.b16 %v5780, %v5778
    %v5891 = vpack.c.b16 %v5781, %v5779
    %v5892 = vpack.c.b16 %v5784, %v5782
    %v5893 = vpack.c.b16 %v5785, %v5783
    %v5894 = vpack.c.b16 %v5788, %v5786
    %v5895 = vpack.c.b16 %v5789, %v5787
    %v5896 = vpack.c.b16 %v5792, %v5790
    %v5897 = vpack.c.b16 %v5793, %v5791
    %v5898 = vpack.c.b16 %v5796, %v5794
    %v5899 = vpack.c.b16 %v5797, %v5795
    %v5900 = vpack.c.b16 %v5800, %v5798
    %v5901 = vpack.c.b16 %v5801, %v5799
    %v5902 = vpack.c.b16 %v5804, %v5802
    %v5903 = vpack.c.b16 %v5805, %v5803
    %v5904 = vpack.c.b16 %v5808, %v5806
    %v5905 = vpack.c.b16 %v5809, %v5807
    %v5906 = vpack.c.b16 %v5812, %v5810
    %v5907 = vpack.c.b16 %v5813, %v5811
    %v5908 = vpack.c.b16 %v5816, %v5814
    %v5909 = vpack.c.b16 %v5817, %v5815
    %v5910 = vpack.c.b16 %v5820, %v5818
    %v5911 = vpack.c.b16 %v5821, %v5819
    %v5912 = vpack.c.b16 %v5824, %v5822
    %v5913 = vpack.c.b16 %v5825, %v5823
    %v5914 = vpack.c.b16 %v5828, %v5826
    %v5915 = vpack.c.b16 %v5829, %v5827
    %v5916 = vpack.c.b16 %v5832, %v5830
    %v5917 = vpack.c.b16 %v5833, %v5831
    %v5918 = vpack.c.b16 %v5836, %v5834
    %v5919 = vpack.c.b16 %v5837, %v5835
    %v5920 = vpack.c.b16 %v5840, %v5838
    %v5921 = vpack.c.b16 %v5841, %v5839
    %v5922 = vpack.c.b16 %v5844, %v5842
    %v5923 = vpack.c.b16 %v5845, %v5843
    %v5924 = vpack.c.b16 %v5848, %v5846
    %v5925 = vpack.c.b16 %v5849, %v5847
    %v5926 = vpack.c.b16 %v5852, %v5850
    %v5927 = vpack.c.b16 %v5853, %v5851
    %v5928 = vpack.c.b16 %v5856, %v5854
    %v5929 = vpack.c.b16 %v5857, %v5855
    %v5930 = vpack.c.b16 %v5860, %v5858
    %v5931 = vpack.c.b16 %v5861, %v5859
    %v5932 = vpack.c.b16 %v5864, %v5862
    %v5933 = vpack.c.b16 %v5865, %v5863
    %v5934 = vpack.c.b16 %v5868, %v5866
    %v5935 = vpack.c.b16 %v5869, %v5867
    %v5936 = vpack.c.b16 %v5872, %v5870
    %v5937 = vpack.c.b16 %v5873, %v5871
    %6002 = vmatpush.bf16.msra.mxu0 %v5888
    %6003 = vmatpush.bf16.msra.mxu0 %v5886
    %6004 = vmatpush.bf16.msra.mxu0 %v5884
    %6005 = vmatpush.bf16.msra.mxu0 %v5882
    %6006 = vmatpush.bf16.msra.mxu0 %v5880
    %6007 = vmatpush.bf16.msra.mxu0 %v5878
    %6008 = vmatpush.bf16.msra.mxu0 %v5876
    %6009 = vmatpush.bf16.msra.mxu0 %v5874
    %6010 = vmatmul.bf16.gmra.mxu0 %v5608
    %v6011 = vpop.f32.mrf.mxu0
    %v6012 = vadd.f32 %v5678, %v6011
    %v6013 = vpop.f32.mrf.mxu0
    %6014 = vdwg.mxu0
    %6015 = vmatpush.bf16.msra.mxu0 %v5904
    %6016 = vmatpush.bf16.msra.mxu0 %v5902
    %6017 = vmatpush.bf16.msra.mxu0 %v5900
    %6018 = vmatpush.bf16.msra.mxu0 %v5898
    %6019 = vmatpush.bf16.msra.mxu0 %v5896
    %6020 = vmatpush.bf16.msra.mxu0 %v5894
    %6021 = vmatpush.bf16.msra.mxu0 %v5892
    %6022 = vmatpush.bf16.msra.mxu0 %v5890
    %6023 = vmatmul.bf16.gmra.mxu0 %v5609
    %v6024 = vpop.f32.mrf.mxu0
    %v6025 = vadd.f32 %v6012, %v6024
    %v6026 = vpop.f32.mrf.mxu0
    %6027 = vdwg.mxu0
    %6028 = vmatpush.bf16.msra.mxu0 %v5920
    %6029 = vmatpush.bf16.msra.mxu0 %v5918
    %6030 = vmatpush.bf16.msra.mxu0 %v5916
    %6031 = vmatpush.bf16.msra.mxu0 %v5914
    %6032 = vmatpush.bf16.msra.mxu0 %v5912
    %6033 = vmatpush.bf16.msra.mxu0 %v5910
    %6034 = vmatpush.bf16.msra.mxu0 %v5908
    %6035 = vmatpush.bf16.msra.mxu0 %v5906
    %6036 = vmatmul.bf16.gmra.mxu0 %v5610
    %v6037 = vpop.f32.mrf.mxu0
    %v6038 = vadd.f32 %v6025, %v6037
    %v6039 = vpop.f32.mrf.mxu0
    %6040 = vdwg.mxu0
    %6041 = vmatpush.bf16.msra.mxu0 %v5936
    %6042 = vmatpush.bf16.msra.mxu0 %v5934
    %6043 = vmatpush.bf16.msra.mxu0 %v5932
    %6044 = vmatpush.bf16.msra.mxu0 %v5930
    %6045 = vmatpush.bf16.msra.mxu0 %v5928
    %6046 = vmatpush.bf16.msra.mxu0 %v5926
    %6047 = vmatpush.bf16.msra.mxu0 %v5924
    %6048 = vmatpush.bf16.msra.mxu0 %v5922
    %6049 = vmatmul.bf16.gmra.mxu0 %v5611
    %v6050 = vpop.f32.mrf.mxu0
    %v6051 = vadd.f32 %v6038, %v6050
    %v6052 = vpop.f32.mrf.mxu0
    %6053 = vdwg.mxu0
    %6054 = vmatpush.bf16.msra.mxu0 %v5889
    %6055 = vmatpush.bf16.msra.mxu0 %v5887
    %6056 = vmatpush.bf16.msra.mxu0 %v5885
    %6057 = vmatpush.bf16.msra.mxu0 %v5883
    %6058 = vmatpush.bf16.msra.mxu0 %v5881
    %6059 = vmatpush.bf16.msra.mxu0 %v5879
    %6060 = vmatpush.bf16.msra.mxu0 %v5877
    %6061 = vmatpush.bf16.msra.mxu0 %v5875
    %6062 = vmatmul.bf16.gmra.mxu0 %v5608
    %v6063 = vpop.f32.mrf.mxu0
    %v6064 = vadd.f32 %v5679, %v6063
    %v6065 = vpop.f32.mrf.mxu0
    %6066 = vdwg.mxu0
    %6067 = vmatpush.bf16.msra.mxu0 %v5905
    %6068 = vmatpush.bf16.msra.mxu0 %v5903
    %6069 = vmatpush.bf16.msra.mxu0 %v5901
    %6070 = vmatpush.bf16.msra.mxu0 %v5899
    %6071 = vmatpush.bf16.msra.mxu0 %v5897
    %6072 = vmatpush.bf16.msra.mxu0 %v5895
    %6073 = vmatpush.bf16.msra.mxu0 %v5893
    %6074 = vmatpush.bf16.msra.mxu0 %v5891
    %6075 = vmatmul.bf16.gmra.mxu0 %v5609
    %v6076 = vpop.f32.mrf.mxu0
    %v6077 = vadd.f32 %v6064, %v6076
    %v6078 = vpop.f32.mrf.mxu0
    %6079 = vdwg.mxu0
    %6080 = vmatpush.bf16.msra.mxu0 %v5921
    %6081 = vmatpush.bf16.msra.mxu0 %v5919
    %6082 = vmatpush.bf16.msra.mxu0 %v5917
    %6083 = vmatpush.bf16.msra.mxu0 %v5915
    %6084 = vmatpush.bf16.msra.mxu0 %v5913
    %6085 = vmatpush.bf16.msra.mxu0 %v5911
    %6086 = vmatpush.bf16.msra.mxu0 %v5909
    %6087 = vmatpush.bf16.msra.mxu0 %v5907
    %6088 = vmatmul.bf16.gmra.mxu0 %v5610
    %v6089 = vpop.f32.mrf.mxu0
    %v6090 = vadd.f32 %v6077, %v6089
    %v6091 = vpop.f32.mrf.mxu0
    %6092 = vdwg.mxu0
    %6093 = vmatpush.bf16.msra.mxu0 %v5937
    %6094 = vmatpush.bf16.msra.mxu0 %v5935
    %6095 = vmatpush.bf16.msra.mxu0 %v5933
    %6096 = vmatpush.bf16.msra.mxu0 %v5931
    %6097 = vmatpush.bf16.msra.mxu0 %v5929
    %6098 = vmatpush.bf16.msra.mxu0 %v5927
    %6099 = vmatpush.bf16.msra.mxu0 %v5925
    %6100 = vmatpush.bf16.msra.mxu0 %v5923
    %6101 = vmatmul.bf16.gmra.mxu0 %v5611
    %v6102 = vpop.f32.mrf.mxu0
    %v6103 = vadd.f32 %v6090, %v6102
    %v6104 = vpop.f32.mrf.mxu0
    %6105 = vdwg.mxu0
    %v6106 = vmax.f32 %v6051, 0.0
    %v6107 = vmax.f32 %v6103, 0.0
    %v6108 = vpack.c.bf16 %v6106, %v6106
    %v6109 = vpack.c.bf16 %v6107, %v6107
    %v6110 = vld [vmem:[#allocation14] sm:$0xf]
    %v6111 = vld [vmem:[#allocation14 + $0x4] sm:$0xf]
    %v6112 = vld [vmem:[#allocation14 + $0x8] sm:$0xf]
    %v6113 = vld [vmem:[#allocation14 + $0xc] sm:$0xf]
    %v6114 = vld [vmem:[#allocation14 + $0x10] sm:$0xf]
    %v6115 = vld [vmem:[#allocation14 + $0x14] sm:$0xf]
    %v6116 = vld [vmem:[#allocation14 + $0x18] sm:$0xf]
    %v6117 = vld [vmem:[#allocation14 + $0x1c] sm:$0xf]
    %v6118 = vld [vmem:[#allocation14 + $0x20] sm:$0xf]
    %v6119 = vld [vmem:[#allocation14 + $0x24] sm:$0xf]
    %v6120 = vld [vmem:[#allocation14 + $0x28] sm:$0xf]
    %v6121 = vld [vmem:[#allocation14 + $0x2c] sm:$0xf]
    %v6122 = vld [vmem:[#allocation14 + $0x30] sm:$0xf]
    %v6123 = vld [vmem:[#allocation14 + $0x34] sm:$0xf]
    %v6124 = vld [vmem:[#allocation14 + $0x38] sm:$0xf]
    %v6125 = vld [vmem:[#allocation14 + $0x3c] sm:$0xf]
    %v6126 = vld [vmem:[#allocation14 + $0x40] sm:$0xf]
    %v6127 = vld [vmem:[#allocation14 + $0x44] sm:$0xf]
    %v6128 = vld [vmem:[#allocation14 + $0x48] sm:$0xf]
    %v6129 = vld [vmem:[#allocation14 + $0x4c] sm:$0xf]
    %v6130 = vld [vmem:[#allocation14 + $0x50] sm:$0xf]
    %v6131 = vld [vmem:[#allocation14 + $0x54] sm:$0xf]
    %v6132 = vld [vmem:[#allocation14 + $0x58] sm:$0xf]
    %v6133 = vld [vmem:[#allocation14 + $0x5c] sm:$0xf]
    %v6134 = vld [vmem:[#allocation14 + $0x60] sm:$0xf]
    %v6135 = vld [vmem:[#allocation14 + $0x64] sm:$0xf]
    %v6136 = vld [vmem:[#allocation14 + $0x68] sm:$0xf]
    %v6137 = vld [vmem:[#allocation14 + $0x6c] sm:$0xf]
    %v6138 = vld [vmem:[#allocation14 + $0x70] sm:$0xf]
    %v6139 = vld [vmem:[#allocation14 + $0x74] sm:$0xf]
    %v6140 = vld [vmem:[#allocation14 + $0x78] sm:$0xf]
    %v6141 = vld [vmem:[#allocation14 + $0x7c] sm:$0xf]
    %v6142 = vld [vmem:[#allocation16] sm:$0x1]
    %v6144 = vperm.slane %v6142, 0
    %v6178 = vunpack.c.l.b16 %v6110
    %v6179 = vunpack.c.l.b16 %v6111
    %v6180 = vunpack.c.l.b16 %v6112
    %v6181 = vunpack.c.l.b16 %v6113
    %v6182 = vunpack.c.l.b16 %v6114
    %v6183 = vunpack.c.l.b16 %v6115
    %v6184 = vunpack.c.l.b16 %v6116
    %v6185 = vunpack.c.l.b16 %v6117
    %v6186 = vunpack.c.l.b16 %v6118
    %v6187 = vunpack.c.l.b16 %v6119
    %v6188 = vunpack.c.l.b16 %v6120
    %v6189 = vunpack.c.l.b16 %v6121
    %v6190 = vunpack.c.l.b16 %v6122
    %v6191 = vunpack.c.l.b16 %v6123
    %v6192 = vunpack.c.l.b16 %v6124
    %v6193 = vunpack.c.l.b16 %v6125
    %v6194 = vunpack.c.l.b16 %v6126
    %v6195 = vunpack.c.l.b16 %v6127
    %v6196 = vunpack.c.l.b16 %v6128
    %v6197 = vunpack.c.l.b16 %v6129
    %v6198 = vunpack.c.l.b16 %v6130
    %v6199 = vunpack.c.l.b16 %v6131
    %v6200 = vunpack.c.l.b16 %v6132
    %v6201 = vunpack.c.l.b16 %v6133
    %v6202 = vunpack.c.l.b16 %v6134
    %v6203 = vunpack.c.l.b16 %v6135
    %v6204 = vunpack.c.l.b16 %v6136
    %v6205 = vunpack.c.l.b16 %v6137
    %v6206 = vunpack.c.l.b16 %v6138
    %v6207 = vunpack.c.l.b16 %v6139
    %v6208 = vunpack.c.l.b16 %v6140
    %v6209 = vunpack.c.l.b16 %v6141
    %v6210 = vpack.c.b16 %v6179, %v6178
    %v6211 = vpack.c.b16 %v6181, %v6180
    %v6212 = vpack.c.b16 %v6183, %v6182
    %v6213 = vpack.c.b16 %v6185, %v6184
    %v6214 = vpack.c.b16 %v6187, %v6186
    %v6215 = vpack.c.b16 %v6189, %v6188
    %v6216 = vpack.c.b16 %v6191, %v6190
    %v6217 = vpack.c.b16 %v6193, %v6192
    %v6218 = vpack.c.b16 %v6195, %v6194
    %v6219 = vpack.c.b16 %v6197, %v6196
    %v6220 = vpack.c.b16 %v6199, %v6198
    %v6221 = vpack.c.b16 %v6201, %v6200
    %v6222 = vpack.c.b16 %v6203, %v6202
    %v6223 = vpack.c.b16 %v6205, %v6204
    %v6224 = vpack.c.b16 %v6207, %v6206
    %v6225 = vpack.c.b16 %v6209, %v6208
    %6242 = vmatpush.bf16.msra.mxu0 %v6217
    %6243 = vmatpush.bf16.msra.mxu0 %v6216
    %6244 = vmatpush.bf16.msra.mxu0 %v6215
    %6245 = vmatpush.bf16.msra.mxu0 %v6214
    %6246 = vmatpush.bf16.msra.mxu0 %v6213
    %6247 = vmatpush.bf16.msra.mxu0 %v6212
    %6248 = vmatpush.bf16.msra.mxu0 %v6211
    %6249 = vmatpush.bf16.msra.mxu0 %v6210
    %6250 = vmatmul.bf16.gmra.mxu0 %v6108
    %v6251 = vpop.f32.mrf.mxu0
    %v6252 = vadd.f32 %v6144, %v6251
    %v6253 = vpop.f32.mrf.mxu0
    %6254 = vdwg.mxu0
    %6255 = vmatpush.bf16.msra.mxu0 %v6225
    %6256 = vmatpush.bf16.msra.mxu0 %v6224
    %6257 = vmatpush.bf16.msra.mxu0 %v6223
    %6258 = vmatpush.bf16.msra.mxu0 %v6222
    %6259 = vmatpush.bf16.msra.mxu0 %v6221
    %6260 = vmatpush.bf16.msra.mxu0 %v6220
    %6261 = vmatpush.bf16.msra.mxu0 %v6219
    %6262 = vmatpush.bf16.msra.mxu0 %v6218
    %6263 = vmatmul.bf16.gmra.mxu0 %v6109
    %v6264 = vpop.f32.mrf.mxu0
    %v6265 = vadd.f32 %v6252, %v6264
    %v6266 = vpop.f32.mrf.mxu0
    %6267 = vdwg.mxu0
    %6268 = vst [vmem:[#allocation17] sm:$0xff] %v6265
    // Predicated region
    $region74: #{tpu_custom_call.1} parent=1 // pred_check
      _
    $region75: #{tpu_custom_call.1} parent=1 // pred_check_branch
      %6270 = sbr.rel (0) target = $region77
    $region76: #{tpu_custom_call.1} parent=1 // pred_region
      %6272 = vsyncadd [#allocation4], 0
      %s6274 = sshll.u32 [#allocation17], 4
      %s6275 = int_to_ptr.vmem [resolvable:$true] %s6274
      %s6276 = sshll.u32 %s9, 4
      %s6277 = int_to_ptr.hbm [resolvable:$true] %s6276
      %6279 = dma.vmem_to_hbm [thread:$0]  %s6275, 128, %s6277, [#allocation4]
    $region77: #{tpu_custom_call.1} parent=1 // pred_fallthru
      _
    // Predicated region
    $region78: #{tpu_custom_call.1} parent=1 // pred_check
      _
    $region79: #{tpu_custom_call.1} parent=1 // pred_check_branch
      %6281 = sbr.rel (0) target = $region81
    $region80: #{tpu_custom_call.1} parent=1 // pred_region
      %6283 = dma.done [#allocation4], 128
    $region81: #{tpu_custom_call.1} parent=1 // pred_fallthru
      _
    %6284 = vsyncpa [#allocation3], 1
    %6285 = vsyncpa [#allocation6], 1
    %6286 = vsyncpa [#allocation9], 1
    %6287 = vsyncpa [#allocation12], 1
    %6288 = vsyncpa [#allocation15], 1
    %6289 = vsyncpa [#allocation4], 1

</llo_original>
